<compile_context>
chip_gen: v7x
topology: tpu7x:2x2x1
jax: 0.10.0
libtpu: 0.0.40
codegen_flags: <defaults>
</compile_context>

<pallas_src>
import functools

import jax
import jax.numpy as jnp
import numpy as np
from jax.experimental import pallas as pl
from jax.experimental.pallas import tpu as pltpu


def _round_up(x, m):
    return ((x + m - 1) // m) * m


def _pick_time_chunk(T, target=16):
    for c in range(min(T, target), 0, -1):
        if T % c == 0:
            return c
    return 1


def _pad_gate_cols(w, H, Hp):
    """(in, 3H) -> (in, 3Hp): each gate padded to Hp lanes (gate-per-vreg layout)."""
    parts = [w[:, g * H:(g + 1) * H] for g in range(3)]
    parts = [jnp.pad(p, ((0, 0), (0, Hp - H))) for p in parts]
    return jnp.concatenate(parts, axis=1)


# ----------------------------------------------------------------------------
# GRU encoder kernel (DynamicRNN equivalent, n_layers=1, unidirectional)
# gi (input projection) is precomputed outside; kernel only runs the recurrence.
# ----------------------------------------------------------------------------
def gru_kernel(gi_ref, len_ref, w_hh_ref, b_hh_ref, out_ref, h_ref):
    c = pl.program_id(0)

    @pl.when(c == 0)
    def _():
        h_ref[...] = jnp.zeros_like(h_ref)

    t_chunk = gi_ref.shape[0]
    Hp = h_ref.shape[-1]

    lens = len_ref[...]        # (B, Hp) int32, loaded once per chunk (resident)
    w_hh = w_hh_ref[...]       # (Hp, 3Hp)
    b_hh = b_hh_ref[...]       # (1, 3Hp)

    def step(i, h):
        gi_t = gi_ref[i]                                           # (B, 3Hp)
        gh = jnp.dot(h, w_hh, preferred_element_type=jnp.float32) + b_hh
        # Gate slices are multiples of Hp (>=128) -> lane-aligned, pure VPU after MXU.
        r = jax.nn.sigmoid(gi_t[:, 0:Hp] + gh[:, 0:Hp])
        z = jax.nn.sigmoid(gi_t[:, Hp:2 * Hp] + gh[:, Hp:2 * Hp])
        n = jnp.tanh(gi_t[:, 2 * Hp:3 * Hp] + r * gh[:, 2 * Hp:3 * Hp])
        h_cand = (1.0 - z) * n + z * h

        mask = lens > (c * t_chunk + i)                            # (B, Hp) valid mask
        h_new = jnp.where(mask, h_cand, h)
        out_ref[i] = jnp.where(mask, h_cand, jnp.zeros_like(h_cand))
        return h_new

    h_ref[...] = jax.lax.fori_loop(0, t_chunk, step, h_ref[...], unroll=True)


def gru_forward(gi, len_b, w_hh_p, b_hh_p, t_chunk):
    T, B, K3 = gi.shape
    Hp = K3 // 3
    return pl.pallas_call(
        gru_kernel,
        out_shape=jax.ShapeDtypeStruct((T, B, Hp), jnp.float32),
        grid_spec=pltpu.PrefetchScalarGridSpec(
            num_scalar_prefetch=0,
            grid=(T // t_chunk,),
            in_specs=[
                pl.BlockSpec((t_chunk, B, K3), lambda c: (c, 0, 0)),
                pl.BlockSpec((B, Hp), lambda c: (0, 0)),
                pl.BlockSpec((Hp, K3), lambda c: (0, 0)),
                pl.BlockSpec((1, K3), lambda c: (0, 0)),
            ],
            out_specs=pl.BlockSpec((t_chunk, B, Hp), lambda c: (c, 0, 0)),
            scratch_shapes=[pltpu.VMEM((B, Hp), jnp.float32)],
        ),
        compiler_params=pltpu.CompilerParams(dimension_semantics=("arbitrary",)),
    )(gi, len_b, w_hh_p, b_hh_p)


# ----------------------------------------------------------------------------
# Capsule / attention head kernel (CapNet equivalent), fused aspect+sentiment,
# gridded over batch (parallel).
# ----------------------------------------------------------------------------
def capnet_kernel(h_ref, len_ref, w_as_ref, w_pa_ref, b_pa_ref, w_lab_ref, b_lab_ref,
                  prob_asp_ref, prob_sen_ref, attn_ref, *, n_aspects):
    h = h_ref[...]                                 # (Bt, T, Hp)
    Bt, T, _ = h.shape
    A = n_aspects

    lengths = len_ref[...]                         # (Bt, 1)
    t_iota = jax.lax.broadcasted_iota(jnp.int32, (Bt, T, 1), 1)
    valid = t_iota < lengths[:, :, None]           # (Bt, T, 1)

    # Fused aspect+sentiment attention scores: one matmul over 2A heads.
    scores = jnp.einsum('bth,ha->bta', h, w_as_ref[...],
                        preferred_element_type=jnp.float32)        # (Bt, T, 2A)
    s = jnp.where(valid, scores, jnp.full_like(scores, -1e30))
    m = jnp.max(s, axis=1, keepdims=True)
    e = jnp.exp(s - m)
    e = jnp.where(valid, e, jnp.zeros_like(e))
    attn = e / jnp.sum(e, axis=1, keepdims=True)                   # (Bt, T, 2A)
    attn_ref[...] = attn                                           # natural layout

    # Context vectors for all 2A heads in one batched matmul.
    v = jnp.einsum('bta,bth->bah', attn, h,
                   preferred_element_type=jnp.float32)             # (Bt, 2A, Hp)
    v_asp = v[:, :A, :]
    v_sen = v[:, A:, :]

    # Aspect probability: VPU multiply+reduce instead of a lane-1 MXU matmul.
    logit_asp = jnp.sum(v_asp * w_pa_ref[...][None, :, :], axis=-1) + b_pa_ref[0, 0]
    prob_asp_ref[...] = jax.nn.sigmoid(logit_asp)                  # (Bt, A)

    # Sentiment label softmax.
    logits = jnp.einsum('bah,hl->bal', v_sen, w_lab_ref[...],
                        preferred_element_type=jnp.float32) + b_lab_ref[...][None, :, :]
    mm = jnp.max(logits, axis=-1, keepdims=True)
    ee = jnp.exp(logits - mm)
    prob_sen_ref[...] = ee / jnp.sum(ee, axis=-1, keepdims=True)   # (Bt, A, L)


def capnet_forward(h_bth, len2d, w_as, w_pa_row, b_pa, w_lab, b_lab, n_aspects, b_tile):
    B, T, Hp = h_bth.shape
    A2 = w_as.shape[1]
    L = w_lab.shape[1]
    A = n_aspects
    kernel = functools.partial(capnet_kernel, n_aspects=A)
    return pl.pallas_call(
        kernel,
        out_shape=(
            jax.ShapeDtypeStruct((B, A), jnp.float32),
            jax.ShapeDtypeStruct((B, A, L), jnp.float32),
            jax.ShapeDtypeStruct((B, T, A2), jnp.float32),
        ),
        grid_spec=pltpu.PrefetchScalarGridSpec(
            num_scalar_prefetch=0,
            grid=(B // b_tile,),
            in_specs=[
                pl.BlockSpec((b_tile, T, Hp), lambda b: (b, 0, 0)),
                pl.BlockSpec((b_tile, 1), lambda b: (b, 0)),
                pl.BlockSpec((Hp, A2), lambda b: (0, 0)),
                pl.BlockSpec((1, Hp), lambda b: (0, 0)),
                pl.BlockSpec((1, 1), lambda b: (0, 0)),
                pl.BlockSpec((Hp, L), lambda b: (0, 0)),
                pl.BlockSpec((1, L), lambda b: (0, 0)),
            ],
            out_specs=(
                pl.BlockSpec((b_tile, A), lambda b: (b, 0)),
                pl.BlockSpec((b_tile, A, L), lambda b: (b, 0, 0)),
                pl.BlockSpec((b_tile, T, A2), lambda b: (b, 0, 0)),
            ),
        ),
        compiler_params=pltpu.CompilerParams(dimension_semantics=("parallel",)),
    )(h_bth, len2d, w_as, w_pa_row, b_pa, w_lab, b_lab)


# ----------------------------------------------------------------------------
# Full AspectCapsule forward (glue)
# ----------------------------------------------------------------------------
@jax.jit
def aspect_capsule_forward(params, sens, len_sen):
    B, T = sens.shape
    D = params['embed'].shape[1]
    H = params['w_hh'].shape[0]
    A = params['w_a'].shape[1]
    Hp = _round_up(H, 128)                 # lane-dense hidden (per gate)
    t_chunk = _pick_time_chunk(T)
    b_tile = 8 if (B % 8 == 0 and B > 8) else B

    # Embedding lookup + (identity) embed_dropout
    embedded = jnp.take(params['embed'], sens, axis=0)             # (B, T, D)
    x_tbd = jnp.transpose(embedded, (1, 0, 2))                     # (T, B, D)

    # Gate-padded parameter layout (each gate occupies Hp lanes).
    w_ih_p = _pad_gate_cols(params['w_ih'], H, Hp)                 # (D, 3Hp)
    b_ih_p = _pad_gate_cols(params['b_ih'], H, Hp)                 # (1, 3Hp)
    w_hh_p = jnp.pad(_pad_gate_cols(params['w_hh'], H, Hp),
                     ((0, Hp - H), (0, 0)))                        # (Hp, 3Hp)
    b_hh_p = _pad_gate_cols(params['b_hh'], H, Hp)                 # (1, 3Hp)

    # Hoisted input projection: ONE large MXU-friendly matmul for all timesteps.
    gi = (x_tbd.reshape(T * B, D) @ w_ih_p + b_ih_p).reshape(T, B, 3 * Hp)

    # Lane-dense, load-once lengths for the recurrence mask.
    len_b = jnp.broadcast_to(len_sen.astype(jnp.int32)[:, None], (B, Hp))

    out_tbh = gru_forward(gi, len_b, w_hh_p, b_hh_p, t_chunk)      # (T, B, Hp)
    h_bth = jnp.transpose(out_tbh, (1, 0, 2))                      # (B, T, Hp)

    # Fused capnet parameters (rows padded with zeros past H).
    w_as = jnp.pad(jnp.concatenate([params['w_a'], params['w_s']], axis=1),
                   ((0, Hp - H), (0, 0)))                          # (Hp, 2A)
    w_pa_row = jnp.pad(params['w_pa'].T, ((0, 0), (0, Hp - H)))    # (1, Hp)
    w_lab_p = jnp.pad(params['w_lab'], ((0, Hp - H), (0, 0)))      # (Hp, L)
    len2d = len_sen.astype(jnp.int32).reshape(B, 1)

    prob_asp, prob_sen, attn_all = capnet_forward(
        h_bth, len2d, w_as, w_pa_row, params['b_pa'], w_lab_p, params['b_lab'],
        n_aspects=A, b_tile=b_tile)

    # Layout plumbing deferred to XLA (kernel writes natural (B, T, 2A)).
    attn_asp = jnp.transpose(attn_all[..., :A], (0, 2, 1))         # (B, A, T)
    attn_sen = jnp.transpose(attn_all[..., A:], (0, 2, 1))         # (B, A, T)
    return prob_asp, prob_sen, attn_asp, attn_sen


# ----------------------------------------------------------------------------
# Pure-JAX reference for correctness checking
# ----------------------------------------------------------------------------
def reference_forward(params, sens, len_sen):
    B, T = sens.shape
    H = params['w_hh'].shape[0]
    emb = jnp.take(params['embed'], sens, axis=0)
    x = jnp.transpose(emb, (1, 0, 2))                              # (T, B, D)

    def step(h, inp):
        xt, t = inp
        gi = xt @ params['w_ih'] + params['b_ih']
        gh = h @ params['w_hh'] + params['b_hh']
        r = jax.nn.sigmoid(gi[:, :H] + gh[:, :H])
        z = jax.nn.sigmoid(gi[:, H:2 * H] + gh[:, H:2 * H])
        n = jnp.tanh(gi[:, 2 * H:] + r * gh[:, 2 * H:])
        hc = (1.0 - z) * n + z * h
        mask = (len_sen[:, None] > t)
        return jnp.where(mask, hc, h), jnp.where(mask, hc, 0.0)

    _, outs = jax.lax.scan(step, jnp.zeros((B, H), jnp.float32),
                           (x, jnp.arange(T)))
    hpad = jnp.transpose(outs, (1, 0, 2))                          # (B, T, H)

    valid = (jnp.arange(T)[None, :, None] < len_sen[:, None, None])

    def msm(scores):
        s = jnp.where(valid, scores, -1e30)
        e = jnp.exp(s - jnp.max(s, axis=1, keepdims=True))
        e = jnp.where(valid, e, 0.0)
        return e / jnp.sum(e, axis=1, keepdims=True)

    attn_a = msm(jnp.einsum('bth,ha->bta', hpad, params['w_a']))
    v_asp = jnp.einsum('bta,bth->bah', attn_a, hpad)
    prob_asp = jax.nn.sigmoid(
        jnp.einsum('bah,hk->bak', v_asp, params['w_pa'])[..., 0] + params['b_pa'][0, 0])

    attn_s = msm(jnp.einsum('bth,ha->bta', hpad, params['w_s']))
    v_sen = jnp.einsum('bta,bth->bah', attn_s, hpad)
    logits = jnp.einsum('bah,hl->bal', v_sen, params['w_lab']) + params['b_lab']
    prob_sen = jax.nn.softmax(logits, axis=-1)

    return (prob_asp, prob_sen,
            jnp.transpose(attn_a, (0, 2, 1)), jnp.transpose(attn_s, (0, 2, 1)))


if __name__ == "__main__":
    # Small deterministic config
    B, T = 2, 8
    n_vocab, dim_input, dim_hidden = 50, 32, 32
    n_aspects, n_labels = 6, 3

    key = jax.random.PRNGKey(0)
    ks = jax.random.split(key, 12)

    params = {
        'embed': 0.1 * jax.random.normal(ks[0], (n_vocab, dim_input), jnp.float32),
        'w_ih': 0.1 * jax.random.normal(ks[1], (dim_input, 3 * dim_hidden), jnp.float32),
        'w_hh': 0.1 * jax.random.normal(ks[2], (dim_hidden, 3 * dim_hidden), jnp.float32),
        'b_ih': 0.1 * jax.random.normal(ks[3], (1, 3 * dim_hidden), jnp.float32),
        'b_hh': 0.1 * jax.random.normal(ks[4], (1, 3 * dim_hidden), jnp.float32),
        'w_a': 0.1 * jax.random.normal(ks[5], (dim_hidden, n_aspects), jnp.float32),
        'w_s': 0.1 * jax.random.normal(ks[6], (dim_hidden, n_aspects), jnp.float32),
        'w_pa': 0.1 * jax.random.normal(ks[7], (dim_hidden, 1), jnp.float32),
        'b_pa': 0.1 * jax.random.normal(ks[8], (1, 1), jnp.float32),
        'w_lab': 0.1 * jax.random.normal(ks[9], (dim_hidden, n_labels), jnp.float32),
        'b_lab': 0.1 * jax.random.normal(ks[10], (1, n_labels), jnp.float32),
    }

    sens = jax.random.randint(ks[11], (B, T), 0, n_vocab, dtype=jnp.int32)
    len_sen = jnp.array([T, 5], dtype=jnp.int32)

    outs = aspect_capsule_forward(params, sens, len_sen)
    outs = jax.block_until_ready(outs)
    refs = reference_forward(params, sens, len_sen)

    for o, r in zip(outs, refs):
        np.testing.assert_allclose(np.asarray(o), np.asarray(r), rtol=1e-3, atol=2e-3)

    print("KERNEL_OK")
</pallas_src>

<mosaic_0001>
module attributes {stable_mosaic.version = 11 : i64} {
  func.func @gru_kernel(%arg0: i32, %arg1: memref<8x2x384xf32, #tpu.memory_space<vmem>>, %arg2: memref<2x128xi32, #tpu.memory_space<vmem>>, %arg3: memref<128x384xf32, #tpu.memory_space<vmem>>, %arg4: memref<1x384xf32, #tpu.memory_space<vmem>>, %arg5: memref<8x2x128xf32, #tpu.memory_space<vmem>>, %arg6: memref<2x128xf32, #tpu.memory_space<vmem>>) attributes {dimension_semantics = [#tpu.dimension_semantics<arbitrary>], iteration_bounds = array<i64: 1>, scalar_prefetch = 0 : i64, scratch_operands = 1 : i64, tpu.core_type = #tpu.core_type<tc>, window_params = [{transform_indices = @transform_0, window_bounds = array<i64: 8, 2, 384>}, {pipeline_mode = #tpu.pipeline_mode<synchronous>, transform_indices = @transform_1, window_bounds = array<i64: 2, 128>}, {pipeline_mode = #tpu.pipeline_mode<synchronous>, transform_indices = @transform_2, window_bounds = array<i64: 128, 384>}, {pipeline_mode = #tpu.pipeline_mode<synchronous>, transform_indices = @transform_3, window_bounds = array<i64: 1, 384>}, {transform_indices = @transform_4, window_bounds = array<i64: 8, 2, 128>}]} {
    %c0_i32 = arith.constant 0 : i32
    %0 = arith.cmpi eq, %arg0, %c0_i32 : i32
    %1 = arith.extui %0 : i1 to i32
    %c0_i32_0 = arith.constant 0 : i32
    %2 = arith.cmpi ne, %1, %c0_i32_0 : i32
    scf.if %2 {
      %cst_90 = arith.constant 0.000000e+00 : f32
      %352 = vector.broadcast %cst_90 : f32 to vector<2x128xf32>
      %c0_91 = arith.constant 0 : index
      %c0_92 = arith.constant 0 : index
      %353 = vector.load %arg6[%c0_91, %c0_92] : memref<2x128xf32, #tpu.memory_space<vmem>>, vector<2x128xf32>
      tpu.vector_store %arg6[%c0_91, %c0_92], %352 {strides = array<i32>} : memref<2x128xf32, #tpu.memory_space<vmem>>, vector<2x128xf32>,
    } else {
    }
    %c0 = arith.constant 0 : index
    %c0_1 = arith.constant 0 : index
    %3 = vector.load %arg2[%c0, %c0_1] : memref<2x128xi32, #tpu.memory_space<vmem>>, vector<2x128xi32>
    %c0_2 = arith.constant 0 : index
    %c0_3 = arith.constant 0 : index
    %4 = vector.load %arg3[%c0_2, %c0_3] : memref<128x384xf32, #tpu.memory_space<vmem>>, vector<128x384xf32>
    %c0_4 = arith.constant 0 : index
    %c0_5 = arith.constant 0 : index
    %5 = vector.load %arg4[%c0_4, %c0_5] : memref<1x384xf32, #tpu.memory_space<vmem>>, vector<1x384xf32>
    %c0_6 = arith.constant 0 : index
    %c0_7 = arith.constant 0 : index
    %6 = vector.load %arg6[%c0_6, %c0_7] : memref<2x128xf32, #tpu.memory_space<vmem>>, vector<2x128xf32>
    %c0_i32_8 = arith.constant 0 : i32
    %7 = arith.index_cast %c0_i32_8 : i32 to index
    %c0_9 = arith.constant 0 : index
    %c0_10 = arith.constant 0 : index
    %8 = vector.load %arg1[%7, %c0_9, %c0_10] : memref<8x2x384xf32, #tpu.memory_space<vmem>>, vector<1x2x384xf32>
    %9 = vector.shape_cast %8 : vector<1x2x384xf32> to vector<2x384xf32>
    %cst = arith.constant dense<0.000000e+00> : vector<2x384xf32>
    %10 = tpu.matmul %6, %4, %cst {dimension_numbers = #tpu.dot_dimension_numbers<[1], [0], [0], [1], [0, 0, 1, 1], [], []>} : vector<2x128xf32>, vector<128x384xf32>, vector<2x384xf32> -> vector<2x384xf32>
    %11 = vector.broadcast %5 : vector<1x384xf32> to vector<2x384xf32>
    %12 = arith.addf %10, %11 : vector<2x384xf32>
    %13 = vector.extract_strided_slice %9 {offsets = [0, 0], sizes = [2, 128], strides = [1, 1]} : vector<2x384xf32> to vector<2x128xf32>
    %14 = vector.extract_strided_slice %12 {offsets = [0, 0], sizes = [2, 128], strides = [1, 1]} : vector<2x384xf32> to vector<2x128xf32>
    %15 = arith.addf %13, %14 : vector<2x128xf32>
    %16 = arith.negf %15 : vector<2x128xf32>
    %17 = math.exp %16 : vector<2x128xf32>
    %cst_11 = arith.constant 1.000000e+00 : f32
    %18 = vector.broadcast %cst_11 : f32 to vector<2x128xf32>
    %19 = arith.addf %18, %17 : vector<2x128xf32>
    %20 = arith.divf %18, %19 : vector<2x128xf32>
    %21 = vector.extract_strided_slice %9 {offsets = [0, 128], sizes = [2, 128], strides = [1, 1]} : vector<2x384xf32> to vector<2x128xf32>
    %22 = vector.extract_strided_slice %12 {offsets = [0, 128], sizes = [2, 128], strides = [1, 1]} : vector<2x384xf32> to vector<2x128xf32>
    %23 = arith.addf %21, %22 : vector<2x128xf32>
    %24 = arith.negf %23 : vector<2x128xf32>
    %25 = math.exp %24 : vector<2x128xf32>
    %cst_12 = arith.constant 1.000000e+00 : f32
    %26 = vector.broadcast %cst_12 : f32 to vector<2x128xf32>
    %27 = arith.addf %26, %25 : vector<2x128xf32>
    %28 = arith.divf %26, %27 : vector<2x128xf32>
    %29 = vector.extract_strided_slice %9 {offsets = [0, 256], sizes = [2, 128], strides = [1, 1]} : vector<2x384xf32> to vector<2x128xf32>
    %30 = vector.extract_strided_slice %12 {offsets = [0, 256], sizes = [2, 128], strides = [1, 1]} : vector<2x384xf32> to vector<2x128xf32>
    %31 = arith.mulf %20, %30 : vector<2x128xf32>
    %32 = arith.addf %29, %31 : vector<2x128xf32>
    %33 = math.tanh %32 : vector<2x128xf32>
    %cst_13 = arith.constant 1.000000e+00 : f32
    %34 = vector.broadcast %cst_13 : f32 to vector<2x128xf32>
    %35 = arith.subf %34, %28 : vector<2x128xf32>
    %36 = arith.mulf %35, %33 : vector<2x128xf32>
    %37 = arith.mulf %28, %6 : vector<2x128xf32>
    %38 = arith.addf %36, %37 : vector<2x128xf32>
    %c8_i32 = arith.constant 8 : i32
    %39 = arith.muli %arg0, %c8_i32 : i32
    %40 = arith.addi %39, %c0_i32_8 : i32
    %41 = vector.broadcast %40 : i32 to vector<2x128xi32>
    %42 = arith.cmpi sgt, %3, %41 : vector<2x128xi32>
    %43 = arith.select %42, %38, %6 : vector<2x128xi1>, vector<2x128xf32>
    %cst_14 = arith.constant 0.000000e+00 : f32
    %44 = vector.broadcast %cst_14 : f32 to vector<2x128xf32>
    %45 = arith.select %42, %38, %44 : vector<2x128xi1>, vector<2x128xf32>
    %46 = arith.index_cast %c0_i32_8 : i32 to index
    %c0_15 = arith.constant 0 : index
    %c0_16 = arith.constant 0 : index
    %47 = vector.load %arg5[%46, %c0_15, %c0_16] : memref<8x2x128xf32, #tpu.memory_space<vmem>>, vector<1x2x128xf32>
    %48 = vector.shape_cast %47 : vector<1x2x128xf32> to vector<2x128xf32>
    %49 = vector.shape_cast %45 : vector<2x128xf32> to vector<1x2x128xf32>
    tpu.vector_store %arg5[%46, %c0_15, %c0_16], %49 {strides = array<i32>} : memref<8x2x128xf32, #tpu.memory_space<vmem>>, vector<1x2x128xf32>,
    %c1_i32 = arith.constant 1 : i32
    %50 = arith.index_cast %c1_i32 : i32 to index
    %c0_17 = arith.constant 0 : index
    %c0_18 = arith.constant 0 : index
    %51 = vector.load %arg1[%50, %c0_17, %c0_18] : memref<8x2x384xf32, #tpu.memory_space<vmem>>, vector<1x2x384xf32>
    %52 = vector.shape_cast %51 : vector<1x2x384xf32> to vector<2x384xf32>
    %cst_19 = arith.constant dense<0.000000e+00> : vector<2x384xf32>
    %53 = tpu.matmul %43, %4, %cst_19 {dimension_numbers = #tpu.dot_dimension_numbers<[1], [0], [0], [1], [0, 0, 1, 1], [], []>} : vector<2x128xf32>, vector<128x384xf32>, vector<2x384xf32> -> vector<2x384xf32>
    %54 = vector.broadcast %5 : vector<1x384xf32> to vector<2x384xf32>
    %55 = arith.addf %53, %54 : vector<2x384xf32>
    %56 = vector.extract_strided_slice %52 {offsets = [0, 0], sizes = [2, 128], strides = [1, 1]} : vector<2x384xf32> to vector<2x128xf32>
    %57 = vector.extract_strided_slice %55 {offsets = [0, 0], sizes = [2, 128], strides = [1, 1]} : vector<2x384xf32> to vector<2x128xf32>
    %58 = arith.addf %56, %57 : vector<2x128xf32>
    %59 = arith.negf %58 : vector<2x128xf32>
    %60 = math.exp %59 : vector<2x128xf32>
    %cst_20 = arith.constant 1.000000e+00 : f32
    %61 = vector.broadcast %cst_20 : f32 to vector<2x128xf32>
    %62 = arith.addf %61, %60 : vector<2x128xf32>
    %63 = arith.divf %61, %62 : vector<2x128xf32>
    %64 = vector.extract_strided_slice %52 {offsets = [0, 128], sizes = [2, 128], strides = [1, 1]} : vector<2x384xf32> to vector<2x128xf32>
    %65 = vector.extract_strided_slice %55 {offsets = [0, 128], sizes = [2, 128], strides = [1, 1]} : vector<2x384xf32> to vector<2x128xf32>
    %66 = arith.addf %64, %65 : vector<2x128xf32>
    %67 = arith.negf %66 : vector<2x128xf32>
    %68 = math.exp %67 : vector<2x128xf32>
    %cst_21 = arith.constant 1.000000e+00 : f32
    %69 = vector.broadcast %cst_21 : f32 to vector<2x128xf32>
    %70 = arith.addf %69, %68 : vector<2x128xf32>
    %71 = arith.divf %69, %70 : vector<2x128xf32>
    %72 = vector.extract_strided_slice %52 {offsets = [0, 256], sizes = [2, 128], strides = [1, 1]} : vector<2x384xf32> to vector<2x128xf32>
    %73 = vector.extract_strided_slice %55 {offsets = [0, 256], sizes = [2, 128], strides = [1, 1]} : vector<2x384xf32> to vector<2x128xf32>
    %74 = arith.mulf %63, %73 : vector<2x128xf32>
    %75 = arith.addf %72, %74 : vector<2x128xf32>
    %76 = math.tanh %75 : vector<2x128xf32>
    %cst_22 = arith.constant 1.000000e+00 : f32
    %77 = vector.broadcast %cst_22 : f32 to vector<2x128xf32>
    %78 = arith.subf %77, %71 : vector<2x128xf32>
    %79 = arith.mulf %78, %76 : vector<2x128xf32>
    %80 = arith.mulf %71, %43 : vector<2x128xf32>
    %81 = arith.addf %79, %80 : vector<2x128xf32>
    %c8_i32_23 = arith.constant 8 : i32
    %82 = arith.muli %arg0, %c8_i32_23 : i32
    %83 = arith.addi %82, %c1_i32 : i32
    %84 = vector.broadcast %83 : i32 to vector<2x128xi32>
    %85 = arith.cmpi sgt, %3, %84 : vector<2x128xi32>
    %86 = arith.select %85, %81, %43 : vector<2x128xi1>, vector<2x128xf32>
    %cst_24 = arith.constant 0.000000e+00 : f32
    %87 = vector.broadcast %cst_24 : f32 to vector<2x128xf32>
    %88 = arith.select %85, %81, %87 : vector<2x128xi1>, vector<2x128xf32>
    %89 = arith.index_cast %c1_i32 : i32 to index
    %c0_25 = arith.constant 0 : index
    %c0_26 = arith.constant 0 : index
    %90 = vector.load %arg5[%89, %c0_25, %c0_26] : memref<8x2x128xf32, #tpu.memory_space<vmem>>, vector<1x2x128xf32>
    %91 = vector.shape_cast %90 : vector<1x2x128xf32> to vector<2x128xf32>
    %92 = vector.shape_cast %88 : vector<2x128xf32> to vector<1x2x128xf32>
    tpu.vector_store %arg5[%89, %c0_25, %c0_26], %92 {strides = array<i32>} : memref<8x2x128xf32, #tpu.memory_space<vmem>>, vector<1x2x128xf32>,
    %c2_i32 = arith.constant 2 : i32
    %93 = arith.index_cast %c2_i32 : i32 to index
    %c0_27 = arith.constant 0 : index
    %c0_28 = arith.constant 0 : index
    %94 = vector.load %arg1[%93, %c0_27, %c0_28] : memref<8x2x384xf32, #tpu.memory_space<vmem>>, vector<1x2x384xf32>
    %95 = vector.shape_cast %94 : vector<1x2x384xf32> to vector<2x384xf32>
    %cst_29 = arith.constant dense<0.000000e+00> : vector<2x384xf32>
    %96 = tpu.matmul %86, %4, %cst_29 {dimension_numbers = #tpu.dot_dimension_numbers<[1], [0], [0], [1], [0, 0, 1, 1], [], []>} : vector<2x128xf32>, vector<128x384xf32>, vector<2x384xf32> -> vector<2x384xf32>
    %97 = vector.broadcast %5 : vector<1x384xf32> to vector<2x384xf32>
    %98 = arith.addf %96, %97 : vector<2x384xf32>
    %99 = vector.extract_strided_slice %95 {offsets = [0, 0], sizes = [2, 128], strides = [1, 1]} : vector<2x384xf32> to vector<2x128xf32>
    %100 = vector.extract_strided_slice %98 {offsets = [0, 0], sizes = [2, 128], strides = [1, 1]} : vector<2x384xf32> to vector<2x128xf32>
    %101 = arith.addf %99, %100 : vector<2x128xf32>
    %102 = arith.negf %101 : vector<2x128xf32>
    %103 = math.exp %102 : vector<2x128xf32>
    %cst_30 = arith.constant 1.000000e+00 : f32
    %104 = vector.broadcast %cst_30 : f32 to vector<2x128xf32>
    %105 = arith.addf %104, %103 : vector<2x128xf32>
    %106 = arith.divf %104, %105 : vector<2x128xf32>
    %107 = vector.extract_strided_slice %95 {offsets = [0, 128], sizes = [2, 128], strides = [1, 1]} : vector<2x384xf32> to vector<2x128xf32>
    %108 = vector.extract_strided_slice %98 {offsets = [0, 128], sizes = [2, 128], strides = [1, 1]} : vector<2x384xf32> to vector<2x128xf32>
    %109 = arith.addf %107, %108 : vector<2x128xf32>
    %110 = arith.negf %109 : vector<2x128xf32>
    %111 = math.exp %110 : vector<2x128xf32>
    %cst_31 = arith.constant 1.000000e+00 : f32
    %112 = vector.broadcast %cst_31 : f32 to vector<2x128xf32>
    %113 = arith.addf %112, %111 : vector<2x128xf32>
    %114 = arith.divf %112, %113 : vector<2x128xf32>
    %115 = vector.extract_strided_slice %95 {offsets = [0, 256], sizes = [2, 128], strides = [1, 1]} : vector<2x384xf32> to vector<2x128xf32>
    %116 = vector.extract_strided_slice %98 {offsets = [0, 256], sizes = [2, 128], strides = [1, 1]} : vector<2x384xf32> to vector<2x128xf32>
    %117 = arith.mulf %106, %116 : vector<2x128xf32>
    %118 = arith.addf %115, %117 : vector<2x128xf32>
    %119 = math.tanh %118 : vector<2x128xf32>
    %cst_32 = arith.constant 1.000000e+00 : f32
    %120 = vector.broadcast %cst_32 : f32 to vector<2x128xf32>
    %121 = arith.subf %120, %114 : vector<2x128xf32>
    %122 = arith.mulf %121, %119 : vector<2x128xf32>
    %123 = arith.mulf %114, %86 : vector<2x128xf32>
    %124 = arith.addf %122, %123 : vector<2x128xf32>
    %c8_i32_33 = arith.constant 8 : i32
    %125 = arith.muli %arg0, %c8_i32_33 : i32
    %126 = arith.addi %125, %c2_i32 : i32
    %127 = vector.broadcast %126 : i32 to vector<2x128xi32>
    %128 = arith.cmpi sgt, %3, %127 : vector<2x128xi32>
    %129 = arith.select %128, %124, %86 : vector<2x128xi1>, vector<2x128xf32>
    %cst_34 = arith.constant 0.000000e+00 : f32
    %130 = vector.broadcast %cst_34 : f32 to vector<2x128xf32>
    %131 = arith.select %128, %124, %130 : vector<2x128xi1>, vector<2x128xf32>
    %132 = arith.index_cast %c2_i32 : i32 to index
    %c0_35 = arith.constant 0 : index
    %c0_36 = arith.constant 0 : index
    %133 = vector.load %arg5[%132, %c0_35, %c0_36] : memref<8x2x128xf32, #tpu.memory_space<vmem>>, vector<1x2x128xf32>
    %134 = vector.shape_cast %133 : vector<1x2x128xf32> to vector<2x128xf32>
    %135 = vector.shape_cast %131 : vector<2x128xf32> to vector<1x2x128xf32>
    tpu.vector_store %arg5[%132, %c0_35, %c0_36], %135 {strides = array<i32>} : memref<8x2x128xf32, #tpu.memory_space<vmem>>, vector<1x2x128xf32>,
    %c3_i32 = arith.constant 3 : i32
    %136 = arith.index_cast %c3_i32 : i32 to index
    %c0_37 = arith.constant 0 : index
    %c0_38 = arith.constant 0 : index
    %137 = vector.load %arg1[%136, %c0_37, %c0_38] : memref<8x2x384xf32, #tpu.memory_space<vmem>>, vector<1x2x384xf32>
    %138 = vector.shape_cast %137 : vector<1x2x384xf32> to vector<2x384xf32>
    %cst_39 = arith.constant dense<0.000000e+00> : vector<2x384xf32>
    %139 = tpu.matmul %129, %4, %cst_39 {dimension_numbers = #tpu.dot_dimension_numbers<[1], [0], [0], [1], [0, 0, 1, 1], [], []>} : vector<2x128xf32>, vector<128x384xf32>, vector<2x384xf32> -> vector<2x384xf32>
    %140 = vector.broadcast %5 : vector<1x384xf32> to vector<2x384xf32>
    %141 = arith.addf %139, %140 : vector<2x384xf32>
    %142 = vector.extract_strided_slice %138 {offsets = [0, 0], sizes = [2, 128], strides = [1, 1]} : vector<2x384xf32> to vector<2x128xf32>
    %143 = vector.extract_strided_slice %141 {offsets = [0, 0], sizes = [2, 128], strides = [1, 1]} : vector<2x384xf32> to vector<2x128xf32>
    %144 = arith.addf %142, %143 : vector<2x128xf32>
    %145 = arith.negf %144 : vector<2x128xf32>
    %146 = math.exp %145 : vector<2x128xf32>
    %cst_40 = arith.constant 1.000000e+00 : f32
    %147 = vector.broadcast %cst_40 : f32 to vector<2x128xf32>
    %148 = arith.addf %147, %146 : vector<2x128xf32>
    %149 = arith.divf %147, %148 : vector<2x128xf32>
    %150 = vector.extract_strided_slice %138 {offsets = [0, 128], sizes = [2, 128], strides = [1, 1]} : vector<2x384xf32> to vector<2x128xf32>
    %151 = vector.extract_strided_slice %141 {offsets = [0, 128], sizes = [2, 128], strides = [1, 1]} : vector<2x384xf32> to vector<2x128xf32>
    %152 = arith.addf %150, %151 : vector<2x128xf32>
    %153 = arith.negf %152 : vector<2x128xf32>
    %154 = math.exp %153 : vector<2x128xf32>
    %cst_41 = arith.constant 1.000000e+00 : f32
    %155 = vector.broadcast %cst_41 : f32 to vector<2x128xf32>
    %156 = arith.addf %155, %154 : vector<2x128xf32>
    %157 = arith.divf %155, %156 : vector<2x128xf32>
    %158 = vector.extract_strided_slice %138 {offsets = [0, 256], sizes = [2, 128], strides = [1, 1]} : vector<2x384xf32> to vector<2x128xf32>
    %159 = vector.extract_strided_slice %141 {offsets = [0, 256], sizes = [2, 128], strides = [1, 1]} : vector<2x384xf32> to vector<2x128xf32>
    %160 = arith.mulf %149, %159 : vector<2x128xf32>
    %161 = arith.addf %158, %160 : vector<2x128xf32>
    %162 = math.tanh %161 : vector<2x128xf32>
    %cst_42 = arith.constant 1.000000e+00 : f32
    %163 = vector.broadcast %cst_42 : f32 to vector<2x128xf32>
    %164 = arith.subf %163, %157 : vector<2x128xf32>
    %165 = arith.mulf %164, %162 : vector<2x128xf32>
    %166 = arith.mulf %157, %129 : vector<2x128xf32>
    %167 = arith.addf %165, %166 : vector<2x128xf32>
    %c8_i32_43 = arith.constant 8 : i32
    %168 = arith.muli %arg0, %c8_i32_43 : i32
    %169 = arith.addi %168, %c3_i32 : i32
    %170 = vector.broadcast %169 : i32 to vector<2x128xi32>
    %171 = arith.cmpi sgt, %3, %170 : vector<2x128xi32>
    %172 = arith.select %171, %167, %129 : vector<2x128xi1>, vector<2x128xf32>
    %cst_44 = arith.constant 0.000000e+00 : f32
    %173 = vector.broadcast %cst_44 : f32 to vector<2x128xf32>
    %174 = arith.select %171, %167, %173 : vector<2x128xi1>, vector<2x128xf32>
    %175 = arith.index_cast %c3_i32 : i32 to index
    %c0_45 = arith.constant 0 : index
    %c0_46 = arith.constant 0 : index
    %176 = vector.load %arg5[%175, %c0_45, %c0_46] : memref<8x2x128xf32, #tpu.memory_space<vmem>>, vector<1x2x128xf32>
    %177 = vector.shape_cast %176 : vector<1x2x128xf32> to vector<2x128xf32>
    %178 = vector.shape_cast %174 : vector<2x128xf32> to vector<1x2x128xf32>
    tpu.vector_store %arg5[%175, %c0_45, %c0_46], %178 {strides = array<i32>} : memref<8x2x128xf32, #tpu.memory_space<vmem>>, vector<1x2x128xf32>,
    %c4_i32 = arith.constant 4 : i32
    %179 = arith.index_cast %c4_i32 : i32 to index
    %c0_47 = arith.constant 0 : index
    %c0_48 = arith.constant 0 : index
    %180 = vector.load %arg1[%179, %c0_47, %c0_48] : memref<8x2x384xf32, #tpu.memory_space<vmem>>, vector<1x2x384xf32>
    %181 = vector.shape_cast %180 : vector<1x2x384xf32> to vector<2x384xf32>
    %cst_49 = arith.constant dense<0.000000e+00> : vector<2x384xf32>
    %182 = tpu.matmul %172, %4, %cst_49 {dimension_numbers = #tpu.dot_dimension_numbers<[1], [0], [0], [1], [0, 0, 1, 1], [], []>} : vector<2x128xf32>, vector<128x384xf32>, vector<2x384xf32> -> vector<2x384xf32>
    %183 = vector.broadcast %5 : vector<1x384xf32> to vector<2x384xf32>
    %184 = arith.addf %182, %183 : vector<2x384xf32>
    %185 = vector.extract_strided_slice %181 {offsets = [0, 0], sizes = [2, 128], strides = [1, 1]} : vector<2x384xf32> to vector<2x128xf32>
    %186 = vector.extract_strided_slice %184 {offsets = [0, 0], sizes = [2, 128], strides = [1, 1]} : vector<2x384xf32> to vector<2x128xf32>
    %187 = arith.addf %185, %186 : vector<2x128xf32>
    %188 = arith.negf %187 : vector<2x128xf32>
    %189 = math.exp %188 : vector<2x128xf32>
    %cst_50 = arith.constant 1.000000e+00 : f32
    %190 = vector.broadcast %cst_50 : f32 to vector<2x128xf32>
    %191 = arith.addf %190, %189 : vector<2x128xf32>
    %192 = arith.divf %190, %191 : vector<2x128xf32>
    %193 = vector.extract_strided_slice %181 {offsets = [0, 128], sizes = [2, 128], strides = [1, 1]} : vector<2x384xf32> to vector<2x128xf32>
    %194 = vector.extract_strided_slice %184 {offsets = [0, 128], sizes = [2, 128], strides = [1, 1]} : vector<2x384xf32> to vector<2x128xf32>
    %195 = arith.addf %193, %194 : vector<2x128xf32>
    %196 = arith.negf %195 : vector<2x128xf32>
    %197 = math.exp %196 : vector<2x128xf32>
    %cst_51 = arith.constant 1.000000e+00 : f32
    %198 = vector.broadcast %cst_51 : f32 to vector<2x128xf32>
    %199 = arith.addf %198, %197 : vector<2x128xf32>
    %200 = arith.divf %198, %199 : vector<2x128xf32>
    %201 = vector.extract_strided_slice %181 {offsets = [0, 256], sizes = [2, 128], strides = [1, 1]} : vector<2x384xf32> to vector<2x128xf32>
    %202 = vector.extract_strided_slice %184 {offsets = [0, 256], sizes = [2, 128], strides = [1, 1]} : vector<2x384xf32> to vector<2x128xf32>
    %203 = arith.mulf %192, %202 : vector<2x128xf32>
    %204 = arith.addf %201, %203 : vector<2x128xf32>
    %205 = math.tanh %204 : vector<2x128xf32>
    %cst_52 = arith.constant 1.000000e+00 : f32
    %206 = vector.broadcast %cst_52 : f32 to vector<2x128xf32>
    %207 = arith.subf %206, %200 : vector<2x128xf32>
    %208 = arith.mulf %207, %205 : vector<2x128xf32>
    %209 = arith.mulf %200, %172 : vector<2x128xf32>
    %210 = arith.addf %208, %209 : vector<2x128xf32>
    %c8_i32_53 = arith.constant 8 : i32
    %211 = arith.muli %arg0, %c8_i32_53 : i32
    %212 = arith.addi %211, %c4_i32 : i32
    %213 = vector.broadcast %212 : i32 to vector<2x128xi32>
    %214 = arith.cmpi sgt, %3, %213 : vector<2x128xi32>
    %215 = arith.select %214, %210, %172 : vector<2x128xi1>, vector<2x128xf32>
    %cst_54 = arith.constant 0.000000e+00 : f32
    %216 = vector.broadcast %cst_54 : f32 to vector<2x128xf32>
    %217 = arith.select %214, %210, %216 : vector<2x128xi1>, vector<2x128xf32>
    %218 = arith.index_cast %c4_i32 : i32 to index
    %c0_55 = arith.constant 0 : index
    %c0_56 = arith.constant 0 : index
    %219 = vector.load %arg5[%218, %c0_55, %c0_56] : memref<8x2x128xf32, #tpu.memory_space<vmem>>, vector<1x2x128xf32>
    %220 = vector.shape_cast %219 : vector<1x2x128xf32> to vector<2x128xf32>
    %221 = vector.shape_cast %217 : vector<2x128xf32> to vector<1x2x128xf32>
    tpu.vector_store %arg5[%218, %c0_55, %c0_56], %221 {strides = array<i32>} : memref<8x2x128xf32, #tpu.memory_space<vmem>>, vector<1x2x128xf32>,
    %c5_i32 = arith.constant 5 : i32
    %222 = arith.index_cast %c5_i32 : i32 to index
    %c0_57 = arith.constant 0 : index
    %c0_58 = arith.constant 0 : index
    %223 = vector.load %arg1[%222, %c0_57, %c0_58] : memref<8x2x384xf32, #tpu.memory_space<vmem>>, vector<1x2x384xf32>
    %224 = vector.shape_cast %223 : vector<1x2x384xf32> to vector<2x384xf32>
    %cst_59 = arith.constant dense<0.000000e+00> : vector<2x384xf32>
    %225 = tpu.matmul %215, %4, %cst_59 {dimension_numbers = #tpu.dot_dimension_numbers<[1], [0], [0], [1], [0, 0, 1, 1], [], []>} : vector<2x128xf32>, vector<128x384xf32>, vector<2x384xf32> -> vector<2x384xf32>
    %226 = vector.broadcast %5 : vector<1x384xf32> to vector<2x384xf32>
    %227 = arith.addf %225, %226 : vector<2x384xf32>
    %228 = vector.extract_strided_slice %224 {offsets = [0, 0], sizes = [2, 128], strides = [1, 1]} : vector<2x384xf32> to vector<2x128xf32>
    %229 = vector.extract_strided_slice %227 {offsets = [0, 0], sizes = [2, 128], strides = [1, 1]} : vector<2x384xf32> to vector<2x128xf32>
    %230 = arith.addf %228, %229 : vector<2x128xf32>
    %231 = arith.negf %230 : vector<2x128xf32>
    %232 = math.exp %231 : vector<2x128xf32>
    %cst_60 = arith.constant 1.000000e+00 : f32
    %233 = vector.broadcast %cst_60 : f32 to vector<2x128xf32>
    %234 = arith.addf %233, %232 : vector<2x128xf32>
    %235 = arith.divf %233, %234 : vector<2x128xf32>
    %236 = vector.extract_strided_slice %224 {offsets = [0, 128], sizes = [2, 128], strides = [1, 1]} : vector<2x384xf32> to vector<2x128xf32>
    %237 = vector.extract_strided_slice %227 {offsets = [0, 128], sizes = [2, 128], strides = [1, 1]} : vector<2x384xf32> to vector<2x128xf32>
    %238 = arith.addf %236, %237 : vector<2x128xf32>
    %239 = arith.negf %238 : vector<2x128xf32>
    %240 = math.exp %239 : vector<2x128xf32>
    %cst_61 = arith.constant 1.000000e+00 : f32
    %241 = vector.broadcast %cst_61 : f32 to vector<2x128xf32>
    %242 = arith.addf %241, %240 : vector<2x128xf32>
    %243 = arith.divf %241, %242 : vector<2x128xf32>
    %244 = vector.extract_strided_slice %224 {offsets = [0, 256], sizes = [2, 128], strides = [1, 1]} : vector<2x384xf32> to vector<2x128xf32>
    %245 = vector.extract_strided_slice %227 {offsets = [0, 256], sizes = [2, 128], strides = [1, 1]} : vector<2x384xf32> to vector<2x128xf32>
    %246 = arith.mulf %235, %245 : vector<2x128xf32>
    %247 = arith.addf %244, %246 : vector<2x128xf32>
    %248 = math.tanh %247 : vector<2x128xf32>
    %cst_62 = arith.constant 1.000000e+00 : f32
    %249 = vector.broadcast %cst_62 : f32 to vector<2x128xf32>
    %250 = arith.subf %249, %243 : vector<2x128xf32>
    %251 = arith.mulf %250, %248 : vector<2x128xf32>
    %252 = arith.mulf %243, %215 : vector<2x128xf32>
    %253 = arith.addf %251, %252 : vector<2x128xf32>
    %c8_i32_63 = arith.constant 8 : i32
    %254 = arith.muli %arg0, %c8_i32_63 : i32
    %255 = arith.addi %254, %c5_i32 : i32
    %256 = vector.broadcast %255 : i32 to vector<2x128xi32>
    %257 = arith.cmpi sgt, %3, %256 : vector<2x128xi32>
    %258 = arith.select %257, %253, %215 : vector<2x128xi1>, vector<2x128xf32>
    %cst_64 = arith.constant 0.000000e+00 : f32
    %259 = vector.broadcast %cst_64 : f32 to vector<2x128xf32>
    %260 = arith.select %257, %253, %259 : vector<2x128xi1>, vector<2x128xf32>
    %261 = arith.index_cast %c5_i32 : i32 to index
    %c0_65 = arith.constant 0 : index
    %c0_66 = arith.constant 0 : index
    %262 = vector.load %arg5[%261, %c0_65, %c0_66] : memref<8x2x128xf32, #tpu.memory_space<vmem>>, vector<1x2x128xf32>
    %263 = vector.shape_cast %262 : vector<1x2x128xf32> to vector<2x128xf32>
    %264 = vector.shape_cast %260 : vector<2x128xf32> to vector<1x2x128xf32>
    tpu.vector_store %arg5[%261, %c0_65, %c0_66], %264 {strides = array<i32>} : memref<8x2x128xf32, #tpu.memory_space<vmem>>, vector<1x2x128xf32>,
    %c6_i32 = arith.constant 6 : i32
    %265 = arith.index_cast %c6_i32 : i32 to index
    %c0_67 = arith.constant 0 : index
    %c0_68 = arith.constant 0 : index
    %266 = vector.load %arg1[%265, %c0_67, %c0_68] : memref<8x2x384xf32, #tpu.memory_space<vmem>>, vector<1x2x384xf32>
    %267 = vector.shape_cast %266 : vector<1x2x384xf32> to vector<2x384xf32>
    %cst_69 = arith.constant dense<0.000000e+00> : vector<2x384xf32>
    %268 = tpu.matmul %258, %4, %cst_69 {dimension_numbers = #tpu.dot_dimension_numbers<[1], [0], [0], [1], [0, 0, 1, 1], [], []>} : vector<2x128xf32>, vector<128x384xf32>, vector<2x384xf32> -> vector<2x384xf32>
    %269 = vector.broadcast %5 : vector<1x384xf32> to vector<2x384xf32>
    %270 = arith.addf %268, %269 : vector<2x384xf32>
    %271 = vector.extract_strided_slice %267 {offsets = [0, 0], sizes = [2, 128], strides = [1, 1]} : vector<2x384xf32> to vector<2x128xf32>
    %272 = vector.extract_strided_slice %270 {offsets = [0, 0], sizes = [2, 128], strides = [1, 1]} : vector<2x384xf32> to vector<2x128xf32>
    %273 = arith.addf %271, %272 : vector<2x128xf32>
    %274 = arith.negf %273 : vector<2x128xf32>
    %275 = math.exp %274 : vector<2x128xf32>
    %cst_70 = arith.constant 1.000000e+00 : f32
    %276 = vector.broadcast %cst_70 : f32 to vector<2x128xf32>
    %277 = arith.addf %276, %275 : vector<2x128xf32>
    %278 = arith.divf %276, %277 : vector<2x128xf32>
    %279 = vector.extract_strided_slice %267 {offsets = [0, 128], sizes = [2, 128], strides = [1, 1]} : vector<2x384xf32> to vector<2x128xf32>
    %280 = vector.extract_strided_slice %270 {offsets = [0, 128], sizes = [2, 128], strides = [1, 1]} : vector<2x384xf32> to vector<2x128xf32>
    %281 = arith.addf %279, %280 : vector<2x128xf32>
    %282 = arith.negf %281 : vector<2x128xf32>
    %283 = math.exp %282 : vector<2x128xf32>
    %cst_71 = arith.constant 1.000000e+00 : f32
    %284 = vector.broadcast %cst_71 : f32 to vector<2x128xf32>
    %285 = arith.addf %284, %283 : vector<2x128xf32>
    %286 = arith.divf %284, %285 : vector<2x128xf32>
    %287 = vector.extract_strided_slice %267 {offsets = [0, 256], sizes = [2, 128], strides = [1, 1]} : vector<2x384xf32> to vector<2x128xf32>
    %288 = vector.extract_strided_slice %270 {offsets = [0, 256], sizes = [2, 128], strides = [1, 1]} : vector<2x384xf32> to vector<2x128xf32>
    %289 = arith.mulf %278, %288 : vector<2x128xf32>
    %290 = arith.addf %287, %289 : vector<2x128xf32>
    %291 = math.tanh %290 : vector<2x128xf32>
    %cst_72 = arith.constant 1.000000e+00 : f32
    %292 = vector.broadcast %cst_72 : f32 to vector<2x128xf32>
    %293 = arith.subf %292, %286 : vector<2x128xf32>
    %294 = arith.mulf %293, %291 : vector<2x128xf32>
    %295 = arith.mulf %286, %258 : vector<2x128xf32>
    %296 = arith.addf %294, %295 : vector<2x128xf32>
    %c8_i32_73 = arith.constant 8 : i32
    %297 = arith.muli %arg0, %c8_i32_73 : i32
    %298 = arith.addi %297, %c6_i32 : i32
    %299 = vector.broadcast %298 : i32 to vector<2x128xi32>
    %300 = arith.cmpi sgt, %3, %299 : vector<2x128xi32>
    %301 = arith.select %300, %296, %258 : vector<2x128xi1>, vector<2x128xf32>
    %cst_74 = arith.constant 0.000000e+00 : f32
    %302 = vector.broadcast %cst_74 : f32 to vector<2x128xf32>
    %303 = arith.select %300, %296, %302 : vector<2x128xi1>, vector<2x128xf32>
    %304 = arith.index_cast %c6_i32 : i32 to index
    %c0_75 = arith.constant 0 : index
    %c0_76 = arith.constant 0 : index
    %305 = vector.load %arg5[%304, %c0_75, %c0_76] : memref<8x2x128xf32, #tpu.memory_space<vmem>>, vector<1x2x128xf32>
    %306 = vector.shape_cast %305 : vector<1x2x128xf32> to vector<2x128xf32>
    %307 = vector.shape_cast %303 : vector<2x128xf32> to vector<1x2x128xf32>
    tpu.vector_store %arg5[%304, %c0_75, %c0_76], %307 {strides = array<i32>} : memref<8x2x128xf32, #tpu.memory_space<vmem>>, vector<1x2x128xf32>,
    %c7_i32 = arith.constant 7 : i32
    %308 = arith.index_cast %c7_i32 : i32 to index
    %c0_77 = arith.constant 0 : index
    %c0_78 = arith.constant 0 : index
    %309 = vector.load %arg1[%308, %c0_77, %c0_78] : memref<8x2x384xf32, #tpu.memory_space<vmem>>, vector<1x2x384xf32>
    %310 = vector.shape_cast %309 : vector<1x2x384xf32> to vector<2x384xf32>
    %cst_79 = arith.constant dense<0.000000e+00> : vector<2x384xf32>
    %311 = tpu.matmul %301, %4, %cst_79 {dimension_numbers = #tpu.dot_dimension_numbers<[1], [0], [0], [1], [0, 0, 1, 1], [], []>} : vector<2x128xf32>, vector<128x384xf32>, vector<2x384xf32> -> vector<2x384xf32>
    %312 = vector.broadcast %5 : vector<1x384xf32> to vector<2x384xf32>
    %313 = arith.addf %311, %312 : vector<2x384xf32>
    %314 = vector.extract_strided_slice %310 {offsets = [0, 0], sizes = [2, 128], strides = [1, 1]} : vector<2x384xf32> to vector<2x128xf32>
    %315 = vector.extract_strided_slice %313 {offsets = [0, 0], sizes = [2, 128], strides = [1, 1]} : vector<2x384xf32> to vector<2x128xf32>
    %316 = arith.addf %314, %315 : vector<2x128xf32>
    %317 = arith.negf %316 : vector<2x128xf32>
    %318 = math.exp %317 : vector<2x128xf32>
    %cst_80 = arith.constant 1.000000e+00 : f32
    %319 = vector.broadcast %cst_80 : f32 to vector<2x128xf32>
    %320 = arith.addf %319, %318 : vector<2x128xf32>
    %321 = arith.divf %319, %320 : vector<2x128xf32>
    %322 = vector.extract_strided_slice %310 {offsets = [0, 128], sizes = [2, 128], strides = [1, 1]} : vector<2x384xf32> to vector<2x128xf32>
    %323 = vector.extract_strided_slice %313 {offsets = [0, 128], sizes = [2, 128], strides = [1, 1]} : vector<2x384xf32> to vector<2x128xf32>
    %324 = arith.addf %322, %323 : vector<2x128xf32>
    %325 = arith.negf %324 : vector<2x128xf32>
    %326 = math.exp %325 : vector<2x128xf32>
    %cst_81 = arith.constant 1.000000e+00 : f32
    %327 = vector.broadcast %cst_81 : f32 to vector<2x128xf32>
    %328 = arith.addf %327, %326 : vector<2x128xf32>
    %329 = arith.divf %327, %328 : vector<2x128xf32>
    %330 = vector.extract_strided_slice %310 {offsets = [0, 256], sizes = [2, 128], strides = [1, 1]} : vector<2x384xf32> to vector<2x128xf32>
    %331 = vector.extract_strided_slice %313 {offsets = [0, 256], sizes = [2, 128], strides = [1, 1]} : vector<2x384xf32> to vector<2x128xf32>
    %332 = arith.mulf %321, %331 : vector<2x128xf32>
    %333 = arith.addf %330, %332 : vector<2x128xf32>
    %334 = math.tanh %333 : vector<2x128xf32>
    %cst_82 = arith.constant 1.000000e+00 : f32
    %335 = vector.broadcast %cst_82 : f32 to vector<2x128xf32>
    %336 = arith.subf %335, %329 : vector<2x128xf32>
    %337 = arith.mulf %336, %334 : vector<2x128xf32>
    %338 = arith.mulf %329, %301 : vector<2x128xf32>
    %339 = arith.addf %337, %338 : vector<2x128xf32>
    %c8_i32_83 = arith.constant 8 : i32
    %340 = arith.muli %arg0, %c8_i32_83 : i32
    %341 = arith.addi %340, %c7_i32 : i32
    %342 = vector.broadcast %341 : i32 to vector<2x128xi32>
    %343 = arith.cmpi sgt, %3, %342 : vector<2x128xi32>
    %344 = arith.select %343, %339, %301 : vector<2x128xi1>, vector<2x128xf32>
    %cst_84 = arith.constant 0.000000e+00 : f32
    %345 = vector.broadcast %cst_84 : f32 to vector<2x128xf32>
    %346 = arith.select %343, %339, %345 : vector<2x128xi1>, vector<2x128xf32>
    %347 = arith.index_cast %c7_i32 : i32 to index
    %c0_85 = arith.constant 0 : index
    %c0_86 = arith.constant 0 : index
    %348 = vector.load %arg5[%347, %c0_85, %c0_86] : memref<8x2x128xf32, #tpu.memory_space<vmem>>, vector<1x2x128xf32>
    %349 = vector.shape_cast %348 : vector<1x2x128xf32> to vector<2x128xf32>
    %350 = vector.shape_cast %346 : vector<2x128xf32> to vector<1x2x128xf32>
    tpu.vector_store %arg5[%347, %c0_85, %c0_86], %350 {strides = array<i32>} : memref<8x2x128xf32, #tpu.memory_space<vmem>>, vector<1x2x128xf32>,
    %c8_i32_87 = arith.constant 8 : i32
    %c0_88 = arith.constant 0 : index
    %c0_89 = arith.constant 0 : index
    %351 = vector.load %arg6[%c0_88, %c0_89] : memref<2x128xf32, #tpu.memory_space<vmem>>, vector<2x128xf32>
    tpu.vector_store %arg6[%c0_88, %c0_89], %344 {strides = array<i32>} : memref<2x128xf32, #tpu.memory_space<vmem>>, vector<2x128xf32>,
    return
  }
  func.func @transform_0(%arg0: i32) -> (i32, i32, i32) {
    %c0_i32 = arith.constant 0 : i32
    %c0_i32_0 = arith.constant 0 : i32
    %c0_i32_1 = arith.constant 0 : i32
    return %arg0, %c0_i32, %c0_i32_0 : i32, i32, i32
  }
  func.func @transform_1(%arg0: i32) -> (i32, i32) {
    %c0_i32 = arith.constant 0 : i32
    %c0_i32_0 = arith.constant 0 : i32
    %c0_i32_1 = arith.constant 0 : i32
    return %c0_i32, %c0_i32_0 : i32, i32
  }
  func.func @transform_2(%arg0: i32) -> (i32, i32) {
    %c0_i32 = arith.constant 0 : i32
    %c0_i32_0 = arith.constant 0 : i32
    %c0_i32_1 = arith.constant 0 : i32
    return %c0_i32, %c0_i32_0 : i32, i32
  }
  func.func @transform_3(%arg0: i32) -> (i32, i32) {
    %c0_i32 = arith.constant 0 : i32
    %c0_i32_0 = arith.constant 0 : i32
    %c0_i32_1 = arith.constant 0 : i32
    return %c0_i32, %c0_i32_0 : i32, i32
  }
  func.func @transform_4(%arg0: i32) -> (i32, i32, i32) {
    %c0_i32 = arith.constant 0 : i32
    %c0_i32_0 = arith.constant 0 : i32
    %c0_i32_1 = arith.constant 0 : i32
    return %arg0, %c0_i32, %c0_i32_0 : i32, i32, i32
  }
}

module attributes {stable_mosaic.version = 11 : i64} {
  func.func @capnet_kernel(%arg0: i32, %arg1: memref<2x8x128xf32, #tpu.memory_space<vmem>>, %arg2: memref<2x1xi32, #tpu.memory_space<vmem>>, %arg3: memref<128x12xf32, #tpu.memory_space<vmem>>, %arg4: memref<1x128xf32, #tpu.memory_space<vmem>>, %arg5: memref<1x1xf32, #tpu.memory_space<vmem>>, %arg6: memref<128x3xf32, #tpu.memory_space<vmem>>, %arg7: memref<1x3xf32, #tpu.memory_space<vmem>>, %arg8: memref<2x6xf32, #tpu.memory_space<vmem>>, %arg9: memref<2x6x3xf32, #tpu.memory_space<vmem>>, %arg10: memref<2x8x12xf32, #tpu.memory_space<vmem>>) attributes {dimension_semantics = [#tpu.dimension_semantics<parallel>], iteration_bounds = array<i64: 1>, scalar_prefetch = 0 : i64, scratch_operands = 0 : i64, tpu.core_type = #tpu.core_type<tc>, window_params = [{transform_indices = @transform_0, window_bounds = array<i64: 2, 8, 128>}, {transform_indices = @transform_1, window_bounds = array<i64: 2, 1>}, {pipeline_mode = #tpu.pipeline_mode<synchronous>, transform_indices = @transform_2, window_bounds = array<i64: 128, 12>}, {pipeline_mode = #tpu.pipeline_mode<synchronous>, transform_indices = @transform_3, window_bounds = array<i64: 1, 128>}, {pipeline_mode = #tpu.pipeline_mode<synchronous>, transform_indices = @transform_4, window_bounds = array<i64: 1, 1>}, {pipeline_mode = #tpu.pipeline_mode<synchronous>, transform_indices = @transform_5, window_bounds = array<i64: 128, 3>}, {pipeline_mode = #tpu.pipeline_mode<synchronous>, transform_indices = @transform_6, window_bounds = array<i64: 1, 3>}, {transform_indices = @transform_7, window_bounds = array<i64: 2, 6>}, {transform_indices = @transform_8, window_bounds = array<i64: 2, 6, 3>}, {transform_indices = @transform_9, window_bounds = array<i64: 2, 8, 12>}]} {
    %c0 = arith.constant 0 : index
    %c0_0 = arith.constant 0 : index
    %c0_1 = arith.constant 0 : index
    %0 = vector.load %arg1[%c0, %c0_0, %c0_1] : memref<2x8x128xf32, #tpu.memory_space<vmem>>, vector<2x8x128xf32>
    %c0_2 = arith.constant 0 : index
    %c0_3 = arith.constant 0 : index
    %1 = vector.load %arg2[%c0_2, %c0_3] : memref<2x1xi32, #tpu.memory_space<vmem>>, vector<2x1xi32>
    %2 = tpu.iota {dimensions = array<i32: 1>} : vector<2x8x1xi32>
    %3 = vector.shape_cast %1 : vector<2x1xi32> to vector<2x1x1xi32>
    %4 = vector.broadcast %3 : vector<2x1x1xi32> to vector<2x8x1xi32>
    %5 = arith.cmpi slt, %2, %4 : vector<2x8x1xi32>
    %c0_4 = arith.constant 0 : index
    %c0_5 = arith.constant 0 : index
    %6 = vector.load %arg3[%c0_4, %c0_5] : memref<128x12xf32, #tpu.memory_space<vmem>>, vector<128x12xf32>
    "tpu.trace_start"() <{level = 10 : i32, message = "bth,ha->bta"}> : () -> ()
    %cst = arith.constant dense<0.000000e+00> : vector<2x8x12xf32>
    %7 = tpu.matmul %0, %6, %cst {dimension_numbers = #tpu.dot_dimension_numbers<[2], [0], [0, 1], [1], [0, 0, 0, 1, 1, 1], [], []>} : vector<2x8x128xf32>, vector<128x12xf32>, vector<2x8x12xf32> -> vector<2x8x12xf32>
    %cst_6 = arith.constant -1.000000e+30 : f32
    "tpu.trace_stop"() : () -> ()
    %8 = vector.broadcast %cst_6 : f32 to vector<2x8x12xf32>
    %9 = vector.shape_cast %5 : vector<2x8x1xi1> to vector<2x8x1xi1>
    %10 = vector.broadcast %9 : vector<2x8x1xi1> to vector<2x8x12xi1>
    %11 = arith.select %10, %7, %8 : vector<2x8x12xi1>, vector<2x8x12xf32>
    %cst_7 = arith.constant dense<0xFF800000> : vector<2x12xf32>
    %12 = vector.multi_reduction <maximumf>, %11, %cst_7 [1] : vector<2x8x12xf32> to vector<2x12xf32>
    %13 = vector.shape_cast %12 : vector<2x12xf32> to vector<2x1x12xf32>
    %14 = vector.broadcast %13 : vector<2x1x12xf32> to vector<2x8x12xf32>
    %15 = arith.subf %11, %14 : vector<2x8x12xf32>
    %16 = math.exp %15 : vector<2x8x12xf32>
    %cst_8 = arith.constant 0.000000e+00 : f32
    %17 = vector.broadcast %cst_8 : f32 to vector<2x8x12xf32>
    %18 = vector.shape_cast %5 : vector<2x8x1xi1> to vector<2x8x1xi1>
    %19 = vector.broadcast %18 : vector<2x8x1xi1> to vector<2x8x12xi1>
    %20 = arith.select %19, %16, %17 : vector<2x8x12xi1>, vector<2x8x12xf32>
    %cst_9 = arith.constant dense<0.000000e+00> : vector<2x12xf32>
    %21 = vector.multi_reduction <add>, %20, %cst_9 [1] : vector<2x8x12xf32> to vector<2x12xf32>
    %22 = vector.shape_cast %21 : vector<2x12xf32> to vector<2x1x12xf32>
    %23 = vector.broadcast %22 : vector<2x1x12xf32> to vector<2x8x12xf32>
    %24 = arith.divf %20, %23 : vector<2x8x12xf32>
    %c0_10 = arith.constant 0 : index
    %c0_11 = arith.constant 0 : index
    %c0_12 = arith.constant 0 : index
    %25 = vector.load %arg10[%c0_10, %c0_11, %c0_12] : memref<2x8x12xf32, #tpu.memory_space<vmem>>, vector<2x8x12xf32>
    tpu.vector_store %arg10[%c0_10, %c0_11, %c0_12], %24 {strides = array<i32>} : memref<2x8x12xf32, #tpu.memory_space<vmem>>, vector<2x8x12xf32>,
    "tpu.trace_start"() <{level = 10 : i32, message = "bta,bth->bah"}> : () -> ()
    %cst_13 = arith.constant dense<0.000000e+00> : vector<2x12x128xf32>
    %26 = tpu.matmul %24, %0, %cst_13 {dimension_numbers = #tpu.dot_dimension_numbers<[1], [1], [2], [2], [0, 0, 0, 2, 1, 2], [0], [0]>} : vector<2x8x12xf32>, vector<2x8x128xf32>, vector<2x12x128xf32> -> vector<2x12x128xf32>
    "tpu.trace_stop"() : () -> ()
    %27 = vector.extract_strided_slice %26 {offsets = [0, 0, 0], sizes = [2, 6, 128], strides = [1, 1, 1]} : vector<2x12x128xf32> to vector<2x6x128xf32>
    %28 = vector.extract_strided_slice %26 {offsets = [0, 6, 0], sizes = [2, 6, 128], strides = [1, 1, 1]} : vector<2x12x128xf32> to vector<2x6x128xf32>
    %c0_14 = arith.constant 0 : index
    %c0_15 = arith.constant 0 : index
    %29 = vector.load %arg4[%c0_14, %c0_15] : memref<1x128xf32, #tpu.memory_space<vmem>>, vector<1x128xf32>
    %30 = vector.shape_cast %29 : vector<1x128xf32> to vector<1x1x128xf32>
    %31 = vector.broadcast %30 : vector<1x1x128xf32> to vector<2x6x128xf32>
    %32 = arith.mulf %27, %31 : vector<2x6x128xf32>
    %cst_16 = arith.constant dense<0.000000e+00> : vector<2x6xf32>
    %33 = vector.multi_reduction <add>, %32, %cst_16 [2] : vector<2x6x128xf32> to vector<2x6xf32>
    %c0_17 = arith.constant 0 : index
    %c0_18 = arith.constant 0 : index
    %34 = vector.load %arg5[%c0_17, %c0_18] : memref<1x1xf32, #tpu.memory_space<vmem>>, vector<1x1xf32>
    %35 = vector.extract %34[0, 0] : f32 from vector<1x1xf32>
    %36 = vector.broadcast %35 : f32 to vector<2x6xf32>
    %37 = arith.addf %33, %36 : vector<2x6xf32>
    %38 = arith.negf %37 : vector<2x6xf32>
    %39 = math.exp %38 : vector<2x6xf32>
    %cst_19 = arith.constant 1.000000e+00 : f32
    %40 = vector.broadcast %cst_19 : f32 to vector<2x6xf32>
    %41 = arith.addf %40, %39 : vector<2x6xf32>
    %42 = arith.divf %40, %41 : vector<2x6xf32>
    %c0_20 = arith.constant 0 : index
    %c0_21 = arith.constant 0 : index
    %43 = vector.load %arg8[%c0_20, %c0_21] : memref<2x6xf32, #tpu.memory_space<vmem>>, vector<2x6xf32>
    tpu.vector_store %arg8[%c0_20, %c0_21], %42 {strides = array<i32>} : memref<2x6xf32, #tpu.memory_space<vmem>>, vector<2x6xf32>,
    %c0_22 = arith.constant 0 : index
    %c0_23 = arith.constant 0 : index
    %44 = vector.load %arg6[%c0_22, %c0_23] : memref<128x3xf32, #tpu.memory_space<vmem>>, vector<128x3xf32>
    "tpu.trace_start"() <{level = 10 : i32, message = "bah,hl->bal"}> : () -> ()
    %cst_24 = arith.constant dense<0.000000e+00> : vector<2x6x3xf32>
    %45 = tpu.matmul %28, %44, %cst_24 {dimension_numbers = #tpu.dot_dimension_numbers<[2], [0], [0, 1], [1], [0, 0, 0, 1, 1, 1], [], []>} : vector<2x6x128xf32>, vector<128x3xf32>, vector<2x6x3xf32> -> vector<2x6x3xf32>
    "tpu.trace_stop"() : () -> ()
    %c0_25 = arith.constant 0 : index
    %c0_26 = arith.constant 0 : index
    %46 = vector.load %arg7[%c0_25, %c0_26] : memref<1x3xf32, #tpu.memory_space<vmem>>, vector<1x3xf32>
    %47 = vector.shape_cast %46 : vector<1x3xf32> to vector<1x1x3xf32>
    %48 = vector.broadcast %47 : vector<1x1x3xf32> to vector<2x6x3xf32>
    %49 = arith.addf %45, %48 : vector<2x6x3xf32>
    %cst_27 = arith.constant dense<0xFF800000> : vector<2x6xf32>
    %50 = vector.multi_reduction <maximumf>, %49, %cst_27 [2] : vector<2x6x3xf32> to vector<2x6xf32>
    %51 = vector.shape_cast %50 : vector<2x6xf32> to vector<2x6x1xf32>
    %52 = vector.broadcast %51 : vector<2x6x1xf32> to vector<2x6x3xf32>
    %53 = arith.subf %49, %52 : vector<2x6x3xf32>
    %54 = math.exp %53 : vector<2x6x3xf32>
    %cst_28 = arith.constant dense<0.000000e+00> : vector<2x6xf32>
    %55 = vector.multi_reduction <add>, %54, %cst_28 [2] : vector<2x6x3xf32> to vector<2x6xf32>
    %56 = vector.shape_cast %55 : vector<2x6xf32> to vector<2x6x1xf32>
    %57 = vector.broadcast %56 : vector<2x6x1xf32> to vector<2x6x3xf32>
    %58 = arith.divf %54, %57 : vector<2x6x3xf32>
    %c0_29 = arith.constant 0 : index
    %c0_30 = arith.constant 0 : index
    %c0_31 = arith.constant 0 : index
    %59 = vector.load %arg9[%c0_29, %c0_30, %c0_31] : memref<2x6x3xf32, #tpu.memory_space<vmem>>, vector<2x6x3xf32>
    tpu.vector_store %arg9[%c0_29, %c0_30, %c0_31], %58 {strides = array<i32>} : memref<2x6x3xf32, #tpu.memory_space<vmem>>, vector<2x6x3xf32>,
    return
  }
  func.func @transform_0(%arg0: i32) -> (i32, i32, i32) {
    %c0_i32 = arith.constant 0 : i32
    %c0_i32_0 = arith.constant 0 : i32
    %c0_i32_1 = arith.constant 0 : i32
    return %arg0, %c0_i32, %c0_i32_0 : i32, i32, i32
  }
  func.func @transform_1(%arg0: i32) -> (i32, i32) {
    %c0_i32 = arith.constant 0 : i32
    %c0_i32_0 = arith.constant 0 : i32
    return %arg0, %c0_i32 : i32, i32
  }
  func.func @transform_2(%arg0: i32) -> (i32, i32) {
    %c0_i32 = arith.constant 0 : i32
    %c0_i32_0 = arith.constant 0 : i32
    %c0_i32_1 = arith.constant 0 : i32
    return %c0_i32, %c0_i32_0 : i32, i32
  }
  func.func @transform_3(%arg0: i32) -> (i32, i32) {
    %c0_i32 = arith.constant 0 : i32
    %c0_i32_0 = arith.constant 0 : i32
    %c0_i32_1 = arith.constant 0 : i32
    return %c0_i32, %c0_i32_0 : i32, i32
  }
  func.func @transform_4(%arg0: i32) -> (i32, i32) {
    %c0_i32 = arith.constant 0 : i32
    %c0_i32_0 = arith.constant 0 : i32
    %c0_i32_1 = arith.constant 0 : i32
    return %c0_i32, %c0_i32_0 : i32, i32
  }
  func.func @transform_5(%arg0: i32) -> (i32, i32) {
    %c0_i32 = arith.constant 0 : i32
    %c0_i32_0 = arith.constant 0 : i32
    %c0_i32_1 = arith.constant 0 : i32
    return %c0_i32, %c0_i32_0 : i32, i32
  }
  func.func @transform_6(%arg0: i32) -> (i32, i32) {
    %c0_i32 = arith.constant 0 : i32
    %c0_i32_0 = arith.constant 0 : i32
    %c0_i32_1 = arith.constant 0 : i32
    return %c0_i32, %c0_i32_0 : i32, i32
  }
  func.func @transform_7(%arg0: i32) -> (i32, i32) {
    %c0_i32 = arith.constant 0 : i32
    %c0_i32_0 = arith.constant 0 : i32
    return %arg0, %c0_i32 : i32, i32
  }
  func.func @transform_8(%arg0: i32) -> (i32, i32, i32) {
    %c0_i32 = arith.constant 0 : i32
    %c0_i32_0 = arith.constant 0 : i32
    %c0_i32_1 = arith.constant 0 : i32
    return %arg0, %c0_i32, %c0_i32_0 : i32, i32, i32
  }
  func.func @transform_9(%arg0: i32) -> (i32, i32, i32) {
    %c0_i32 = arith.constant 0 : i32
    %c0_i32_0 = arith.constant 0 : i32
    %c0_i32_1 = arith.constant 0 : i32
    return %arg0, %c0_i32, %c0_i32_0 : i32, i32, i32
  }
}

</mosaic_0001>

<llo_original>
// kernel: aspect_capsule_forward.3
$region0: #{aspect_capsule_forward.3}
  #allocation0 [shape = 'u32[]', space=smem, size = 0x4, offset = 0x4, fixed_abs, tag = 'smem constant byte address 0x4 - core index']
  #allocation1 [shape = 'u32[144,128]{1,0:T(1,128)}', space=vmem, size = 0x12000, scoped, tag = 'internal scratch']
  #allocation2 [shape = 'f32[1,1]{1,0:T(1,128)S(1)}', space=vmem, size = 0x200, scoped, tag = 'scoped memory for aspect_capsule_forward.3']
  %s0 = inlined_call_operand.vmem [shape: f32[2,8,128], index: 0, kind: input, shape index: {}]
  %s1 = inlined_call_operand.vmem [shape: s32[2,1], index: 1, kind: input, shape index: {}]
  %s2 = inlined_call_operand.vmem [shape: f32[128,12], index: 2, kind: input, shape index: {}]
  %s3 = inlined_call_operand.vmem [shape: f32[1,128], index: 3, kind: input, shape index: {}]
  %s4 = inlined_call_operand.<no memory space> [shape: f32[1,1], index: 4, kind: input, shape index: {}]
  %s5 = inlined_call_operand.vmem [shape: f32[128,3], index: 5, kind: input, shape index: {}]
  %s6 = inlined_call_operand.vmem [shape: f32[1,3], index: 6, kind: input, shape index: {}]
  %s7 = inlined_call_operand.hbm [shape: f32[2,6], index: 7, kind: output, shape index: {0}]
  %s8 = inlined_call_operand.vmem [shape: f32[2,6,3], index: 8, kind: output, shape index: {1}]
  %s9 = inlined_call_operand.vmem [shape: f32[2,8,12], index: 9, kind: output, shape index: {2}]
  %10 = xla_tuple %s7, %s8, %s9
  %s11 = sld [smem:[#allocation0]]
  $region54: #{aspect_capsule_forward.3} parent=0
    _
  %s13 = ssub.s32 1, %s11
  %s14 = scalar_select 0, %s13, %s11
  %v15 = vstv %s4
  %16 = vst [vmem:[#allocation2] sm:$0x1] %v15
  $region1: #{aspect_capsule_forward.3} parent=0
    #allocation3 [shape = 'u8[1024]{0}', space=vmem, size = 0x400, scoped, tag = 'output window, operand 0, single buffered']
    #allocation4 [shape = 's32[1]{0}', space=sflag, size = 0x4, scoped, tag = 'scoped memory for aspect_capsule_forward.3']
    %17 = vsyncpa [#allocation4], 0
    // Predicated region
    $region2: #{aspect_capsule_forward.3} parent=1 // pred_check
      _
    $region3: #{aspect_capsule_forward.3} parent=1 // pred_check_branch
      %19 = sbr.rel (0) target = $region5
    $region4: #{aspect_capsule_forward.3} parent=1 // pred_region
      _
    $region5: #{aspect_capsule_forward.3} parent=1 // pred_fallthru
      _
    // Predicated region
    $region6: #{aspect_capsule_forward.3} parent=1 // pred_check
      _
    $region7: #{aspect_capsule_forward.3} parent=1 // pred_check_branch
      %21 = sbr.rel (0) target = $region9
    $region8: #{aspect_capsule_forward.3} parent=1 // pred_region
      _
    $region9: #{aspect_capsule_forward.3} parent=1 // pred_fallthru
      _
    // Predicated region
    $region10: #{aspect_capsule_forward.3} parent=1 // pred_check
      _
    $region11: #{aspect_capsule_forward.3} parent=1 // pred_check_branch
      %23 = sbr.rel (0) target = $region13
    $region12: #{aspect_capsule_forward.3} parent=1 // pred_region
      _
    $region13: #{aspect_capsule_forward.3} parent=1 // pred_fallthru
      _
    // Predicated region
    $region14: #{aspect_capsule_forward.3} parent=1 // pred_check
      _
    $region15: #{aspect_capsule_forward.3} parent=1 // pred_check_branch
      %25 = sbr.rel (0) target = $region17
    $region16: #{aspect_capsule_forward.3} parent=1 // pred_region
      _
    $region17: #{aspect_capsule_forward.3} parent=1 // pred_fallthru
      _
    // Predicated region
    $region18: #{aspect_capsule_forward.3} parent=1 // pred_check
      _
    $region19: #{aspect_capsule_forward.3} parent=1 // pred_check_branch
      %27 = sbr.rel (0) target = $region21
    $region20: #{aspect_capsule_forward.3} parent=1 // pred_region
      _
    $region21: #{aspect_capsule_forward.3} parent=1 // pred_fallthru
      _
    // Predicated region
    $region22: #{aspect_capsule_forward.3} parent=1 // pred_check
      _
    $region23: #{aspect_capsule_forward.3} parent=1 // pred_check_branch
      %29 = sbr.rel (0) target = $region25
    $region24: #{aspect_capsule_forward.3} parent=1 // pred_region
      _
    $region25: #{aspect_capsule_forward.3} parent=1 // pred_fallthru
      _
    // Predicated region
    $region26: #{aspect_capsule_forward.3} parent=1 // pred_check
      _
    $region27: #{aspect_capsule_forward.3} parent=1 // pred_check_branch
      %31 = sbr.rel (0) target = $region29
    $region28: #{aspect_capsule_forward.3} parent=1 // pred_region
      _
    $region29: #{aspect_capsule_forward.3} parent=1 // pred_fallthru
      _
    %v32 = vld [vmem:[%s0] sm:$0xff]
    %v33 = vld [vmem:[%s0 + $0x8] sm:$0xff]
    %v34 = vld [vmem:[%s1] sm:$0x3]
    %v35 = vlaneseq
    %v36 = vshrl.u32 %v35, 7
    %v38 = vunpack.c.l.s4 1966171168
    %v39 = vunpack.c.0.s8 %v38
    %v40 = vlaneseq
    %v41 = vshrl.u32 %v40, 7
    %v42 = vsub.s32 %v39, %v41
    %v43 = vrot.slane %v34, %v42
    %v44 = vcombine.high %v43, %v43
    %v46 = vunpack.c.l.s4 1966171168
    %v47 = vunpack.c.0.s8 %v46
    %v48 = vlaneseq
    %v49 = vshrl.u32 %v48, 7
    %v50 = vsub.s32 %v47, %v49
    %v51 = vrot.slane %v43, %v50
    %v53 = vunpack.c.l.s4 1966171168
    %v54 = vunpack.c.0.s8 %v53
    %v55 = vlaneseq
    %v56 = vshrl.u32 %v55, 7
    %v57 = vsub.s32 %v54, %v56
    %v58 = vrot.slane %v44, %v57
    %v59 = vlaneseq
    %v60 = vshrl.u32 %v59, 7
    %v61 = vsub.s32 0, %v60
    %v62 = vrot.slane %v51, %v61
    %v63 = vlaneseq
    %v64 = vshrl.u32 %v63, 7
    %v65 = vsub.s32 0, %v64
    %v66 = vrot.slane %v58, %v65
    %vm67 = vcmp.lt.s32.totalorder %v36, %v62
    %vm68 = vcmp.lt.s32.totalorder %v36, %v66
    %v69 = vld [vmem:[%s2] sm:$0xff]
    %v70 = vld [vmem:[%s2 + $0x8] sm:$0xff]
    %v71 = vld [vmem:[%s2 + $0x10] sm:$0xff]
    %v72 = vld [vmem:[%s2 + $0x18] sm:$0xff]
    %v73 = vld [vmem:[%s2 + $0x20] sm:$0xff]
    %v74 = vld [vmem:[%s2 + $0x28] sm:$0xff]
    %v75 = vld [vmem:[%s2 + $0x30] sm:$0xff]
    %v76 = vld [vmem:[%s2 + $0x38] sm:$0xff]
    %v77 = vld [vmem:[%s2 + $0x40] sm:$0xff]
    %v78 = vld [vmem:[%s2 + $0x48] sm:$0xff]
    %v79 = vld [vmem:[%s2 + $0x50] sm:$0xff]
    %v80 = vld [vmem:[%s2 + $0x58] sm:$0xff]
    %v81 = vld [vmem:[%s2 + $0x60] sm:$0xff]
    %v82 = vld [vmem:[%s2 + $0x68] sm:$0xff]
    %v83 = vld [vmem:[%s2 + $0x70] sm:$0xff]
    %v84 = vld [vmem:[%s2 + $0x78] sm:$0xff]
    %85 = vmatprep.subr.mxu0 0.0
    %86 = vmatpush1.msra.mxu0 %v69
    %87 = vmatprep.subr.mxu0 0.0
    %88 = vmatpush1.msra.mxu0 %v70
    %89 = vmatprep.subr.mxu0 0.0
    %90 = vmatpush1.msra.mxu0 %v71
    %91 = vmatprep.subr.mxu0 0.0
    %92 = vmatpush1.msra.mxu0 %v72
    %93 = vmatprep.subr.mxu0 0.0
    %94 = vmatpush1.msra.mxu0 %v73
    %95 = vmatprep.subr.mxu0 0.0
    %96 = vmatpush1.msra.mxu0 %v74
    %97 = vmatprep.subr.mxu0 0.0
    %98 = vmatpush1.msra.mxu0 %v75
    %99 = vmatprep.subr.mxu0 0.0
    %100 = vmatpush1.msra.mxu0 %v76
    %101 = vmatprep.subr.mxu0 0.0
    %102 = vmatpush1.msra.mxu0 %v77
    %103 = vmatprep.subr.mxu0 0.0
    %104 = vmatpush1.msra.mxu0 %v78
    %105 = vmatprep.subr.mxu0 0.0
    %106 = vmatpush1.msra.mxu0 %v79
    %107 = vmatprep.subr.mxu0 0.0
    %108 = vmatpush1.msra.mxu0 %v80
    %109 = vmatprep.subr.mxu0 0.0
    %110 = vmatpush1.msra.mxu0 %v81
    %111 = vmatprep.subr.mxu0 0.0
    %112 = vmatpush1.msra.mxu0 %v82
    %113 = vmatprep.subr.mxu0 0.0
    %114 = vmatpush1.msra.mxu0 %v83
    %115 = vmatprep.subr.mxu0 0.0
    %116 = vmatpush1.msra.mxu0 %v84
    %117 = vmatprep.subr.mxu0 0.0
    %118 = vmatpush1.msra.mxu0 0.0
    %119 = vmatprep.subr.mxu0 0.0
    %120 = vmatpush1.msra.mxu0 0.0
    %121 = vmatprep.subr.mxu0 0.0
    %122 = vmatpush1.msra.mxu0 0.0
    %123 = vmatprep.subr.mxu0 0.0
    %124 = vmatpush1.msra.mxu0 0.0
    %125 = vmatprep.subr.mxu0 0.0
    %126 = vmatpush1.msra.mxu0 0.0
    %127 = vmatprep.subr.mxu0 0.0
    %128 = vmatpush1.msra.mxu0 0.0
    %129 = vmatprep.subr.mxu0 0.0
    %130 = vmatpush1.msra.mxu0 0.0
    %131 = vmatprep.subr.mxu0 0.0
    %132 = vmatpush1.msra.mxu0 0.0
    %133 = vmatprep.subr.mxu0 0.0
    %134 = vmatpush1.msra.mxu0 0.0
    %135 = vmatprep.subr.mxu0 0.0
    %136 = vmatpush1.msra.mxu0 0.0
    %137 = vmatprep.subr.mxu0 0.0
    %138 = vmatpush1.msra.mxu0 0.0
    %139 = vmatprep.subr.mxu0 0.0
    %140 = vmatpush1.msra.mxu0 0.0
    %141 = vmatprep.subr.mxu0 0.0
    %142 = vmatpush1.msra.mxu0 0.0
    %143 = vmatprep.subr.mxu0 0.0
    %144 = vmatpush1.msra.mxu0 0.0
    %145 = vmatprep.subr.mxu0 0.0
    %146 = vmatpush1.msra.mxu0 0.0
    %147 = vmatprep.subr.mxu0 0.0
    %148 = vmatpush1.msra.mxu0 0.0
    %149 = vmatprep.mubr.f32.mxu0 0.0
    %150 = vmatmul.mubr.f32.gmra.mrb[0].mxu0 %v32
    %v151 = vpop.f32.mrb[0].mxu0
    %v152 = vadd.f32 0.0, %v151
    %v153 = vpop.f32.mrb[0].mxu0
    %154 = vmatprep.mubr.f32.mxu0 0.0
    %155 = vmatmul.mubr.f32.gmra.mrb[0].mxu0 %v33
    %v156 = vpop.f32.mrb[0].mxu0
    %v157 = vadd.f32 0.0, %v156
    %v158 = vpop.f32.mrb[0].mxu0
    %159 = vdwg.mxu0
    %v160 = vsel %vm67, 1, 0
    %v161 = vsel %vm68, 1, 0
    %162 = vset.pattern.permute.xlu0 0
    %163 = vperm.xlu0 %162, %v160
    %v164 = vpop.permute.xlu0 %163
    %165 = vset.pattern.permute.xlu0 0
    %166 = vperm.xlu0 %165, %v161
    %v167 = vpop.permute.xlu0 %166
    %vm168 = vcmp.eq.s32.totalorder %v164, 1
    %vm169 = vcmp.eq.s32.totalorder %v167, 1
    %v170 = vsel %vm168, %v152, -1e+30
    %v171 = vsel %vm169, %v157, -1e+30
    %vm172 = vcmask 97280
    %v173 = vsel %vm172, %v170, -inf
    %v174 = vrot.slane %v173, 4
    %v175 = vmax.f32 %v173, %v174
    %v176 = vrot.slane %v175, 2
    %v177 = vmax.f32 %v175, %v176
    %v178 = vrot.slane %v177, 1
    %v179 = vmax.f32 %v177, %v178
    %v180 = vsel %vm172, %v171, -inf
    %v181 = vrot.slane %v180, 4
    %v182 = vmax.f32 %v180, %v181
    %v183 = vrot.slane %v182, 2
    %v184 = vmax.f32 %v182, %v183
    %v185 = vrot.slane %v184, 1
    %v186 = vmax.f32 %v184, %v185
    %v187 = vsub.f32 %v170, %v179
    %v188 = vsub.f32 %v171, %v186
    %v189 = vmul.f32 %v187, 1.442695
    %v190 = vpow.pop %v189
    %v191 = vmul.f32 %v188, 1.442695
    %v192 = vpow.pop %v191
    %v193 = vsel %vm168, %v190, 0.0
    %v194 = vsel %vm169, %v192, 0.0
    %v195 = vsel %vm172, %v193, 0.0
    %v196 = vrot.slane %v195, 4
    %v197 = vadd.f32 %v195, %v196
    %v198 = vrot.slane %v197, 2
    %v199 = vadd.f32 %v197, %v198
    %v200 = vrot.slane %v199, 1
    %v201 = vadd.f32 %v199, %v200
    %v202 = vsel %vm172, %v194, 0.0
    %v203 = vrot.slane %v202, 4
    %v204 = vadd.f32 %v202, %v203
    %v205 = vrot.slane %v204, 2
    %v206 = vadd.f32 %v204, %v205
    %v207 = vrot.slane %v206, 1
    %v208 = vadd.f32 %v206, %v207
    %v209 = vrcp.pop %v201
    %v210 = vmul.f32 %v193, %v209
    %v211 = vrcp.pop %v208
    %v212 = vmul.f32 %v194, %v211
    %213 = vst.msk [vmem:[%s9] sm:$0xff] %vm172, %v210
    %214 = vst.msk [vmem:[%s9 + $0x8] sm:$0xff] %vm172, %v212
    %215 = vxpose.xlu0.b32.start [1/16] %v210, 128
    %216 = vxpose.xlu0.b32.cont [2/16] 0.0, 128
    %217 = vxpose.xlu0.b32.cont [3/16] 0.0, 128
    %218 = vxpose.xlu0.b32.cont [4/16] 0.0, 128
    %219 = vxpose.xlu0.b32.cont [5/16] 0.0, 128
    %220 = vxpose.xlu0.b32.cont [6/16] 0.0, 128
    %221 = vxpose.xlu0.b32.cont [7/16] 0.0, 128
    %222 = vxpose.xlu0.b32.cont [8/16] 0.0, 128
    %223 = vxpose.xlu0.b32.cont [9/16] 0.0, 128
    %224 = vxpose.xlu0.b32.cont [10/16] 0.0, 128
    %225 = vxpose.xlu0.b32.cont [11/16] 0.0, 128
    %226 = vxpose.xlu0.b32.cont [12/16] 0.0, 128
    %227 = vxpose.xlu0.b32.cont [13/16] 0.0, 128
    %228 = vxpose.xlu0.b32.cont [14/16] 0.0, 128
    %229 = vxpose.xlu0.b32.cont [15/16] 0.0, 128
    %230 = vxpose.xlu0.b32.end [16/16] 0.0, 128
    %v231 = vpop.trf.xlu0
    %v232 = vpop.trf.xlu0
    %v233 = vpop.trf.xlu0
    %v234 = vpop.trf.xlu0
    %v235 = vpop.trf.xlu0
    %v236 = vpop.trf.xlu0
    %v237 = vpop.trf.xlu0
    %v238 = vpop.trf.xlu0
    %v239 = vpop.trf.xlu0
    %v240 = vpop.trf.xlu0
    %v241 = vpop.trf.xlu0
    %v242 = vpop.trf.xlu0
    %v243 = vpop.trf.xlu0
    %v244 = vpop.trf.xlu0
    %v245 = vpop.trf.xlu0
    %v246 = vpop.trf.xlu0
    %vm247 = vcmask 64512
    %v249 = vsel %vm247, %v231, 0
    %v252 = vsel %vm247, %v232, 0
    %254 = vmatprep.subr.mxu0 0.0
    %255 = vmatpush1.msra.mxu0 %v32
    %256 = vmatprep.subr.mxu0 0.0
    %257 = vmatpush1.msra.mxu0 0.0
    %258 = vmatprep.subr.mxu0 0.0
    %259 = vmatpush1.msra.mxu0 0.0
    %260 = vmatprep.subr.mxu0 0.0
    %261 = vmatpush1.msra.mxu0 0.0
    %262 = vmatprep.subr.mxu0 0.0
    %263 = vmatpush1.msra.mxu0 0.0
    %264 = vmatprep.subr.mxu0 0.0
    %265 = vmatpush1.msra.mxu0 0.0
    %266 = vmatprep.subr.mxu0 0.0
    %267 = vmatpush1.msra.mxu0 0.0
    %268 = vmatprep.subr.mxu0 0.0
    %269 = vmatpush1.msra.mxu0 0.0
    %270 = vmatprep.subr.mxu0 0.0
    %271 = vmatpush1.msra.mxu0 0.0
    %272 = vmatprep.subr.mxu0 0.0
    %273 = vmatpush1.msra.mxu0 0.0
    %274 = vmatprep.subr.mxu0 0.0
    %275 = vmatpush1.msra.mxu0 0.0
    %276 = vmatprep.subr.mxu0 0.0
    %277 = vmatpush1.msra.mxu0 0.0
    %278 = vmatprep.subr.mxu0 0.0
    %279 = vmatpush1.msra.mxu0 0.0
    %280 = vmatprep.subr.mxu0 0.0
    %281 = vmatpush1.msra.mxu0 0.0
    %282 = vmatprep.subr.mxu0 0.0
    %283 = vmatpush1.msra.mxu0 0.0
    %284 = vmatprep.subr.mxu0 0.0
    %285 = vmatpush1.msra.mxu0 0.0
    %286 = vmatprep.subr.mxu0 0.0
    %287 = vmatpush1.msra.mxu0 0.0
    %288 = vmatprep.subr.mxu0 0.0
    %289 = vmatpush1.msra.mxu0 0.0
    %290 = vmatprep.subr.mxu0 0.0
    %291 = vmatpush1.msra.mxu0 0.0
    %292 = vmatprep.subr.mxu0 0.0
    %293 = vmatpush1.msra.mxu0 0.0
    %294 = vmatprep.subr.mxu0 0.0
    %295 = vmatpush1.msra.mxu0 0.0
    %296 = vmatprep.subr.mxu0 0.0
    %297 = vmatpush1.msra.mxu0 0.0
    %298 = vmatprep.subr.mxu0 0.0
    %299 = vmatpush1.msra.mxu0 0.0
    %300 = vmatprep.subr.mxu0 0.0
    %301 = vmatpush1.msra.mxu0 0.0
    %302 = vmatprep.subr.mxu0 0.0
    %303 = vmatpush1.msra.mxu0 0.0
    %304 = vmatprep.subr.mxu0 0.0
    %305 = vmatpush1.msra.mxu0 0.0
    %306 = vmatprep.subr.mxu0 0.0
    %307 = vmatpush1.msra.mxu0 0.0
    %308 = vmatprep.subr.mxu0 0.0
    %309 = vmatpush1.msra.mxu0 0.0
    %310 = vmatprep.subr.mxu0 0.0
    %311 = vmatpush1.msra.mxu0 0.0
    %312 = vmatprep.subr.mxu0 0.0
    %313 = vmatpush1.msra.mxu0 0.0
    %314 = vmatprep.subr.mxu0 0.0
    %315 = vmatpush1.msra.mxu0 0.0
    %316 = vmatprep.subr.mxu0 0.0
    %317 = vmatpush1.msra.mxu0 0.0
    %318 = vmatprep.mubr.f32.mxu0 0.0
    %319 = vmatmul.mubr.f32.gmra.mrb[0].mxu0 %v249
    %v320 = vpop.f32.mrb[0].mxu0
    %v321 = vadd.f32 0.0, %v320
    %v322 = vpop.f32.mrb[0].mxu0
    %323 = vmatprep.mubr.f32.mxu0 0.0
    %324 = vmatmul.mubr.f32.gmra.mrb[0].mxu0 %v252
    %v325 = vpop.f32.mrb[0].mxu0
    %v326 = vadd.f32 0.0, %v325
    %v327 = vpop.f32.mrb[0].mxu0
    %328 = vdwg.mxu0
    %329 = vxpose.xlu0.b32.start [1/16] %v212, 128
    %330 = vxpose.xlu0.b32.cont [2/16] 0.0, 128
    %331 = vxpose.xlu0.b32.cont [3/16] 0.0, 128
    %332 = vxpose.xlu0.b32.cont [4/16] 0.0, 128
    %333 = vxpose.xlu0.b32.cont [5/16] 0.0, 128
    %334 = vxpose.xlu0.b32.cont [6/16] 0.0, 128
    %335 = vxpose.xlu0.b32.cont [7/16] 0.0, 128
    %336 = vxpose.xlu0.b32.cont [8/16] 0.0, 128
    %337 = vxpose.xlu0.b32.cont [9/16] 0.0, 128
    %338 = vxpose.xlu0.b32.cont [10/16] 0.0, 128
    %339 = vxpose.xlu0.b32.cont [11/16] 0.0, 128
    %340 = vxpose.xlu0.b32.cont [12/16] 0.0, 128
    %341 = vxpose.xlu0.b32.cont [13/16] 0.0, 128
    %342 = vxpose.xlu0.b32.cont [14/16] 0.0, 128
    %343 = vxpose.xlu0.b32.cont [15/16] 0.0, 128
    %344 = vxpose.xlu0.b32.end [16/16] 0.0, 128
    %v345 = vpop.trf.xlu0
    %v346 = vpop.trf.xlu0
    %v347 = vpop.trf.xlu0
    %v348 = vpop.trf.xlu0
    %v349 = vpop.trf.xlu0
    %v350 = vpop.trf.xlu0
    %v351 = vpop.trf.xlu0
    %v352 = vpop.trf.xlu0
    %v353 = vpop.trf.xlu0
    %v354 = vpop.trf.xlu0
    %v355 = vpop.trf.xlu0
    %v356 = vpop.trf.xlu0
    %v357 = vpop.trf.xlu0
    %v358 = vpop.trf.xlu0
    %v359 = vpop.trf.xlu0
    %v360 = vpop.trf.xlu0
    %v362 = vsel %vm247, %v345, 0
    %v365 = vsel %vm247, %v346, 0
    %367 = vmatprep.subr.mxu0 0.0
    %368 = vmatpush1.msra.mxu0 %v33
    %369 = vmatprep.subr.mxu0 0.0
    %370 = vmatpush1.msra.mxu0 0.0
    %371 = vmatprep.subr.mxu0 0.0
    %372 = vmatpush1.msra.mxu0 0.0
    %373 = vmatprep.subr.mxu0 0.0
    %374 = vmatpush1.msra.mxu0 0.0
    %375 = vmatprep.subr.mxu0 0.0
    %376 = vmatpush1.msra.mxu0 0.0
    %377 = vmatprep.subr.mxu0 0.0
    %378 = vmatpush1.msra.mxu0 0.0
    %379 = vmatprep.subr.mxu0 0.0
    %380 = vmatpush1.msra.mxu0 0.0
    %381 = vmatprep.subr.mxu0 0.0
    %382 = vmatpush1.msra.mxu0 0.0
    %383 = vmatprep.subr.mxu0 0.0
    %384 = vmatpush1.msra.mxu0 0.0
    %385 = vmatprep.subr.mxu0 0.0
    %386 = vmatpush1.msra.mxu0 0.0
    %387 = vmatprep.subr.mxu0 0.0
    %388 = vmatpush1.msra.mxu0 0.0
    %389 = vmatprep.subr.mxu0 0.0
    %390 = vmatpush1.msra.mxu0 0.0
    %391 = vmatprep.subr.mxu0 0.0
    %392 = vmatpush1.msra.mxu0 0.0
    %393 = vmatprep.subr.mxu0 0.0
    %394 = vmatpush1.msra.mxu0 0.0
    %395 = vmatprep.subr.mxu0 0.0
    %396 = vmatpush1.msra.mxu0 0.0
    %397 = vmatprep.subr.mxu0 0.0
    %398 = vmatpush1.msra.mxu0 0.0
    %399 = vmatprep.subr.mxu0 0.0
    %400 = vmatpush1.msra.mxu0 0.0
    %401 = vmatprep.subr.mxu0 0.0
    %402 = vmatpush1.msra.mxu0 0.0
    %403 = vmatprep.subr.mxu0 0.0
    %404 = vmatpush1.msra.mxu0 0.0
    %405 = vmatprep.subr.mxu0 0.0
    %406 = vmatpush1.msra.mxu0 0.0
    %407 = vmatprep.subr.mxu0 0.0
    %408 = vmatpush1.msra.mxu0 0.0
    %409 = vmatprep.subr.mxu0 0.0
    %410 = vmatpush1.msra.mxu0 0.0
    %411 = vmatprep.subr.mxu0 0.0
    %412 = vmatpush1.msra.mxu0 0.0
    %413 = vmatprep.subr.mxu0 0.0
    %414 = vmatpush1.msra.mxu0 0.0
    %415 = vmatprep.subr.mxu0 0.0
    %416 = vmatpush1.msra.mxu0 0.0
    %417 = vmatprep.subr.mxu0 0.0
    %418 = vmatpush1.msra.mxu0 0.0
    %419 = vmatprep.subr.mxu0 0.0
    %420 = vmatpush1.msra.mxu0 0.0
    %421 = vmatprep.subr.mxu0 0.0
    %422 = vmatpush1.msra.mxu0 0.0
    %423 = vmatprep.subr.mxu0 0.0
    %424 = vmatpush1.msra.mxu0 0.0
    %425 = vmatprep.subr.mxu0 0.0
    %426 = vmatpush1.msra.mxu0 0.0
    %427 = vmatprep.subr.mxu0 0.0
    %428 = vmatpush1.msra.mxu0 0.0
    %429 = vmatprep.subr.mxu0 0.0
    %430 = vmatpush1.msra.mxu0 0.0
    %431 = vmatprep.mubr.f32.mxu0 0.0
    %432 = vmatmul.mubr.f32.gmra.mrb[0].mxu0 %v362
    %v433 = vpop.f32.mrb[0].mxu0
    %v434 = vadd.f32 0.0, %v433
    %v435 = vpop.f32.mrb[0].mxu0
    %436 = vmatprep.mubr.f32.mxu0 0.0
    %437 = vmatmul.mubr.f32.gmra.mrb[0].mxu0 %v365
    %v438 = vpop.f32.mrb[0].mxu0
    %v439 = vadd.f32 0.0, %v438
    %v440 = vpop.f32.mrb[0].mxu0
    %441 = vdwg.mxu0
    %v442 = vld [vmem:[%s3] sm:$0x1]
    %v444 = vlaneseq
    %v445 = vshrl.u32 %v444, 7
    %v446 = vsub.s32 0, %v445
    %v447 = vrot.slane %v442, %v446
    %v449 = vmul.f32 %v321, %v447
    %v450 = vmul.f32 %v434, %v447
    %vm451 = vcmask 1045504
    %v452 = vsel %vm451, %v449, 0.0
    %453 = vadd.xlane.f32.xlu0 %v452
    %v454 = vpop.xlane.xlu0 %453
    %v455 = vsel %vm451, %v450, 0.0
    %456 = vadd.xlane.f32.xlu0 %v455
    %v457 = vpop.xlane.xlu0 %456
    %v458 = vld [vmem:[#allocation2] sm:$0x1]
    %s459 = vtos %v458
    %v460 = vstv %s459
    %v461 = vadd.f32 %v454, %v460
    %v462 = vadd.f32 %v457, %v460
    %v463 = vxor.u32 %v461, 2147483648
    %v464 = vxor.u32 %v462, 2147483648
    %v465 = vmul.f32 %v463, 1.442695
    %v466 = vpow.pop %v465
    %v467 = vmul.f32 %v464, 1.442695
    %v468 = vpow.pop %v467
    %v469 = vadd.f32 %v466, 1.0
    %v470 = vadd.f32 %v468, 1.0
    %v471 = vrcp.pop %v469
    %v472 = vmul.f32 1.0, %v471
    %v473 = vrcp.pop %v470
    %v474 = vmul.f32 1.0, %v473
    %v477 = vlaneseq
    %v478 = vand.u32 %v477, 127
    %v479 = vlaneseq
    %v480 = vshrl.u32 %v479, 7
    %v481 = vsub.s32 %v478, %v480
    %v482 = vrot.slane %v472, %v481
    %v483 = vlaneseq
    %v484 = vshrl.u32 %v483, 7
    %v485 = vsub.s32 %v478, %v484
    %v486 = vrot.slane %v474, %v485
    %vm487 = vcmask 1041409
    %v488 = vsel %vm487, %v486, %v482
    %vm490 = vcmask 41984
    %491 = vst.msk [vmem:[#allocation3] sm:$0x3] %vm490, %v488
    %v492 = vld [vmem:[%s5] sm:$0xff]
    %v493 = vld [vmem:[%s5 + $0x8] sm:$0xff]
    %v494 = vld [vmem:[%s5 + $0x10] sm:$0xff]
    %v495 = vld [vmem:[%s5 + $0x18] sm:$0xff]
    %v496 = vld [vmem:[%s5 + $0x20] sm:$0xff]
    %v497 = vld [vmem:[%s5 + $0x28] sm:$0xff]
    %v498 = vld [vmem:[%s5 + $0x30] sm:$0xff]
    %v499 = vld [vmem:[%s5 + $0x38] sm:$0xff]
    %v500 = vld [vmem:[%s5 + $0x40] sm:$0xff]
    %v501 = vld [vmem:[%s5 + $0x48] sm:$0xff]
    %v502 = vld [vmem:[%s5 + $0x50] sm:$0xff]
    %v503 = vld [vmem:[%s5 + $0x58] sm:$0xff]
    %v504 = vld [vmem:[%s5 + $0x60] sm:$0xff]
    %v505 = vld [vmem:[%s5 + $0x68] sm:$0xff]
    %v506 = vld [vmem:[%s5 + $0x70] sm:$0xff]
    %v507 = vld [vmem:[%s5 + $0x78] sm:$0xff]
    %v508 = vld [vmem:[%s6] sm:$0x1]
    %v510 = vlaneseq
    %v511 = vshrl.u32 %v510, 7
    %v512 = vsub.s32 0, %v511
    %v513 = vrot.slane %v508, %v512
    %v518 = vcombine.high %v321, %v321
    %v520 = vunpack.c.l.s4 1983009808
    %v521 = vunpack.c.0.s8 %v520
    %v522 = vlaneseq
    %v523 = vshrl.u32 %v522, 7
    %v524 = vsub.s32 %v521, %v523
    %v525 = vrot.slane %v518, %v524
    %v526 = vcombine.high %v525, %v525
    %v528 = vunpack.c.l.s4 1983009808
    %v529 = vunpack.c.0.s8 %v528
    %v530 = vlaneseq
    %v531 = vshrl.u32 %v530, 7
    %v532 = vsub.s32 %v529, %v531
    %v533 = vrot.slane %v326, %v532
    %v534 = vcombine.high %v533, %v533
    %v535 = vcombine.high %v434, %v434
    %v537 = vunpack.c.l.s4 1983009808
    %v538 = vunpack.c.0.s8 %v537
    %v539 = vlaneseq
    %v540 = vshrl.u32 %v539, 7
    %v541 = vsub.s32 %v538, %v540
    %v542 = vrot.slane %v535, %v541
    %v543 = vcombine.high %v542, %v542
    %v545 = vunpack.c.l.s4 1983009808
    %v546 = vunpack.c.0.s8 %v545
    %v547 = vlaneseq
    %v548 = vshrl.u32 %v547, 7
    %v549 = vsub.s32 %v546, %v548
    %v550 = vrot.slane %v439, %v549
    %v551 = vcombine.high %v550, %v550
    %v552 = vcombine.high %v513, %v513
    %v554 = vunpack.c.l.s4 1983009808
    %v555 = vunpack.c.0.s8 %v554
    %v556 = vlaneseq
    %v557 = vshrl.u32 %v556, 7
    %v558 = vsub.s32 %v555, %v557
    %v559 = vrot.slane %v513, %v558
    %v561 = vunpack.c.l.s4 1983009808
    %v562 = vunpack.c.0.s8 %v561
    %v563 = vlaneseq
    %v564 = vshrl.u32 %v563, 7
    %v565 = vsub.s32 %v562, %v564
    %v566 = vrot.slane %v552, %v565
    %v567 = vcombine.high %v559, %v559
    %v568 = vcombine.low %v526, %v533
    %v569 = vcombine.low %v534, %v543
    %v571 = vunpack.c.l.s4 1983009808
    %v572 = vunpack.c.0.s8 %v571
    %v573 = vlaneseq
    %v574 = vshrl.u32 %v573, 7
    %v575 = vsub.s32 %v572, %v574
    %v576 = vrot.slane %v568, %v575
    %v578 = vunpack.c.l.s4 1983009808
    %v579 = vunpack.c.0.s8 %v578
    %v580 = vlaneseq
    %v581 = vshrl.u32 %v580, 7
    %v582 = vsub.s32 %v579, %v581
    %v583 = vrot.slane %v569, %v582
    %v584 = vcombine.low %v576, %v583
    %v585 = vcombine.low %v550, %v551
    %v587 = vunpack.c.l.s4 1983009808
    %v588 = vunpack.c.0.s8 %v587
    %v589 = vlaneseq
    %v590 = vshrl.u32 %v589, 7
    %v591 = vsub.s32 %v588, %v590
    %v592 = vrot.slane %v585, %v591
    %v595 = vcombine.low %v559, %v567
    %v596 = vcombine.low %v566, %v559
    %v598 = vunpack.c.l.s4 1983009808
    %v599 = vunpack.c.0.s8 %v598
    %v600 = vlaneseq
    %v601 = vshrl.u32 %v600, 7
    %v602 = vsub.s32 %v599, %v601
    %v603 = vrot.slane %v595, %v602
    %v605 = vunpack.c.l.s4 1983009808
    %v606 = vunpack.c.0.s8 %v605
    %v607 = vlaneseq
    %v608 = vshrl.u32 %v607, 7
    %v609 = vsub.s32 %v606, %v608
    %v610 = vrot.slane %v596, %v609
    %v611 = vcombine.low %v603, %v610
    %v612 = vcombine.low %v567, %v566
    %v614 = vunpack.c.l.s4 1983009808
    %v615 = vunpack.c.0.s8 %v614
    %v616 = vlaneseq
    %v617 = vshrl.u32 %v616, 7
    %v618 = vsub.s32 %v615, %v617
    %v619 = vrot.slane %v612, %v618
    %622 = vmatprep.subr.mxu0 0.0
    %623 = vmatpush1.msra.mxu0 %v492
    %624 = vmatprep.subr.mxu0 0.0
    %625 = vmatpush1.msra.mxu0 %v493
    %626 = vmatprep.subr.mxu0 0.0
    %627 = vmatpush1.msra.mxu0 %v494
    %628 = vmatprep.subr.mxu0 0.0
    %629 = vmatpush1.msra.mxu0 %v495
    %630 = vmatprep.subr.mxu0 0.0
    %631 = vmatpush1.msra.mxu0 %v496
    %632 = vmatprep.subr.mxu0 0.0
    %633 = vmatpush1.msra.mxu0 %v497
    %634 = vmatprep.subr.mxu0 0.0
    %635 = vmatpush1.msra.mxu0 %v498
    %636 = vmatprep.subr.mxu0 0.0
    %637 = vmatpush1.msra.mxu0 %v499
    %638 = vmatprep.subr.mxu0 0.0
    %639 = vmatpush1.msra.mxu0 %v500
    %640 = vmatprep.subr.mxu0 0.0
    %641 = vmatpush1.msra.mxu0 %v501
    %642 = vmatprep.subr.mxu0 0.0
    %643 = vmatpush1.msra.mxu0 %v502
    %644 = vmatprep.subr.mxu0 0.0
    %645 = vmatpush1.msra.mxu0 %v503
    %646 = vmatprep.subr.mxu0 0.0
    %647 = vmatpush1.msra.mxu0 %v504
    %648 = vmatprep.subr.mxu0 0.0
    %649 = vmatpush1.msra.mxu0 %v505
    %650 = vmatprep.subr.mxu0 0.0
    %651 = vmatpush1.msra.mxu0 %v506
    %652 = vmatprep.subr.mxu0 0.0
    %653 = vmatpush1.msra.mxu0 %v507
    %654 = vmatprep.subr.mxu0 0.0
    %655 = vmatpush1.msra.mxu0 0.0
    %656 = vmatprep.subr.mxu0 0.0
    %657 = vmatpush1.msra.mxu0 0.0
    %658 = vmatprep.subr.mxu0 0.0
    %659 = vmatpush1.msra.mxu0 0.0
    %660 = vmatprep.subr.mxu0 0.0
    %661 = vmatpush1.msra.mxu0 0.0
    %662 = vmatprep.subr.mxu0 0.0
    %663 = vmatpush1.msra.mxu0 0.0
    %664 = vmatprep.subr.mxu0 0.0
    %665 = vmatpush1.msra.mxu0 0.0
    %666 = vmatprep.subr.mxu0 0.0
    %667 = vmatpush1.msra.mxu0 0.0
    %668 = vmatprep.subr.mxu0 0.0
    %669 = vmatpush1.msra.mxu0 0.0
    %670 = vmatprep.subr.mxu0 0.0
    %671 = vmatpush1.msra.mxu0 0.0
    %672 = vmatprep.subr.mxu0 0.0
    %673 = vmatpush1.msra.mxu0 0.0
    %674 = vmatprep.subr.mxu0 0.0
    %675 = vmatpush1.msra.mxu0 0.0
    %676 = vmatprep.subr.mxu0 0.0
    %677 = vmatpush1.msra.mxu0 0.0
    %678 = vmatprep.subr.mxu0 0.0
    %679 = vmatpush1.msra.mxu0 0.0
    %680 = vmatprep.subr.mxu0 0.0
    %681 = vmatpush1.msra.mxu0 0.0
    %682 = vmatprep.subr.mxu0 0.0
    %683 = vmatpush1.msra.mxu0 0.0
    %684 = vmatprep.subr.mxu0 0.0
    %685 = vmatpush1.msra.mxu0 0.0
    %686 = vmatprep.mubr.f32.mxu0 0.0
    %687 = vmatmul.mubr.f32.gmra.mrb[0].mxu0 %v584
    %v688 = vpop.f32.mrb[0].mxu0
    %v689 = vadd.f32 %v611, %v688
    %v690 = vpop.f32.mrb[0].mxu0
    %691 = vmatprep.mubr.f32.mxu0 0.0
    %692 = vmatmul.mubr.f32.gmra.mrb[0].mxu0 %v592
    %v693 = vpop.f32.mrb[0].mxu0
    %v694 = vadd.f32 %v619, %v693
    %v695 = vpop.f32.mrb[0].mxu0
    %696 = vdwg.mxu0
    %v699 = vcombine.high %v689, %v689
    %v701 = vunpack.c.l.s4 1983009808
    %v702 = vunpack.c.0.s8 %v701
    %v703 = vlaneseq
    %v704 = vshrl.u32 %v703, 7
    %v705 = vsub.s32 %v702, %v704
    %v706 = vrot.slane %v689, %v705
    %v708 = vunpack.c.l.s4 1983009808
    %v709 = vunpack.c.0.s8 %v708
    %v710 = vlaneseq
    %v711 = vshrl.u32 %v710, 7
    %v712 = vsub.s32 %v709, %v711
    %v713 = vrot.slane %v699, %v712
    %v714 = vcombine.high %v706, %v706
    %v715 = vcombine.high %v713, %v713
    %v717 = vunpack.c.l.s4 1983009808
    %v718 = vunpack.c.0.s8 %v717
    %v719 = vlaneseq
    %v720 = vshrl.u32 %v719, 7
    %v721 = vsub.s32 %v718, %v720
    %v722 = vrot.slane %v694, %v721
    %v723 = vcombine.high %v722, %v722
    %v730 = vcombine.low %v706, %v714
    %v732 = vunpack.c.l.s4 1983009808
    %v733 = vunpack.c.0.s8 %v732
    %v734 = vlaneseq
    %v735 = vshrl.u32 %v734, 7
    %v736 = vsub.s32 %v733, %v735
    %v737 = vrot.slane %v730, %v736
    %v739 = vunpack.c.l.s4 1983009808
    %v740 = vunpack.c.0.s8 %v739
    %v741 = vlaneseq
    %v742 = vshrl.u32 %v741, 7
    %v743 = vsub.s32 %v740, %v742
    %v744 = vrot.slane %v713, %v743
    %v745 = vcombine.low %v737, %v744
    %v746 = vcombine.low %v715, %v722
    %v748 = vunpack.c.l.s4 1983009808
    %v749 = vunpack.c.0.s8 %v748
    %v750 = vlaneseq
    %v751 = vshrl.u32 %v750, 7
    %v752 = vsub.s32 %v749, %v751
    %v753 = vrot.slane %v746, %v752
    %v755 = vunpack.c.l.s4 1983009808
    %v756 = vunpack.c.0.s8 %v755
    %v757 = vlaneseq
    %v758 = vshrl.u32 %v757, 7
    %v759 = vsub.s32 %v756, %v758
    %v760 = vrot.slane %v723, %v759
    %v761 = vcombine.low %v753, %v760
    %vm764 = vcmask 21504
    %v765 = vsel %vm764, %v745, -inf
    %766 = vmax.xlane.f32.xlu0 %v765
    %v767 = vpop.xlane.xlu0 %766
    %v768 = vsel %vm764, %v761, -inf
    %769 = vmax.xlane.f32.xlu0 %v768
    %v770 = vpop.xlane.xlu0 %769
    %v774 = vunpack.c.l.s4 269488144
    %v775 = vunpack.c.0.s8 %v774
    %v776 = vlaneseq
    %v777 = vshrl.u32 %v776, 7
    %v778 = vsub.s32 %v775, %v777
    %v779 = vrot.slane %v767, %v778
    %v781 = vunpack.c.l.s4 842150450
    %v782 = vunpack.c.0.s8 %v781
    %v783 = vlaneseq
    %v784 = vshrl.u32 %v783, 7
    %v785 = vsub.s32 %v782, %v784
    %v786 = vrot.slane %v767, %v785
    %v788 = vunpack.c.l.s4 1414812756
    %v789 = vunpack.c.0.s8 %v788
    %v790 = vlaneseq
    %v791 = vshrl.u32 %v790, 7
    %v792 = vsub.s32 %v789, %v791
    %v793 = vrot.slane %v767, %v792
    %v795 = vunpack.c.l.s4 269488144
    %v796 = vunpack.c.0.s8 %v795
    %v797 = vlaneseq
    %v798 = vshrl.u32 %v797, 7
    %v799 = vsub.s32 %v796, %v798
    %v800 = vrot.slane %v770, %v799
    %v802 = vunpack.c.l.s4 842150450
    %v803 = vunpack.c.0.s8 %v802
    %v804 = vlaneseq
    %v805 = vshrl.u32 %v804, 7
    %v806 = vsub.s32 %v803, %v805
    %v807 = vrot.slane %v770, %v806
    %v809 = vunpack.c.l.s4 1414812756
    %v810 = vunpack.c.0.s8 %v809
    %v811 = vlaneseq
    %v812 = vshrl.u32 %v811, 7
    %v813 = vsub.s32 %v810, %v812
    %v814 = vrot.slane %v770, %v813
    %v821 = vsub.f32 %v706, %v779
    %v822 = vsub.f32 %v714, %v786
    %v823 = vsub.f32 %v713, %v793
    %v824 = vsub.f32 %v715, %v800
    %v825 = vsub.f32 %v722, %v807
    %v826 = vsub.f32 %v723, %v814
    %v827 = vmul.f32 %v821, 1.442695
    %v828 = vpow.pop %v827
    %v829 = vmul.f32 %v822, 1.442695
    %v830 = vpow.pop %v829
    %v831 = vmul.f32 %v823, 1.442695
    %v832 = vpow.pop %v831
    %v833 = vmul.f32 %v824, 1.442695
    %v834 = vpow.pop %v833
    %v835 = vmul.f32 %v825, 1.442695
    %v836 = vpow.pop %v835
    %v837 = vmul.f32 %v826, 1.442695
    %v838 = vpow.pop %v837
    %v845 = vcombine.low %v828, %v830
    %v847 = vunpack.c.l.s4 1983009808
    %v848 = vunpack.c.0.s8 %v847
    %v849 = vlaneseq
    %v850 = vshrl.u32 %v849, 7
    %v851 = vsub.s32 %v848, %v850
    %v852 = vrot.slane %v845, %v851
    %v854 = vunpack.c.l.s4 1983009808
    %v855 = vunpack.c.0.s8 %v854
    %v856 = vlaneseq
    %v857 = vshrl.u32 %v856, 7
    %v858 = vsub.s32 %v855, %v857
    %v859 = vrot.slane %v832, %v858
    %v860 = vcombine.low %v852, %v859
    %v861 = vcombine.low %v834, %v836
    %v863 = vunpack.c.l.s4 1983009808
    %v864 = vunpack.c.0.s8 %v863
    %v865 = vlaneseq
    %v866 = vshrl.u32 %v865, 7
    %v867 = vsub.s32 %v864, %v866
    %v868 = vrot.slane %v861, %v867
    %v870 = vunpack.c.l.s4 1983009808
    %v871 = vunpack.c.0.s8 %v870
    %v872 = vlaneseq
    %v873 = vshrl.u32 %v872, 7
    %v874 = vsub.s32 %v871, %v873
    %v875 = vrot.slane %v838, %v874
    %v876 = vcombine.low %v868, %v875
    %v879 = vsel %vm764, %v860, 0.0
    %880 = vadd.xlane.f32.xlu0 %v879
    %v881 = vpop.xlane.xlu0 %880
    %v882 = vsel %vm764, %v876, 0.0
    %883 = vadd.xlane.f32.xlu0 %v882
    %v884 = vpop.xlane.xlu0 %883
    %v888 = vunpack.c.l.s4 269488144
    %v889 = vunpack.c.0.s8 %v888
    %v890 = vlaneseq
    %v891 = vshrl.u32 %v890, 7
    %v892 = vsub.s32 %v889, %v891
    %v893 = vrot.slane %v881, %v892
    %v895 = vunpack.c.l.s4 842150450
    %v896 = vunpack.c.0.s8 %v895
    %v897 = vlaneseq
    %v898 = vshrl.u32 %v897, 7
    %v899 = vsub.s32 %v896, %v898
    %v900 = vrot.slane %v881, %v899
    %v902 = vunpack.c.l.s4 1414812756
    %v903 = vunpack.c.0.s8 %v902
    %v904 = vlaneseq
    %v905 = vshrl.u32 %v904, 7
    %v906 = vsub.s32 %v903, %v905
    %v907 = vrot.slane %v881, %v906
    %v909 = vunpack.c.l.s4 269488144
    %v910 = vunpack.c.0.s8 %v909
    %v911 = vlaneseq
    %v912 = vshrl.u32 %v911, 7
    %v913 = vsub.s32 %v910, %v912
    %v914 = vrot.slane %v884, %v913
    %v916 = vunpack.c.l.s4 842150450
    %v917 = vunpack.c.0.s8 %v916
    %v918 = vlaneseq
    %v919 = vshrl.u32 %v918, 7
    %v920 = vsub.s32 %v917, %v919
    %v921 = vrot.slane %v884, %v920
    %v923 = vunpack.c.l.s4 1414812756
    %v924 = vunpack.c.0.s8 %v923
    %v925 = vlaneseq
    %v926 = vshrl.u32 %v925, 7
    %v927 = vsub.s32 %v924, %v926
    %v928 = vrot.slane %v884, %v927
    %v935 = vrcp.pop %v893
    %v936 = vmul.f32 %v828, %v935
    %v937 = vrcp.pop %v900
    %v938 = vmul.f32 %v830, %v937
    %v939 = vrcp.pop %v907
    %v940 = vmul.f32 %v832, %v939
    %v941 = vrcp.pop %v914
    %v942 = vmul.f32 %v834, %v941
    %v943 = vrcp.pop %v921
    %v944 = vmul.f32 %v836, %v943
    %v945 = vrcp.pop %v928
    %v946 = vmul.f32 %v838, %v945
    %v953 = vcombine.low %v936, %v938
    %v955 = vunpack.c.l.s4 1983009808
    %v956 = vunpack.c.0.s8 %v955
    %v957 = vlaneseq
    %v958 = vshrl.u32 %v957, 7
    %v959 = vsub.s32 %v956, %v958
    %v960 = vrot.slane %v953, %v959
    %v962 = vunpack.c.l.s4 1983009808
    %v963 = vunpack.c.0.s8 %v962
    %v964 = vlaneseq
    %v965 = vshrl.u32 %v964, 7
    %v966 = vsub.s32 %v963, %v965
    %v967 = vrot.slane %v940, %v966
    %v968 = vcombine.low %v960, %v967
    %v969 = vcombine.low %v942, %v944
    %v971 = vunpack.c.l.s4 1983009808
    %v972 = vunpack.c.0.s8 %v971
    %v973 = vlaneseq
    %v974 = vshrl.u32 %v973, 7
    %v975 = vsub.s32 %v972, %v974
    %v976 = vrot.slane %v969, %v975
    %v978 = vunpack.c.l.s4 1983009808
    %v979 = vunpack.c.0.s8 %v978
    %v980 = vlaneseq
    %v981 = vshrl.u32 %v980, 7
    %v982 = vsub.s32 %v979, %v981
    %v983 = vrot.slane %v946, %v982
    %v984 = vcombine.low %v976, %v983
    %987 = vst.msk [vmem:[%s8] sm:$0x3f] %vm764, %v968
    %988 = vst.msk [vmem:[%s8 + $0x8] sm:$0x3f] %vm764, %v984
    // Predicated region
    $region30: #{aspect_capsule_forward.3} parent=1 // pred_check
      _
    $region31: #{aspect_capsule_forward.3} parent=1 // pred_check_branch
      %990 = sbr.rel (0) target = $region33
    $region32: #{aspect_capsule_forward.3} parent=1 // pred_region
      %s992 = ssub.s32 32, 32
      %993 = vsyncadd [#allocation4], %s992
      %s995 = sshll.u32 [#allocation3], 4
      %s996 = int_to_ptr.vmem [resolvable:$true] %s995
      %998 = dma.vmem_to_hbm [thread:$0]  %s996, 32, %s7, [#allocation4]
    $region33: #{aspect_capsule_forward.3} parent=1 // pred_fallthru
      _
    // Predicated region
    $region34: #{aspect_capsule_forward.3} parent=1 // pred_check
      _
    $region35: #{aspect_capsule_forward.3} parent=1 // pred_check_branch
      %1000 = sbr.rel (0) target = $region37
    $region36: #{aspect_capsule_forward.3} parent=1 // pred_region
      _
    $region37: #{aspect_capsule_forward.3} parent=1 // pred_fallthru
      _
    // Predicated region
    $region38: #{aspect_capsule_forward.3} parent=1 // pred_check
      _
    $region39: #{aspect_capsule_forward.3} parent=1 // pred_check_branch
      %1002 = sbr.rel (0) target = $region41
    $region40: #{aspect_capsule_forward.3} parent=1 // pred_region
      _
    $region41: #{aspect_capsule_forward.3} parent=1 // pred_fallthru
      _
    // Predicated region
    $region42: #{aspect_capsule_forward.3} parent=1 // pred_check
      _
    $region43: #{aspect_capsule_forward.3} parent=1 // pred_check_branch
      %1004 = sbr.rel (0) target = $region45
    $region44: #{aspect_capsule_forward.3} parent=1 // pred_region
      %1005 = dma.done [#allocation4], 32
    $region45: #{aspect_capsule_forward.3} parent=1 // pred_fallthru
      _
    // Predicated region
    $region46: #{aspect_capsule_forward.3} parent=1 // pred_check
      _
    $region47: #{aspect_capsule_forward.3} parent=1 // pred_check_branch
      %1007 = sbr.rel (0) target = $region49
    $region48: #{aspect_capsule_forward.3} parent=1 // pred_region
      _
    $region49: #{aspect_capsule_forward.3} parent=1 // pred_fallthru
      _
    // Predicated region
    $region50: #{aspect_capsule_forward.3} parent=1 // pred_check
      _
    $region51: #{aspect_capsule_forward.3} parent=1 // pred_check_branch
      %1009 = sbr.rel (0) target = $region53
    $region52: #{aspect_capsule_forward.3} parent=1 // pred_region
      _
    $region53: #{aspect_capsule_forward.3} parent=1 // pred_fallthru
      _
    %1010 = vsyncpa [#allocation4], 1

// kernel: aspect_capsule_forward.2
$region0: #{aspect_capsule_forward.2}
  #allocation0 [shape = 'u32[]', space=smem, size = 0x4, offset = 0x4, fixed_abs, tag = 'smem constant byte address 0x4 - core index']
  #allocation1 [shape = 'u32[144,128]{1,0:T(1,128)}', space=vmem, size = 0x12000, scoped, tag = 'internal scratch']
  #allocation2 [shape = 'f32[2,128]{1,0:T(2,128)}', space=vmem, size = 0x400, scoped, tag = 'scratch operand']
  %s0 = inlined_call_operand.vmem [shape: f32[8,2,384], index: 0, kind: input, shape index: {}]
  %s1 = inlined_call_operand.vmem [shape: s32[2,128], index: 1, kind: input, shape index: {}]
  %s2 = inlined_call_operand.vmem [shape: f32[128,384], index: 2, kind: input, shape index: {}]
  %s3 = inlined_call_operand.vmem [shape: f32[1,384], index: 3, kind: input, shape index: {}]
  %s4 = inlined_call_operand.vmem [shape: f32[8,2,128], index: 4, kind: output, shape index: {}]
  %s5 = sld [smem:[#allocation0]]
  $region30: #{aspect_capsule_forward.2} parent=0
    _
  %s7 = ssub.s32 1, %s5
  %s8 = scalar_select 0, %s7, %s5
  // Predicated region
  $region2: #{aspect_capsule_forward.2} parent=0 // pred_check
    _
  $region3: #{aspect_capsule_forward.2} parent=0 // pred_check_branch
    %10 = sbr.rel (0) target = $region5
  $region4: #{aspect_capsule_forward.2} parent=0 // pred_region
    _
  $region5: #{aspect_capsule_forward.2} parent=0 // pred_fallthru
    _
  // Predicated region
  $region6: #{aspect_capsule_forward.2} parent=0 // pred_check
    _
  $region7: #{aspect_capsule_forward.2} parent=0 // pred_check_branch
    %12 = sbr.rel (0) target = $region9
  $region8: #{aspect_capsule_forward.2} parent=0 // pred_region
    _
  $region9: #{aspect_capsule_forward.2} parent=0 // pred_fallthru
    _
  // Predicated region
  $region10: #{aspect_capsule_forward.2} parent=0 // pred_check
    _
  $region11: #{aspect_capsule_forward.2} parent=0 // pred_check_branch
    %14 = sbr.rel (0) target = $region13
  $region12: #{aspect_capsule_forward.2} parent=0 // pred_region
    _
  $region13: #{aspect_capsule_forward.2} parent=0 // pred_fallthru
    _
  // Predicated region
  $region14: #{aspect_capsule_forward.2} parent=0 // pred_check
    _
  $region15: #{aspect_capsule_forward.2} parent=0 // pred_check_branch
    %16 = sbr.rel (0) target = $region17
  $region16: #{aspect_capsule_forward.2} parent=0 // pred_region
    _
  $region17: #{aspect_capsule_forward.2} parent=0 // pred_fallthru
    _
  %p17 = scmp.eq.s32.totalorder 0, 0
  // Predicated region
  $region18: #{aspect_capsule_forward.2} parent=0 // pred_check
    %p18 = pneg %p17
  $region19: #{aspect_capsule_forward.2} parent=0 // pred_check_branch
    %20 = sbr.rel (%p18) target = $region21
  $region20: #{aspect_capsule_forward.2} parent=0 // pred_region
    %21 = vst [vmem:[#allocation2] sm:$0x3] 0.0
  $region21: #{aspect_capsule_forward.2} parent=0 // pred_fallthru
    _
  %v22 = vld [vmem:[%s1] sm:$0x3]
  %v23 = vld [vmem:[%s2] sm:$0xff]
  %v24 = vld [vmem:[%s2 + $0x8] sm:$0xff]
  %v25 = vld [vmem:[%s2 + $0x10] sm:$0xff]
  %v26 = vld [vmem:[%s2 + $0x18] sm:$0xff]
  %v27 = vld [vmem:[%s2 + $0x20] sm:$0xff]
  %v28 = vld [vmem:[%s2 + $0x28] sm:$0xff]
  %v29 = vld [vmem:[%s2 + $0x30] sm:$0xff]
  %v30 = vld [vmem:[%s2 + $0x38] sm:$0xff]
  %v31 = vld [vmem:[%s2 + $0x40] sm:$0xff]
  %v32 = vld [vmem:[%s2 + $0x48] sm:$0xff]
  %v33 = vld [vmem:[%s2 + $0x50] sm:$0xff]
  %v34 = vld [vmem:[%s2 + $0x58] sm:$0xff]
  %v35 = vld [vmem:[%s2 + $0x60] sm:$0xff]
  %v36 = vld [vmem:[%s2 + $0x68] sm:$0xff]
  %v37 = vld [vmem:[%s2 + $0x70] sm:$0xff]
  %v38 = vld [vmem:[%s2 + $0x78] sm:$0xff]
  %v39 = vld [vmem:[%s2 + $0x80] sm:$0xff]
  %v40 = vld [vmem:[%s2 + $0x88] sm:$0xff]
  %v41 = vld [vmem:[%s2 + $0x90] sm:$0xff]
  %v42 = vld [vmem:[%s2 + $0x98] sm:$0xff]
  %v43 = vld [vmem:[%s2 + $0xa0] sm:$0xff]
  %v44 = vld [vmem:[%s2 + $0xa8] sm:$0xff]
  %v45 = vld [vmem:[%s2 + $0xb0] sm:$0xff]
  %v46 = vld [vmem:[%s2 + $0xb8] sm:$0xff]
  %v47 = vld [vmem:[%s2 + $0xc0] sm:$0xff]
  %v48 = vld [vmem:[%s2 + $0xc8] sm:$0xff]
  %v49 = vld [vmem:[%s2 + $0xd0] sm:$0xff]
  %v50 = vld [vmem:[%s2 + $0xd8] sm:$0xff]
  %v51 = vld [vmem:[%s2 + $0xe0] sm:$0xff]
  %v52 = vld [vmem:[%s2 + $0xe8] sm:$0xff]
  %v53 = vld [vmem:[%s2 + $0xf0] sm:$0xff]
  %v54 = vld [vmem:[%s2 + $0xf8] sm:$0xff]
  %v55 = vld [vmem:[%s2 + $0x100] sm:$0xff]
  %v56 = vld [vmem:[%s2 + $0x108] sm:$0xff]
  %v57 = vld [vmem:[%s2 + $0x110] sm:$0xff]
  %v58 = vld [vmem:[%s2 + $0x118] sm:$0xff]
  %v59 = vld [vmem:[%s2 + $0x120] sm:$0xff]
  %v60 = vld [vmem:[%s2 + $0x128] sm:$0xff]
  %v61 = vld [vmem:[%s2 + $0x130] sm:$0xff]
  %v62 = vld [vmem:[%s2 + $0x138] sm:$0xff]
  %v63 = vld [vmem:[%s2 + $0x140] sm:$0xff]
  %v64 = vld [vmem:[%s2 + $0x148] sm:$0xff]
  %v65 = vld [vmem:[%s2 + $0x150] sm:$0xff]
  %v66 = vld [vmem:[%s2 + $0x158] sm:$0xff]
  %v67 = vld [vmem:[%s2 + $0x160] sm:$0xff]
  %v68 = vld [vmem:[%s2 + $0x168] sm:$0xff]
  %v69 = vld [vmem:[%s2 + $0x170] sm:$0xff]
  %v70 = vld [vmem:[%s2 + $0x178] sm:$0xff]
  %v71 = vld [vmem:[%s3] sm:$0x7]
  %v72 = vld [vmem:[#allocation2] sm:$0x3]
  %v73 = vld [vmem:[%s0] sm:$0x3f]
  %v75 = vlaneseq
  %v76 = vshrl.u32 %v75, 7
  %v77 = vsub.s32 0, %v76
  %v78 = vrot.slane %v71, %v77
  %v79 = vlaneseq
  %v80 = vshrl.u32 %v79, 7
  %v81 = vsub.s32 1, %v80
  %v82 = vrot.slane %v71, %v81
  %v83 = vlaneseq
  %v84 = vshrl.u32 %v83, 7
  %v85 = vsub.s32 2, %v84
  %v86 = vrot.slane %v71, %v85
  %90 = vmatprep.subr.mxu0 %v24
  %91 = vmatpush1.msra.mxu0 %v23
  %92 = vmatprep.subr.mxu0 %v27
  %93 = vmatpush1.msra.mxu0 %v26
  %94 = vmatprep.subr.mxu0 %v30
  %95 = vmatpush1.msra.mxu0 %v29
  %96 = vmatprep.subr.mxu0 %v33
  %97 = vmatpush1.msra.mxu0 %v32
  %98 = vmatprep.subr.mxu0 %v36
  %99 = vmatpush1.msra.mxu0 %v35
  %100 = vmatprep.subr.mxu0 %v39
  %101 = vmatpush1.msra.mxu0 %v38
  %102 = vmatprep.subr.mxu0 %v42
  %103 = vmatpush1.msra.mxu0 %v41
  %104 = vmatprep.subr.mxu0 %v45
  %105 = vmatpush1.msra.mxu0 %v44
  %106 = vmatprep.subr.mxu0 %v48
  %107 = vmatpush1.msra.mxu0 %v47
  %108 = vmatprep.subr.mxu0 %v51
  %109 = vmatpush1.msra.mxu0 %v50
  %110 = vmatprep.subr.mxu0 %v54
  %111 = vmatpush1.msra.mxu0 %v53
  %112 = vmatprep.subr.mxu0 %v57
  %113 = vmatpush1.msra.mxu0 %v56
  %114 = vmatprep.subr.mxu0 %v60
  %115 = vmatpush1.msra.mxu0 %v59
  %116 = vmatprep.subr.mxu0 %v63
  %117 = vmatpush1.msra.mxu0 %v62
  %118 = vmatprep.subr.mxu0 %v66
  %119 = vmatpush1.msra.mxu0 %v65
  %120 = vmatprep.subr.mxu0 %v69
  %121 = vmatpush1.msra.mxu0 %v68
  %122 = vmatprep.subr.mxu0 0.0
  %123 = vmatpush1.msra.mxu0 0.0
  %124 = vmatprep.subr.mxu0 0.0
  %125 = vmatpush1.msra.mxu0 0.0
  %126 = vmatprep.subr.mxu0 0.0
  %127 = vmatpush1.msra.mxu0 0.0
  %128 = vmatprep.subr.mxu0 0.0
  %129 = vmatpush1.msra.mxu0 0.0
  %130 = vmatprep.subr.mxu0 0.0
  %131 = vmatpush1.msra.mxu0 0.0
  %132 = vmatprep.subr.mxu0 0.0
  %133 = vmatpush1.msra.mxu0 0.0
  %134 = vmatprep.subr.mxu0 0.0
  %135 = vmatpush1.msra.mxu0 0.0
  %136 = vmatprep.subr.mxu0 0.0
  %137 = vmatpush1.msra.mxu0 0.0
  %138 = vmatprep.subr.mxu0 0.0
  %139 = vmatpush1.msra.mxu0 0.0
  %140 = vmatprep.subr.mxu0 0.0
  %141 = vmatpush1.msra.mxu0 0.0
  %142 = vmatprep.subr.mxu0 0.0
  %143 = vmatpush1.msra.mxu0 0.0
  %144 = vmatprep.subr.mxu0 0.0
  %145 = vmatpush1.msra.mxu0 0.0
  %146 = vmatprep.subr.mxu0 0.0
  %147 = vmatpush1.msra.mxu0 0.0
  %148 = vmatprep.subr.mxu0 0.0
  %149 = vmatpush1.msra.mxu0 0.0
  %150 = vmatprep.subr.mxu0 0.0
  %151 = vmatpush1.msra.mxu0 0.0
  %152 = vmatprep.subr.mxu0 0.0
  %153 = vmatpush1.msra.mxu0 0.0
  %154 = vmatprep.mubr.f32.mxu0 0.0
  %155 = vmatmul.mubr.f32.gmra.mrb[0].mxu0 %v72
  %v156 = vpop.f32.mrb[0].mxu0
  %v157 = vadd.f32 %v78, %v156
  %v158 = vpop.f32.mrb[0].mxu0
  %v159 = vadd.f32 %v82, %v158
  %160 = vdwg.mxu0
  %161 = vmatprep.subr.mxu0 0.0
  %162 = vmatpush1.msra.mxu0 %v25
  %163 = vmatprep.subr.mxu0 0.0
  %164 = vmatpush1.msra.mxu0 %v28
  %165 = vmatprep.subr.mxu0 0.0
  %166 = vmatpush1.msra.mxu0 %v31
  %167 = vmatprep.subr.mxu0 0.0
  %168 = vmatpush1.msra.mxu0 %v34
  %169 = vmatprep.subr.mxu0 0.0
  %170 = vmatpush1.msra.mxu0 %v37
  %171 = vmatprep.subr.mxu0 0.0
  %172 = vmatpush1.msra.mxu0 %v40
  %173 = vmatprep.subr.mxu0 0.0
  %174 = vmatpush1.msra.mxu0 %v43
  %175 = vmatprep.subr.mxu0 0.0
  %176 = vmatpush1.msra.mxu0 %v46
  %177 = vmatprep.subr.mxu0 0.0
  %178 = vmatpush1.msra.mxu0 %v49
  %179 = vmatprep.subr.mxu0 0.0
  %180 = vmatpush1.msra.mxu0 %v52
  %181 = vmatprep.subr.mxu0 0.0
  %182 = vmatpush1.msra.mxu0 %v55
  %183 = vmatprep.subr.mxu0 0.0
  %184 = vmatpush1.msra.mxu0 %v58
  %185 = vmatprep.subr.mxu0 0.0
  %186 = vmatpush1.msra.mxu0 %v61
  %187 = vmatprep.subr.mxu0 0.0
  %188 = vmatpush1.msra.mxu0 %v64
  %189 = vmatprep.subr.mxu0 0.0
  %190 = vmatpush1.msra.mxu0 %v67
  %191 = vmatprep.subr.mxu0 0.0
  %192 = vmatpush1.msra.mxu0 %v70
  %193 = vmatprep.subr.mxu0 0.0
  %194 = vmatpush1.msra.mxu0 0.0
  %195 = vmatprep.subr.mxu0 0.0
  %196 = vmatpush1.msra.mxu0 0.0
  %197 = vmatprep.subr.mxu0 0.0
  %198 = vmatpush1.msra.mxu0 0.0
  %199 = vmatprep.subr.mxu0 0.0
  %200 = vmatpush1.msra.mxu0 0.0
  %201 = vmatprep.subr.mxu0 0.0
  %202 = vmatpush1.msra.mxu0 0.0
  %203 = vmatprep.subr.mxu0 0.0
  %204 = vmatpush1.msra.mxu0 0.0
  %205 = vmatprep.subr.mxu0 0.0
  %206 = vmatpush1.msra.mxu0 0.0
  %207 = vmatprep.subr.mxu0 0.0
  %208 = vmatpush1.msra.mxu0 0.0
  %209 = vmatprep.subr.mxu0 0.0
  %210 = vmatpush1.msra.mxu0 0.0
  %211 = vmatprep.subr.mxu0 0.0
  %212 = vmatpush1.msra.mxu0 0.0
  %213 = vmatprep.subr.mxu0 0.0
  %214 = vmatpush1.msra.mxu0 0.0
  %215 = vmatprep.subr.mxu0 0.0
  %216 = vmatpush1.msra.mxu0 0.0
  %217 = vmatprep.subr.mxu0 0.0
  %218 = vmatpush1.msra.mxu0 0.0
  %219 = vmatprep.subr.mxu0 0.0
  %220 = vmatpush1.msra.mxu0 0.0
  %221 = vmatprep.subr.mxu0 0.0
  %222 = vmatpush1.msra.mxu0 0.0
  %223 = vmatprep.subr.mxu0 0.0
  %224 = vmatpush1.msra.mxu0 0.0
  %225 = vmatprep.mubr.f32.mxu0 0.0
  %226 = vmatmul.mubr.f32.gmra.mrb[0].mxu0 %v72
  %v227 = vpop.f32.mrb[0].mxu0
  %v228 = vadd.f32 %v86, %v227
  %v229 = vpop.f32.mrb[0].mxu0
  %230 = vdwg.mxu0
  %v231 = vadd.f32 %v73, %v157
  %v232 = vxor.u32 %v231, 2147483648
  %v233 = vmul.f32 %v232, 1.442695
  %v234 = vpow.pop %v233
  %v235 = vadd.f32 %v234, 1.0
  %v236 = vrcp.pop %v235
  %v237 = vmul.f32 1.0, %v236
  %v239 = vrot.slane %v73, 2
  %v241 = vadd.f32 %v239, %v159
  %v242 = vxor.u32 %v241, 2147483648
  %v243 = vmul.f32 %v242, 1.442695
  %v244 = vpow.pop %v243
  %v245 = vadd.f32 %v244, 1.0
  %v246 = vrcp.pop %v245
  %v247 = vmul.f32 1.0, %v246
  %v248 = vmul.f32 %v237, %v228
  %v249 = vrot.slane %v73, 4
  %v251 = vadd.f32 %v249, %v248
  %v252 = vtanh.pop %v251
  %v253 = vsub.f32 1.0, %v247
  %v254 = vmul.f32 %v253, %v252
  %v255 = vmul.f32 %v247, %v72
  %v256 = vadd.f32 %v254, %v255
  %s257 = smul.u32 0, 8
  %v258 = vstv %s257
  %vm259 = vcmp.gt.s32.totalorder %v22, %v258
  %v260 = vsel %vm259, %v256, %v72
  %v261 = vsel %vm259, %v256, 0.0
  %262 = vst [vmem:[%s4] sm:$0x3] %v261
  %s263 = scalar_lea.vmem %s0, 6
  %v264 = vld [vmem:[%s263] sm:$0x3f]
  %265 = vmatprep.subr.mxu0 %v24
  %266 = vmatpush1.msra.mxu0 %v23
  %267 = vmatprep.subr.mxu0 %v27
  %268 = vmatpush1.msra.mxu0 %v26
  %269 = vmatprep.subr.mxu0 %v30
  %270 = vmatpush1.msra.mxu0 %v29
  %271 = vmatprep.subr.mxu0 %v33
  %272 = vmatpush1.msra.mxu0 %v32
  %273 = vmatprep.subr.mxu0 %v36
  %274 = vmatpush1.msra.mxu0 %v35
  %275 = vmatprep.subr.mxu0 %v39
  %276 = vmatpush1.msra.mxu0 %v38
  %277 = vmatprep.subr.mxu0 %v42
  %278 = vmatpush1.msra.mxu0 %v41
  %279 = vmatprep.subr.mxu0 %v45
  %280 = vmatpush1.msra.mxu0 %v44
  %281 = vmatprep.subr.mxu0 %v48
  %282 = vmatpush1.msra.mxu0 %v47
  %283 = vmatprep.subr.mxu0 %v51
  %284 = vmatpush1.msra.mxu0 %v50
  %285 = vmatprep.subr.mxu0 %v54
  %286 = vmatpush1.msra.mxu0 %v53
  %287 = vmatprep.subr.mxu0 %v57
  %288 = vmatpush1.msra.mxu0 %v56
  %289 = vmatprep.subr.mxu0 %v60
  %290 = vmatpush1.msra.mxu0 %v59
  %291 = vmatprep.subr.mxu0 %v63
  %292 = vmatpush1.msra.mxu0 %v62
  %293 = vmatprep.subr.mxu0 %v66
  %294 = vmatpush1.msra.mxu0 %v65
  %295 = vmatprep.subr.mxu0 %v69
  %296 = vmatpush1.msra.mxu0 %v68
  %297 = vmatprep.subr.mxu0 0.0
  %298 = vmatpush1.msra.mxu0 0.0
  %299 = vmatprep.subr.mxu0 0.0
  %300 = vmatpush1.msra.mxu0 0.0
  %301 = vmatprep.subr.mxu0 0.0
  %302 = vmatpush1.msra.mxu0 0.0
  %303 = vmatprep.subr.mxu0 0.0
  %304 = vmatpush1.msra.mxu0 0.0
  %305 = vmatprep.subr.mxu0 0.0
  %306 = vmatpush1.msra.mxu0 0.0
  %307 = vmatprep.subr.mxu0 0.0
  %308 = vmatpush1.msra.mxu0 0.0
  %309 = vmatprep.subr.mxu0 0.0
  %310 = vmatpush1.msra.mxu0 0.0
  %311 = vmatprep.subr.mxu0 0.0
  %312 = vmatpush1.msra.mxu0 0.0
  %313 = vmatprep.subr.mxu0 0.0
  %314 = vmatpush1.msra.mxu0 0.0
  %315 = vmatprep.subr.mxu0 0.0
  %316 = vmatpush1.msra.mxu0 0.0
  %317 = vmatprep.subr.mxu0 0.0
  %318 = vmatpush1.msra.mxu0 0.0
  %319 = vmatprep.subr.mxu0 0.0
  %320 = vmatpush1.msra.mxu0 0.0
  %321 = vmatprep.subr.mxu0 0.0
  %322 = vmatpush1.msra.mxu0 0.0
  %323 = vmatprep.subr.mxu0 0.0
  %324 = vmatpush1.msra.mxu0 0.0
  %325 = vmatprep.subr.mxu0 0.0
  %326 = vmatpush1.msra.mxu0 0.0
  %327 = vmatprep.subr.mxu0 0.0
  %328 = vmatpush1.msra.mxu0 0.0
  %329 = vmatprep.mubr.f32.mxu0 0.0
  %330 = vmatmul.mubr.f32.gmra.mrb[0].mxu0 %v260
  %v331 = vpop.f32.mrb[0].mxu0
  %v332 = vadd.f32 %v78, %v331
  %v333 = vpop.f32.mrb[0].mxu0
  %v334 = vadd.f32 %v82, %v333
  %335 = vdwg.mxu0
  %336 = vmatprep.subr.mxu0 0.0
  %337 = vmatpush1.msra.mxu0 %v25
  %338 = vmatprep.subr.mxu0 0.0
  %339 = vmatpush1.msra.mxu0 %v28
  %340 = vmatprep.subr.mxu0 0.0
  %341 = vmatpush1.msra.mxu0 %v31
  %342 = vmatprep.subr.mxu0 0.0
  %343 = vmatpush1.msra.mxu0 %v34
  %344 = vmatprep.subr.mxu0 0.0
  %345 = vmatpush1.msra.mxu0 %v37
  %346 = vmatprep.subr.mxu0 0.0
  %347 = vmatpush1.msra.mxu0 %v40
  %348 = vmatprep.subr.mxu0 0.0
  %349 = vmatpush1.msra.mxu0 %v43
  %350 = vmatprep.subr.mxu0 0.0
  %351 = vmatpush1.msra.mxu0 %v46
  %352 = vmatprep.subr.mxu0 0.0
  %353 = vmatpush1.msra.mxu0 %v49
  %354 = vmatprep.subr.mxu0 0.0
  %355 = vmatpush1.msra.mxu0 %v52
  %356 = vmatprep.subr.mxu0 0.0
  %357 = vmatpush1.msra.mxu0 %v55
  %358 = vmatprep.subr.mxu0 0.0
  %359 = vmatpush1.msra.mxu0 %v58
  %360 = vmatprep.subr.mxu0 0.0
  %361 = vmatpush1.msra.mxu0 %v61
  %362 = vmatprep.subr.mxu0 0.0
  %363 = vmatpush1.msra.mxu0 %v64
  %364 = vmatprep.subr.mxu0 0.0
  %365 = vmatpush1.msra.mxu0 %v67
  %366 = vmatprep.subr.mxu0 0.0
  %367 = vmatpush1.msra.mxu0 %v70
  %368 = vmatprep.subr.mxu0 0.0
  %369 = vmatpush1.msra.mxu0 0.0
  %370 = vmatprep.subr.mxu0 0.0
  %371 = vmatpush1.msra.mxu0 0.0
  %372 = vmatprep.subr.mxu0 0.0
  %373 = vmatpush1.msra.mxu0 0.0
  %374 = vmatprep.subr.mxu0 0.0
  %375 = vmatpush1.msra.mxu0 0.0
  %376 = vmatprep.subr.mxu0 0.0
  %377 = vmatpush1.msra.mxu0 0.0
  %378 = vmatprep.subr.mxu0 0.0
  %379 = vmatpush1.msra.mxu0 0.0
  %380 = vmatprep.subr.mxu0 0.0
  %381 = vmatpush1.msra.mxu0 0.0
  %382 = vmatprep.subr.mxu0 0.0
  %383 = vmatpush1.msra.mxu0 0.0
  %384 = vmatprep.subr.mxu0 0.0
  %385 = vmatpush1.msra.mxu0 0.0
  %386 = vmatprep.subr.mxu0 0.0
  %387 = vmatpush1.msra.mxu0 0.0
  %388 = vmatprep.subr.mxu0 0.0
  %389 = vmatpush1.msra.mxu0 0.0
  %390 = vmatprep.subr.mxu0 0.0
  %391 = vmatpush1.msra.mxu0 0.0
  %392 = vmatprep.subr.mxu0 0.0
  %393 = vmatpush1.msra.mxu0 0.0
  %394 = vmatprep.subr.mxu0 0.0
  %395 = vmatpush1.msra.mxu0 0.0
  %396 = vmatprep.subr.mxu0 0.0
  %397 = vmatpush1.msra.mxu0 0.0
  %398 = vmatprep.subr.mxu0 0.0
  %399 = vmatpush1.msra.mxu0 0.0
  %400 = vmatprep.mubr.f32.mxu0 0.0
  %401 = vmatmul.mubr.f32.gmra.mrb[0].mxu0 %v260
  %v402 = vpop.f32.mrb[0].mxu0
  %v403 = vadd.f32 %v86, %v402
  %v404 = vpop.f32.mrb[0].mxu0
  %405 = vdwg.mxu0
  %v406 = vadd.f32 %v264, %v332
  %v407 = vxor.u32 %v406, 2147483648
  %v408 = vmul.f32 %v407, 1.442695
  %v409 = vpow.pop %v408
  %v410 = vadd.f32 %v409, 1.0
  %v411 = vrcp.pop %v410
  %v412 = vmul.f32 1.0, %v411
  %v414 = vrot.slane %v264, 2
  %v416 = vadd.f32 %v414, %v334
  %v417 = vxor.u32 %v416, 2147483648
  %v418 = vmul.f32 %v417, 1.442695
  %v419 = vpow.pop %v418
  %v420 = vadd.f32 %v419, 1.0
  %v421 = vrcp.pop %v420
  %v422 = vmul.f32 1.0, %v421
  %v423 = vmul.f32 %v412, %v403
  %v424 = vrot.slane %v264, 4
  %v426 = vadd.f32 %v424, %v423
  %v427 = vtanh.pop %v426
  %v428 = vsub.f32 1.0, %v422
  %v429 = vmul.f32 %v428, %v427
  %v430 = vmul.f32 %v422, %v260
  %v431 = vadd.f32 %v429, %v430
  %s432 = sadd.s32 %s257, 1
  %v433 = vstv %s432
  %vm434 = vcmp.gt.s32.totalorder %v22, %v433
  %v435 = vsel %vm434, %v431, %v260
  %v436 = vsel %vm434, %v431, 0.0
  %s437 = scalar_lea.vmem %s4, 2
  %438 = vst [vmem:[%s437] sm:$0x3] %v436
  %s439 = scalar_lea.vmem %s0, 12
  %v440 = vld [vmem:[%s439] sm:$0x3f]
  %441 = vmatprep.subr.mxu0 %v24
  %442 = vmatpush1.msra.mxu0 %v23
  %443 = vmatprep.subr.mxu0 %v27
  %444 = vmatpush1.msra.mxu0 %v26
  %445 = vmatprep.subr.mxu0 %v30
  %446 = vmatpush1.msra.mxu0 %v29
  %447 = vmatprep.subr.mxu0 %v33
  %448 = vmatpush1.msra.mxu0 %v32
  %449 = vmatprep.subr.mxu0 %v36
  %450 = vmatpush1.msra.mxu0 %v35
  %451 = vmatprep.subr.mxu0 %v39
  %452 = vmatpush1.msra.mxu0 %v38
  %453 = vmatprep.subr.mxu0 %v42
  %454 = vmatpush1.msra.mxu0 %v41
  %455 = vmatprep.subr.mxu0 %v45
  %456 = vmatpush1.msra.mxu0 %v44
  %457 = vmatprep.subr.mxu0 %v48
  %458 = vmatpush1.msra.mxu0 %v47
  %459 = vmatprep.subr.mxu0 %v51
  %460 = vmatpush1.msra.mxu0 %v50
  %461 = vmatprep.subr.mxu0 %v54
  %462 = vmatpush1.msra.mxu0 %v53
  %463 = vmatprep.subr.mxu0 %v57
  %464 = vmatpush1.msra.mxu0 %v56
  %465 = vmatprep.subr.mxu0 %v60
  %466 = vmatpush1.msra.mxu0 %v59
  %467 = vmatprep.subr.mxu0 %v63
  %468 = vmatpush1.msra.mxu0 %v62
  %469 = vmatprep.subr.mxu0 %v66
  %470 = vmatpush1.msra.mxu0 %v65
  %471 = vmatprep.subr.mxu0 %v69
  %472 = vmatpush1.msra.mxu0 %v68
  %473 = vmatprep.subr.mxu0 0.0
  %474 = vmatpush1.msra.mxu0 0.0
  %475 = vmatprep.subr.mxu0 0.0
  %476 = vmatpush1.msra.mxu0 0.0
  %477 = vmatprep.subr.mxu0 0.0
  %478 = vmatpush1.msra.mxu0 0.0
  %479 = vmatprep.subr.mxu0 0.0
  %480 = vmatpush1.msra.mxu0 0.0
  %481 = vmatprep.subr.mxu0 0.0
  %482 = vmatpush1.msra.mxu0 0.0
  %483 = vmatprep.subr.mxu0 0.0
  %484 = vmatpush1.msra.mxu0 0.0
  %485 = vmatprep.subr.mxu0 0.0
  %486 = vmatpush1.msra.mxu0 0.0
  %487 = vmatprep.subr.mxu0 0.0
  %488 = vmatpush1.msra.mxu0 0.0
  %489 = vmatprep.subr.mxu0 0.0
  %490 = vmatpush1.msra.mxu0 0.0
  %491 = vmatprep.subr.mxu0 0.0
  %492 = vmatpush1.msra.mxu0 0.0
  %493 = vmatprep.subr.mxu0 0.0
  %494 = vmatpush1.msra.mxu0 0.0
  %495 = vmatprep.subr.mxu0 0.0
  %496 = vmatpush1.msra.mxu0 0.0
  %497 = vmatprep.subr.mxu0 0.0
  %498 = vmatpush1.msra.mxu0 0.0
  %499 = vmatprep.subr.mxu0 0.0
  %500 = vmatpush1.msra.mxu0 0.0
  %501 = vmatprep.subr.mxu0 0.0
  %502 = vmatpush1.msra.mxu0 0.0
  %503 = vmatprep.subr.mxu0 0.0
  %504 = vmatpush1.msra.mxu0 0.0
  %505 = vmatprep.mubr.f32.mxu0 0.0
  %506 = vmatmul.mubr.f32.gmra.mrb[0].mxu0 %v435
  %v507 = vpop.f32.mrb[0].mxu0
  %v508 = vadd.f32 %v78, %v507
  %v509 = vpop.f32.mrb[0].mxu0
  %v510 = vadd.f32 %v82, %v509
  %511 = vdwg.mxu0
  %512 = vmatprep.subr.mxu0 0.0
  %513 = vmatpush1.msra.mxu0 %v25
  %514 = vmatprep.subr.mxu0 0.0
  %515 = vmatpush1.msra.mxu0 %v28
  %516 = vmatprep.subr.mxu0 0.0
  %517 = vmatpush1.msra.mxu0 %v31
  %518 = vmatprep.subr.mxu0 0.0
  %519 = vmatpush1.msra.mxu0 %v34
  %520 = vmatprep.subr.mxu0 0.0
  %521 = vmatpush1.msra.mxu0 %v37
  %522 = vmatprep.subr.mxu0 0.0
  %523 = vmatpush1.msra.mxu0 %v40
  %524 = vmatprep.subr.mxu0 0.0
  %525 = vmatpush1.msra.mxu0 %v43
  %526 = vmatprep.subr.mxu0 0.0
  %527 = vmatpush1.msra.mxu0 %v46
  %528 = vmatprep.subr.mxu0 0.0
  %529 = vmatpush1.msra.mxu0 %v49
  %530 = vmatprep.subr.mxu0 0.0
  %531 = vmatpush1.msra.mxu0 %v52
  %532 = vmatprep.subr.mxu0 0.0
  %533 = vmatpush1.msra.mxu0 %v55
  %534 = vmatprep.subr.mxu0 0.0
  %535 = vmatpush1.msra.mxu0 %v58
  %536 = vmatprep.subr.mxu0 0.0
  %537 = vmatpush1.msra.mxu0 %v61
  %538 = vmatprep.subr.mxu0 0.0
  %539 = vmatpush1.msra.mxu0 %v64
  %540 = vmatprep.subr.mxu0 0.0
  %541 = vmatpush1.msra.mxu0 %v67
  %542 = vmatprep.subr.mxu0 0.0
  %543 = vmatpush1.msra.mxu0 %v70
  %544 = vmatprep.subr.mxu0 0.0
  %545 = vmatpush1.msra.mxu0 0.0
  %546 = vmatprep.subr.mxu0 0.0
  %547 = vmatpush1.msra.mxu0 0.0
  %548 = vmatprep.subr.mxu0 0.0
  %549 = vmatpush1.msra.mxu0 0.0
  %550 = vmatprep.subr.mxu0 0.0
  %551 = vmatpush1.msra.mxu0 0.0
  %552 = vmatprep.subr.mxu0 0.0
  %553 = vmatpush1.msra.mxu0 0.0
  %554 = vmatprep.subr.mxu0 0.0
  %555 = vmatpush1.msra.mxu0 0.0
  %556 = vmatprep.subr.mxu0 0.0
  %557 = vmatpush1.msra.mxu0 0.0
  %558 = vmatprep.subr.mxu0 0.0
  %559 = vmatpush1.msra.mxu0 0.0
  %560 = vmatprep.subr.mxu0 0.0
  %561 = vmatpush1.msra.mxu0 0.0
  %562 = vmatprep.subr.mxu0 0.0
  %563 = vmatpush1.msra.mxu0 0.0
  %564 = vmatprep.subr.mxu0 0.0
  %565 = vmatpush1.msra.mxu0 0.0
  %566 = vmatprep.subr.mxu0 0.0
  %567 = vmatpush1.msra.mxu0 0.0
  %568 = vmatprep.subr.mxu0 0.0
  %569 = vmatpush1.msra.mxu0 0.0
  %570 = vmatprep.subr.mxu0 0.0
  %571 = vmatpush1.msra.mxu0 0.0
  %572 = vmatprep.subr.mxu0 0.0
  %573 = vmatpush1.msra.mxu0 0.0
  %574 = vmatprep.subr.mxu0 0.0
  %575 = vmatpush1.msra.mxu0 0.0
  %576 = vmatprep.mubr.f32.mxu0 0.0
  %577 = vmatmul.mubr.f32.gmra.mrb[0].mxu0 %v435
  %v578 = vpop.f32.mrb[0].mxu0
  %v579 = vadd.f32 %v86, %v578
  %v580 = vpop.f32.mrb[0].mxu0
  %581 = vdwg.mxu0
  %v582 = vadd.f32 %v440, %v508
  %v583 = vxor.u32 %v582, 2147483648
  %v584 = vmul.f32 %v583, 1.442695
  %v585 = vpow.pop %v584
  %v586 = vadd.f32 %v585, 1.0
  %v587 = vrcp.pop %v586
  %v588 = vmul.f32 1.0, %v587
  %v590 = vrot.slane %v440, 2
  %v592 = vadd.f32 %v590, %v510
  %v593 = vxor.u32 %v592, 2147483648
  %v594 = vmul.f32 %v593, 1.442695
  %v595 = vpow.pop %v594
  %v596 = vadd.f32 %v595, 1.0
  %v597 = vrcp.pop %v596
  %v598 = vmul.f32 1.0, %v597
  %v599 = vmul.f32 %v588, %v579
  %v600 = vrot.slane %v440, 4
  %v602 = vadd.f32 %v600, %v599
  %v603 = vtanh.pop %v602
  %v604 = vsub.f32 1.0, %v598
  %v605 = vmul.f32 %v604, %v603
  %v606 = vmul.f32 %v598, %v435
  %v607 = vadd.f32 %v605, %v606
  %s608 = sadd.s32 %s257, 2
  %v609 = vstv %s608
  %vm610 = vcmp.gt.s32.totalorder %v22, %v609
  %v611 = vsel %vm610, %v607, %v435
  %v612 = vsel %vm610, %v607, 0.0
  %s613 = scalar_lea.vmem %s4, 4
  %614 = vst [vmem:[%s613] sm:$0x3] %v612
  %s615 = scalar_lea.vmem %s0, 18
  %v616 = vld [vmem:[%s615] sm:$0x3f]
  %617 = vmatprep.subr.mxu0 %v24
  %618 = vmatpush1.msra.mxu0 %v23
  %619 = vmatprep.subr.mxu0 %v27
  %620 = vmatpush1.msra.mxu0 %v26
  %621 = vmatprep.subr.mxu0 %v30
  %622 = vmatpush1.msra.mxu0 %v29
  %623 = vmatprep.subr.mxu0 %v33
  %624 = vmatpush1.msra.mxu0 %v32
  %625 = vmatprep.subr.mxu0 %v36
  %626 = vmatpush1.msra.mxu0 %v35
  %627 = vmatprep.subr.mxu0 %v39
  %628 = vmatpush1.msra.mxu0 %v38
  %629 = vmatprep.subr.mxu0 %v42
  %630 = vmatpush1.msra.mxu0 %v41
  %631 = vmatprep.subr.mxu0 %v45
  %632 = vmatpush1.msra.mxu0 %v44
  %633 = vmatprep.subr.mxu0 %v48
  %634 = vmatpush1.msra.mxu0 %v47
  %635 = vmatprep.subr.mxu0 %v51
  %636 = vmatpush1.msra.mxu0 %v50
  %637 = vmatprep.subr.mxu0 %v54
  %638 = vmatpush1.msra.mxu0 %v53
  %639 = vmatprep.subr.mxu0 %v57
  %640 = vmatpush1.msra.mxu0 %v56
  %641 = vmatprep.subr.mxu0 %v60
  %642 = vmatpush1.msra.mxu0 %v59
  %643 = vmatprep.subr.mxu0 %v63
  %644 = vmatpush1.msra.mxu0 %v62
  %645 = vmatprep.subr.mxu0 %v66
  %646 = vmatpush1.msra.mxu0 %v65
  %647 = vmatprep.subr.mxu0 %v69
  %648 = vmatpush1.msra.mxu0 %v68
  %649 = vmatprep.subr.mxu0 0.0
  %650 = vmatpush1.msra.mxu0 0.0
  %651 = vmatprep.subr.mxu0 0.0
  %652 = vmatpush1.msra.mxu0 0.0
  %653 = vmatprep.subr.mxu0 0.0
  %654 = vmatpush1.msra.mxu0 0.0
  %655 = vmatprep.subr.mxu0 0.0
  %656 = vmatpush1.msra.mxu0 0.0
  %657 = vmatprep.subr.mxu0 0.0
  %658 = vmatpush1.msra.mxu0 0.0
  %659 = vmatprep.subr.mxu0 0.0
  %660 = vmatpush1.msra.mxu0 0.0
  %661 = vmatprep.subr.mxu0 0.0
  %662 = vmatpush1.msra.mxu0 0.0
  %663 = vmatprep.subr.mxu0 0.0
  %664 = vmatpush1.msra.mxu0 0.0
  %665 = vmatprep.subr.mxu0 0.0
  %666 = vmatpush1.msra.mxu0 0.0
  %667 = vmatprep.subr.mxu0 0.0
  %668 = vmatpush1.msra.mxu0 0.0
  %669 = vmatprep.subr.mxu0 0.0
  %670 = vmatpush1.msra.mxu0 0.0
  %671 = vmatprep.subr.mxu0 0.0
  %672 = vmatpush1.msra.mxu0 0.0
  %673 = vmatprep.subr.mxu0 0.0
  %674 = vmatpush1.msra.mxu0 0.0
  %675 = vmatprep.subr.mxu0 0.0
  %676 = vmatpush1.msra.mxu0 0.0
  %677 = vmatprep.subr.mxu0 0.0
  %678 = vmatpush1.msra.mxu0 0.0
  %679 = vmatprep.subr.mxu0 0.0
  %680 = vmatpush1.msra.mxu0 0.0
  %681 = vmatprep.mubr.f32.mxu0 0.0
  %682 = vmatmul.mubr.f32.gmra.mrb[0].mxu0 %v611
  %v683 = vpop.f32.mrb[0].mxu0
  %v684 = vadd.f32 %v78, %v683
  %v685 = vpop.f32.mrb[0].mxu0
  %v686 = vadd.f32 %v82, %v685
  %687 = vdwg.mxu0
  %688 = vmatprep.subr.mxu0 0.0
  %689 = vmatpush1.msra.mxu0 %v25
  %690 = vmatprep.subr.mxu0 0.0
  %691 = vmatpush1.msra.mxu0 %v28
  %692 = vmatprep.subr.mxu0 0.0
  %693 = vmatpush1.msra.mxu0 %v31
  %694 = vmatprep.subr.mxu0 0.0
  %695 = vmatpush1.msra.mxu0 %v34
  %696 = vmatprep.subr.mxu0 0.0
  %697 = vmatpush1.msra.mxu0 %v37
  %698 = vmatprep.subr.mxu0 0.0
  %699 = vmatpush1.msra.mxu0 %v40
  %700 = vmatprep.subr.mxu0 0.0
  %701 = vmatpush1.msra.mxu0 %v43
  %702 = vmatprep.subr.mxu0 0.0
  %703 = vmatpush1.msra.mxu0 %v46
  %704 = vmatprep.subr.mxu0 0.0
  %705 = vmatpush1.msra.mxu0 %v49
  %706 = vmatprep.subr.mxu0 0.0
  %707 = vmatpush1.msra.mxu0 %v52
  %708 = vmatprep.subr.mxu0 0.0
  %709 = vmatpush1.msra.mxu0 %v55
  %710 = vmatprep.subr.mxu0 0.0
  %711 = vmatpush1.msra.mxu0 %v58
  %712 = vmatprep.subr.mxu0 0.0
  %713 = vmatpush1.msra.mxu0 %v61
  %714 = vmatprep.subr.mxu0 0.0
  %715 = vmatpush1.msra.mxu0 %v64
  %716 = vmatprep.subr.mxu0 0.0
  %717 = vmatpush1.msra.mxu0 %v67
  %718 = vmatprep.subr.mxu0 0.0
  %719 = vmatpush1.msra.mxu0 %v70
  %720 = vmatprep.subr.mxu0 0.0
  %721 = vmatpush1.msra.mxu0 0.0
  %722 = vmatprep.subr.mxu0 0.0
  %723 = vmatpush1.msra.mxu0 0.0
  %724 = vmatprep.subr.mxu0 0.0
  %725 = vmatpush1.msra.mxu0 0.0
  %726 = vmatprep.subr.mxu0 0.0
  %727 = vmatpush1.msra.mxu0 0.0
  %728 = vmatprep.subr.mxu0 0.0
  %729 = vmatpush1.msra.mxu0 0.0
  %730 = vmatprep.subr.mxu0 0.0
  %731 = vmatpush1.msra.mxu0 0.0
  %732 = vmatprep.subr.mxu0 0.0
  %733 = vmatpush1.msra.mxu0 0.0
  %734 = vmatprep.subr.mxu0 0.0
  %735 = vmatpush1.msra.mxu0 0.0
  %736 = vmatprep.subr.mxu0 0.0
  %737 = vmatpush1.msra.mxu0 0.0
  %738 = vmatprep.subr.mxu0 0.0
  %739 = vmatpush1.msra.mxu0 0.0
  %740 = vmatprep.subr.mxu0 0.0
  %741 = vmatpush1.msra.mxu0 0.0
  %742 = vmatprep.subr.mxu0 0.0
  %743 = vmatpush1.msra.mxu0 0.0
  %744 = vmatprep.subr.mxu0 0.0
  %745 = vmatpush1.msra.mxu0 0.0
  %746 = vmatprep.subr.mxu0 0.0
  %747 = vmatpush1.msra.mxu0 0.0
  %748 = vmatprep.subr.mxu0 0.0
  %749 = vmatpush1.msra.mxu0 0.0
  %750 = vmatprep.subr.mxu0 0.0
  %751 = vmatpush1.msra.mxu0 0.0
  %752 = vmatprep.mubr.f32.mxu0 0.0
  %753 = vmatmul.mubr.f32.gmra.mrb[0].mxu0 %v611
  %v754 = vpop.f32.mrb[0].mxu0
  %v755 = vadd.f32 %v86, %v754
  %v756 = vpop.f32.mrb[0].mxu0
  %757 = vdwg.mxu0
  %v758 = vadd.f32 %v616, %v684
  %v759 = vxor.u32 %v758, 2147483648
  %v760 = vmul.f32 %v759, 1.442695
  %v761 = vpow.pop %v760
  %v762 = vadd.f32 %v761, 1.0
  %v763 = vrcp.pop %v762
  %v764 = vmul.f32 1.0, %v763
  %v766 = vrot.slane %v616, 2
  %v768 = vadd.f32 %v766, %v686
  %v769 = vxor.u32 %v768, 2147483648
  %v770 = vmul.f32 %v769, 1.442695
  %v771 = vpow.pop %v770
  %v772 = vadd.f32 %v771, 1.0
  %v773 = vrcp.pop %v772
  %v774 = vmul.f32 1.0, %v773
  %v775 = vmul.f32 %v764, %v755
  %v776 = vrot.slane %v616, 4
  %v778 = vadd.f32 %v776, %v775
  %v779 = vtanh.pop %v778
  %v780 = vsub.f32 1.0, %v774
  %v781 = vmul.f32 %v780, %v779
  %v782 = vmul.f32 %v774, %v611
  %v783 = vadd.f32 %v781, %v782
  %s784 = sadd.s32 %s257, 3
  %v785 = vstv %s784
  %vm786 = vcmp.gt.s32.totalorder %v22, %v785
  %v787 = vsel %vm786, %v783, %v611
  %v788 = vsel %vm786, %v783, 0.0
  %s789 = scalar_lea.vmem %s4, 6
  %790 = vst [vmem:[%s789] sm:$0x3] %v788
  %s791 = scalar_lea.vmem %s0, 24
  %v792 = vld [vmem:[%s791] sm:$0x3f]
  %793 = vmatprep.subr.mxu0 %v24
  %794 = vmatpush1.msra.mxu0 %v23
  %795 = vmatprep.subr.mxu0 %v27
  %796 = vmatpush1.msra.mxu0 %v26
  %797 = vmatprep.subr.mxu0 %v30
  %798 = vmatpush1.msra.mxu0 %v29
  %799 = vmatprep.subr.mxu0 %v33
  %800 = vmatpush1.msra.mxu0 %v32
  %801 = vmatprep.subr.mxu0 %v36
  %802 = vmatpush1.msra.mxu0 %v35
  %803 = vmatprep.subr.mxu0 %v39
  %804 = vmatpush1.msra.mxu0 %v38
  %805 = vmatprep.subr.mxu0 %v42
  %806 = vmatpush1.msra.mxu0 %v41
  %807 = vmatprep.subr.mxu0 %v45
  %808 = vmatpush1.msra.mxu0 %v44
  %809 = vmatprep.subr.mxu0 %v48
  %810 = vmatpush1.msra.mxu0 %v47
  %811 = vmatprep.subr.mxu0 %v51
  %812 = vmatpush1.msra.mxu0 %v50
  %813 = vmatprep.subr.mxu0 %v54
  %814 = vmatpush1.msra.mxu0 %v53
  %815 = vmatprep.subr.mxu0 %v57
  %816 = vmatpush1.msra.mxu0 %v56
  %817 = vmatprep.subr.mxu0 %v60
  %818 = vmatpush1.msra.mxu0 %v59
  %819 = vmatprep.subr.mxu0 %v63
  %820 = vmatpush1.msra.mxu0 %v62
  %821 = vmatprep.subr.mxu0 %v66
  %822 = vmatpush1.msra.mxu0 %v65
  %823 = vmatprep.subr.mxu0 %v69
  %824 = vmatpush1.msra.mxu0 %v68
  %825 = vmatprep.subr.mxu0 0.0
  %826 = vmatpush1.msra.mxu0 0.0
  %827 = vmatprep.subr.mxu0 0.0
  %828 = vmatpush1.msra.mxu0 0.0
  %829 = vmatprep.subr.mxu0 0.0
  %830 = vmatpush1.msra.mxu0 0.0
  %831 = vmatprep.subr.mxu0 0.0
  %832 = vmatpush1.msra.mxu0 0.0
  %833 = vmatprep.subr.mxu0 0.0
  %834 = vmatpush1.msra.mxu0 0.0
  %835 = vmatprep.subr.mxu0 0.0
  %836 = vmatpush1.msra.mxu0 0.0
  %837 = vmatprep.subr.mxu0 0.0
  %838 = vmatpush1.msra.mxu0 0.0
  %839 = vmatprep.subr.mxu0 0.0
  %840 = vmatpush1.msra.mxu0 0.0
  %841 = vmatprep.subr.mxu0 0.0
  %842 = vmatpush1.msra.mxu0 0.0
  %843 = vmatprep.subr.mxu0 0.0
  %844 = vmatpush1.msra.mxu0 0.0
  %845 = vmatprep.subr.mxu0 0.0
  %846 = vmatpush1.msra.mxu0 0.0
  %847 = vmatprep.subr.mxu0 0.0
  %848 = vmatpush1.msra.mxu0 0.0
  %849 = vmatprep.subr.mxu0 0.0
  %850 = vmatpush1.msra.mxu0 0.0
  %851 = vmatprep.subr.mxu0 0.0
  %852 = vmatpush1.msra.mxu0 0.0
  %853 = vmatprep.subr.mxu0 0.0
  %854 = vmatpush1.msra.mxu0 0.0
  %855 = vmatprep.subr.mxu0 0.0
  %856 = vmatpush1.msra.mxu0 0.0
  %857 = vmatprep.mubr.f32.mxu0 0.0
  %858 = vmatmul.mubr.f32.gmra.mrb[0].mxu0 %v787
  %v859 = vpop.f32.mrb[0].mxu0
  %v860 = vadd.f32 %v78, %v859
  %v861 = vpop.f32.mrb[0].mxu0
  %v862 = vadd.f32 %v82, %v861
  %863 = vdwg.mxu0
  %864 = vmatprep.subr.mxu0 0.0
  %865 = vmatpush1.msra.mxu0 %v25
  %866 = vmatprep.subr.mxu0 0.0
  %867 = vmatpush1.msra.mxu0 %v28
  %868 = vmatprep.subr.mxu0 0.0
  %869 = vmatpush1.msra.mxu0 %v31
  %870 = vmatprep.subr.mxu0 0.0
  %871 = vmatpush1.msra.mxu0 %v34
  %872 = vmatprep.subr.mxu0 0.0
  %873 = vmatpush1.msra.mxu0 %v37
  %874 = vmatprep.subr.mxu0 0.0
  %875 = vmatpush1.msra.mxu0 %v40
  %876 = vmatprep.subr.mxu0 0.0
  %877 = vmatpush1.msra.mxu0 %v43
  %878 = vmatprep.subr.mxu0 0.0
  %879 = vmatpush1.msra.mxu0 %v46
  %880 = vmatprep.subr.mxu0 0.0
  %881 = vmatpush1.msra.mxu0 %v49
  %882 = vmatprep.subr.mxu0 0.0
  %883 = vmatpush1.msra.mxu0 %v52
  %884 = vmatprep.subr.mxu0 0.0
  %885 = vmatpush1.msra.mxu0 %v55
  %886 = vmatprep.subr.mxu0 0.0
  %887 = vmatpush1.msra.mxu0 %v58
  %888 = vmatprep.subr.mxu0 0.0
  %889 = vmatpush1.msra.mxu0 %v61
  %890 = vmatprep.subr.mxu0 0.0
  %891 = vmatpush1.msra.mxu0 %v64
  %892 = vmatprep.subr.mxu0 0.0
  %893 = vmatpush1.msra.mxu0 %v67
  %894 = vmatprep.subr.mxu0 0.0
  %895 = vmatpush1.msra.mxu0 %v70
  %896 = vmatprep.subr.mxu0 0.0
  %897 = vmatpush1.msra.mxu0 0.0
  %898 = vmatprep.subr.mxu0 0.0
  %899 = vmatpush1.msra.mxu0 0.0
  %900 = vmatprep.subr.mxu0 0.0
  %901 = vmatpush1.msra.mxu0 0.0
  %902 = vmatprep.subr.mxu0 0.0
  %903 = vmatpush1.msra.mxu0 0.0
  %904 = vmatprep.subr.mxu0 0.0
  %905 = vmatpush1.msra.mxu0 0.0
  %906 = vmatprep.subr.mxu0 0.0
  %907 = vmatpush1.msra.mxu0 0.0
  %908 = vmatprep.subr.mxu0 0.0
  %909 = vmatpush1.msra.mxu0 0.0
  %910 = vmatprep.subr.mxu0 0.0
  %911 = vmatpush1.msra.mxu0 0.0
  %912 = vmatprep.subr.mxu0 0.0
  %913 = vmatpush1.msra.mxu0 0.0
  %914 = vmatprep.subr.mxu0 0.0
  %915 = vmatpush1.msra.mxu0 0.0
  %916 = vmatprep.subr.mxu0 0.0
  %917 = vmatpush1.msra.mxu0 0.0
  %918 = vmatprep.subr.mxu0 0.0
  %919 = vmatpush1.msra.mxu0 0.0
  %920 = vmatprep.subr.mxu0 0.0
  %921 = vmatpush1.msra.mxu0 0.0
  %922 = vmatprep.subr.mxu0 0.0
  %923 = vmatpush1.msra.mxu0 0.0
  %924 = vmatprep.subr.mxu0 0.0
  %925 = vmatpush1.msra.mxu0 0.0
  %926 = vmatprep.subr.mxu0 0.0
  %927 = vmatpush1.msra.mxu0 0.0
  %928 = vmatprep.mubr.f32.mxu0 0.0
  %929 = vmatmul.mubr.f32.gmra.mrb[0].mxu0 %v787
  %v930 = vpop.f32.mrb[0].mxu0
  %v931 = vadd.f32 %v86, %v930
  %v932 = vpop.f32.mrb[0].mxu0
  %933 = vdwg.mxu0
  %v934 = vadd.f32 %v792, %v860
  %v935 = vxor.u32 %v934, 2147483648
  %v936 = vmul.f32 %v935, 1.442695
  %v937 = vpow.pop %v936
  %v938 = vadd.f32 %v937, 1.0
  %v939 = vrcp.pop %v938
  %v940 = vmul.f32 1.0, %v939
  %v942 = vrot.slane %v792, 2
  %v944 = vadd.f32 %v942, %v862
  %v945 = vxor.u32 %v944, 2147483648
  %v946 = vmul.f32 %v945, 1.442695
  %v947 = vpow.pop %v946
  %v948 = vadd.f32 %v947, 1.0
  %v949 = vrcp.pop %v948
  %v950 = vmul.f32 1.0, %v949
  %v951 = vmul.f32 %v940, %v931
  %v952 = vrot.slane %v792, 4
  %v954 = vadd.f32 %v952, %v951
  %v955 = vtanh.pop %v954
  %v956 = vsub.f32 1.0, %v950
  %v957 = vmul.f32 %v956, %v955
  %v958 = vmul.f32 %v950, %v787
  %v959 = vadd.f32 %v957, %v958
  %s960 = sadd.s32 %s257, 4
  %v961 = vstv %s960
  %vm962 = vcmp.gt.s32.totalorder %v22, %v961
  %v963 = vsel %vm962, %v959, %v787
  %v964 = vsel %vm962, %v959, 0.0
  %s965 = scalar_lea.vmem %s4, 8
  %966 = vst [vmem:[%s965] sm:$0x3] %v964
  %s967 = scalar_lea.vmem %s0, 30
  %v968 = vld [vmem:[%s967] sm:$0x3f]
  %969 = vmatprep.subr.mxu0 %v24
  %970 = vmatpush1.msra.mxu0 %v23
  %971 = vmatprep.subr.mxu0 %v27
  %972 = vmatpush1.msra.mxu0 %v26
  %973 = vmatprep.subr.mxu0 %v30
  %974 = vmatpush1.msra.mxu0 %v29
  %975 = vmatprep.subr.mxu0 %v33
  %976 = vmatpush1.msra.mxu0 %v32
  %977 = vmatprep.subr.mxu0 %v36
  %978 = vmatpush1.msra.mxu0 %v35
  %979 = vmatprep.subr.mxu0 %v39
  %980 = vmatpush1.msra.mxu0 %v38
  %981 = vmatprep.subr.mxu0 %v42
  %982 = vmatpush1.msra.mxu0 %v41
  %983 = vmatprep.subr.mxu0 %v45
  %984 = vmatpush1.msra.mxu0 %v44
  %985 = vmatprep.subr.mxu0 %v48
  %986 = vmatpush1.msra.mxu0 %v47
  %987 = vmatprep.subr.mxu0 %v51
  %988 = vmatpush1.msra.mxu0 %v50
  %989 = vmatprep.subr.mxu0 %v54
  %990 = vmatpush1.msra.mxu0 %v53
  %991 = vmatprep.subr.mxu0 %v57
  %992 = vmatpush1.msra.mxu0 %v56
  %993 = vmatprep.subr.mxu0 %v60
  %994 = vmatpush1.msra.mxu0 %v59
  %995 = vmatprep.subr.mxu0 %v63
  %996 = vmatpush1.msra.mxu0 %v62
  %997 = vmatprep.subr.mxu0 %v66
  %998 = vmatpush1.msra.mxu0 %v65
  %999 = vmatprep.subr.mxu0 %v69
  %1000 = vmatpush1.msra.mxu0 %v68
  %1001 = vmatprep.subr.mxu0 0.0
  %1002 = vmatpush1.msra.mxu0 0.0
  %1003 = vmatprep.subr.mxu0 0.0
  %1004 = vmatpush1.msra.mxu0 0.0
  %1005 = vmatprep.subr.mxu0 0.0
  %1006 = vmatpush1.msra.mxu0 0.0
  %1007 = vmatprep.subr.mxu0 0.0
  %1008 = vmatpush1.msra.mxu0 0.0
  %1009 = vmatprep.subr.mxu0 0.0
  %1010 = vmatpush1.msra.mxu0 0.0
  %1011 = vmatprep.subr.mxu0 0.0
  %1012 = vmatpush1.msra.mxu0 0.0
  %1013 = vmatprep.subr.mxu0 0.0
  %1014 = vmatpush1.msra.mxu0 0.0
  %1015 = vmatprep.subr.mxu0 0.0
  %1016 = vmatpush1.msra.mxu0 0.0
  %1017 = vmatprep.subr.mxu0 0.0
  %1018 = vmatpush1.msra.mxu0 0.0
  %1019 = vmatprep.subr.mxu0 0.0
  %1020 = vmatpush1.msra.mxu0 0.0
  %1021 = vmatprep.subr.mxu0 0.0
  %1022 = vmatpush1.msra.mxu0 0.0
  %1023 = vmatprep.subr.mxu0 0.0
  %1024 = vmatpush1.msra.mxu0 0.0
  %1025 = vmatprep.subr.mxu0 0.0
  %1026 = vmatpush1.msra.mxu0 0.0
  %1027 = vmatprep.subr.mxu0 0.0
  %1028 = vmatpush1.msra.mxu0 0.0
  %1029 = vmatprep.subr.mxu0 0.0
  %1030 = vmatpush1.msra.mxu0 0.0
  %1031 = vmatprep.subr.mxu0 0.0
  %1032 = vmatpush1.msra.mxu0 0.0
  %1033 = vmatprep.mubr.f32.mxu0 0.0
  %1034 = vmatmul.mubr.f32.gmra.mrb[0].mxu0 %v963
  %v1035 = vpop.f32.mrb[0].mxu0
  %v1036 = vadd.f32 %v78, %v1035
  %v1037 = vpop.f32.mrb[0].mxu0
  %v1038 = vadd.f32 %v82, %v1037
  %1039 = vdwg.mxu0
  %1040 = vmatprep.subr.mxu0 0.0
  %1041 = vmatpush1.msra.mxu0 %v25
  %1042 = vmatprep.subr.mxu0 0.0
  %1043 = vmatpush1.msra.mxu0 %v28
  %1044 = vmatprep.subr.mxu0 0.0
  %1045 = vmatpush1.msra.mxu0 %v31
  %1046 = vmatprep.subr.mxu0 0.0
  %1047 = vmatpush1.msra.mxu0 %v34
  %1048 = vmatprep.subr.mxu0 0.0
  %1049 = vmatpush1.msra.mxu0 %v37
  %1050 = vmatprep.subr.mxu0 0.0
  %1051 = vmatpush1.msra.mxu0 %v40
  %1052 = vmatprep.subr.mxu0 0.0
  %1053 = vmatpush1.msra.mxu0 %v43
  %1054 = vmatprep.subr.mxu0 0.0
  %1055 = vmatpush1.msra.mxu0 %v46
  %1056 = vmatprep.subr.mxu0 0.0
  %1057 = vmatpush1.msra.mxu0 %v49
  %1058 = vmatprep.subr.mxu0 0.0
  %1059 = vmatpush1.msra.mxu0 %v52
  %1060 = vmatprep.subr.mxu0 0.0
  %1061 = vmatpush1.msra.mxu0 %v55
  %1062 = vmatprep.subr.mxu0 0.0
  %1063 = vmatpush1.msra.mxu0 %v58
  %1064 = vmatprep.subr.mxu0 0.0
  %1065 = vmatpush1.msra.mxu0 %v61
  %1066 = vmatprep.subr.mxu0 0.0
  %1067 = vmatpush1.msra.mxu0 %v64
  %1068 = vmatprep.subr.mxu0 0.0
  %1069 = vmatpush1.msra.mxu0 %v67
  %1070 = vmatprep.subr.mxu0 0.0
  %1071 = vmatpush1.msra.mxu0 %v70
  %1072 = vmatprep.subr.mxu0 0.0
  %1073 = vmatpush1.msra.mxu0 0.0
  %1074 = vmatprep.subr.mxu0 0.0
  %1075 = vmatpush1.msra.mxu0 0.0
  %1076 = vmatprep.subr.mxu0 0.0
  %1077 = vmatpush1.msra.mxu0 0.0
  %1078 = vmatprep.subr.mxu0 0.0
  %1079 = vmatpush1.msra.mxu0 0.0
  %1080 = vmatprep.subr.mxu0 0.0
  %1081 = vmatpush1.msra.mxu0 0.0
  %1082 = vmatprep.subr.mxu0 0.0
  %1083 = vmatpush1.msra.mxu0 0.0
  %1084 = vmatprep.subr.mxu0 0.0
  %1085 = vmatpush1.msra.mxu0 0.0
  %1086 = vmatprep.subr.mxu0 0.0
  %1087 = vmatpush1.msra.mxu0 0.0
  %1088 = vmatprep.subr.mxu0 0.0
  %1089 = vmatpush1.msra.mxu0 0.0
  %1090 = vmatprep.subr.mxu0 0.0
  %1091 = vmatpush1.msra.mxu0 0.0
  %1092 = vmatprep.subr.mxu0 0.0
  %1093 = vmatpush1.msra.mxu0 0.0
  %1094 = vmatprep.subr.mxu0 0.0
  %1095 = vmatpush1.msra.mxu0 0.0
  %1096 = vmatprep.subr.mxu0 0.0
  %1097 = vmatpush1.msra.mxu0 0.0
  %1098 = vmatprep.subr.mxu0 0.0
  %1099 = vmatpush1.msra.mxu0 0.0
  %1100 = vmatprep.subr.mxu0 0.0
  %1101 = vmatpush1.msra.mxu0 0.0
  %1102 = vmatprep.subr.mxu0 0.0
  %1103 = vmatpush1.msra.mxu0 0.0
  %1104 = vmatprep.mubr.f32.mxu0 0.0
  %1105 = vmatmul.mubr.f32.gmra.mrb[0].mxu0 %v963
  %v1106 = vpop.f32.mrb[0].mxu0
  %v1107 = vadd.f32 %v86, %v1106
  %v1108 = vpop.f32.mrb[0].mxu0
  %1109 = vdwg.mxu0
  %v1110 = vadd.f32 %v968, %v1036
  %v1111 = vxor.u32 %v1110, 2147483648
  %v1112 = vmul.f32 %v1111, 1.442695
  %v1113 = vpow.pop %v1112
  %v1114 = vadd.f32 %v1113, 1.0
  %v1115 = vrcp.pop %v1114
  %v1116 = vmul.f32 1.0, %v1115
  %v1118 = vrot.slane %v968, 2
  %v1120 = vadd.f32 %v1118, %v1038
  %v1121 = vxor.u32 %v1120, 2147483648
  %v1122 = vmul.f32 %v1121, 1.442695
  %v1123 = vpow.pop %v1122
  %v1124 = vadd.f32 %v1123, 1.0
  %v1125 = vrcp.pop %v1124
  %v1126 = vmul.f32 1.0, %v1125
  %v1127 = vmul.f32 %v1116, %v1107
  %v1128 = vrot.slane %v968, 4
  %v1130 = vadd.f32 %v1128, %v1127
  %v1131 = vtanh.pop %v1130
  %v1132 = vsub.f32 1.0, %v1126
  %v1133 = vmul.f32 %v1132, %v1131
  %v1134 = vmul.f32 %v1126, %v963
  %v1135 = vadd.f32 %v1133, %v1134
  %s1136 = sadd.s32 %s257, 5
  %v1137 = vstv %s1136
  %vm1138 = vcmp.gt.s32.totalorder %v22, %v1137
  %v1139 = vsel %vm1138, %v1135, %v963
  %v1140 = vsel %vm1138, %v1135, 0.0
  %s1141 = scalar_lea.vmem %s4, 10
  %1142 = vst [vmem:[%s1141] sm:$0x3] %v1140
  %s1143 = scalar_lea.vmem %s0, 36
  %v1144 = vld [vmem:[%s1143] sm:$0x3f]
  %1145 = vmatprep.subr.mxu0 %v24
  %1146 = vmatpush1.msra.mxu0 %v23
  %1147 = vmatprep.subr.mxu0 %v27
  %1148 = vmatpush1.msra.mxu0 %v26
  %1149 = vmatprep.subr.mxu0 %v30
  %1150 = vmatpush1.msra.mxu0 %v29
  %1151 = vmatprep.subr.mxu0 %v33
  %1152 = vmatpush1.msra.mxu0 %v32
  %1153 = vmatprep.subr.mxu0 %v36
  %1154 = vmatpush1.msra.mxu0 %v35
  %1155 = vmatprep.subr.mxu0 %v39
  %1156 = vmatpush1.msra.mxu0 %v38
  %1157 = vmatprep.subr.mxu0 %v42
  %1158 = vmatpush1.msra.mxu0 %v41
  %1159 = vmatprep.subr.mxu0 %v45
  %1160 = vmatpush1.msra.mxu0 %v44
  %1161 = vmatprep.subr.mxu0 %v48
  %1162 = vmatpush1.msra.mxu0 %v47
  %1163 = vmatprep.subr.mxu0 %v51
  %1164 = vmatpush1.msra.mxu0 %v50
  %1165 = vmatprep.subr.mxu0 %v54
  %1166 = vmatpush1.msra.mxu0 %v53
  %1167 = vmatprep.subr.mxu0 %v57
  %1168 = vmatpush1.msra.mxu0 %v56
  %1169 = vmatprep.subr.mxu0 %v60
  %1170 = vmatpush1.msra.mxu0 %v59
  %1171 = vmatprep.subr.mxu0 %v63
  %1172 = vmatpush1.msra.mxu0 %v62
  %1173 = vmatprep.subr.mxu0 %v66
  %1174 = vmatpush1.msra.mxu0 %v65
  %1175 = vmatprep.subr.mxu0 %v69
  %1176 = vmatpush1.msra.mxu0 %v68
  %1177 = vmatprep.subr.mxu0 0.0
  %1178 = vmatpush1.msra.mxu0 0.0
  %1179 = vmatprep.subr.mxu0 0.0
  %1180 = vmatpush1.msra.mxu0 0.0
  %1181 = vmatprep.subr.mxu0 0.0
  %1182 = vmatpush1.msra.mxu0 0.0
  %1183 = vmatprep.subr.mxu0 0.0
  %1184 = vmatpush1.msra.mxu0 0.0
  %1185 = vmatprep.subr.mxu0 0.0
  %1186 = vmatpush1.msra.mxu0 0.0
  %1187 = vmatprep.subr.mxu0 0.0
  %1188 = vmatpush1.msra.mxu0 0.0
  %1189 = vmatprep.subr.mxu0 0.0
  %1190 = vmatpush1.msra.mxu0 0.0
  %1191 = vmatprep.subr.mxu0 0.0
  %1192 = vmatpush1.msra.mxu0 0.0
  %1193 = vmatprep.subr.mxu0 0.0
  %1194 = vmatpush1.msra.mxu0 0.0
  %1195 = vmatprep.subr.mxu0 0.0
  %1196 = vmatpush1.msra.mxu0 0.0
  %1197 = vmatprep.subr.mxu0 0.0
  %1198 = vmatpush1.msra.mxu0 0.0
  %1199 = vmatprep.subr.mxu0 0.0
  %1200 = vmatpush1.msra.mxu0 0.0
  %1201 = vmatprep.subr.mxu0 0.0
  %1202 = vmatpush1.msra.mxu0 0.0
  %1203 = vmatprep.subr.mxu0 0.0
  %1204 = vmatpush1.msra.mxu0 0.0
  %1205 = vmatprep.subr.mxu0 0.0
  %1206 = vmatpush1.msra.mxu0 0.0
  %1207 = vmatprep.subr.mxu0 0.0
  %1208 = vmatpush1.msra.mxu0 0.0
  %1209 = vmatprep.mubr.f32.mxu0 0.0
  %1210 = vmatmul.mubr.f32.gmra.mrb[0].mxu0 %v1139
  %v1211 = vpop.f32.mrb[0].mxu0
  %v1212 = vadd.f32 %v78, %v1211
  %v1213 = vpop.f32.mrb[0].mxu0
  %v1214 = vadd.f32 %v82, %v1213
  %1215 = vdwg.mxu0
  %1216 = vmatprep.subr.mxu0 0.0
  %1217 = vmatpush1.msra.mxu0 %v25
  %1218 = vmatprep.subr.mxu0 0.0
  %1219 = vmatpush1.msra.mxu0 %v28
  %1220 = vmatprep.subr.mxu0 0.0
  %1221 = vmatpush1.msra.mxu0 %v31
  %1222 = vmatprep.subr.mxu0 0.0
  %1223 = vmatpush1.msra.mxu0 %v34
  %1224 = vmatprep.subr.mxu0 0.0
  %1225 = vmatpush1.msra.mxu0 %v37
  %1226 = vmatprep.subr.mxu0 0.0
  %1227 = vmatpush1.msra.mxu0 %v40
  %1228 = vmatprep.subr.mxu0 0.0
  %1229 = vmatpush1.msra.mxu0 %v43
  %1230 = vmatprep.subr.mxu0 0.0
  %1231 = vmatpush1.msra.mxu0 %v46
  %1232 = vmatprep.subr.mxu0 0.0
  %1233 = vmatpush1.msra.mxu0 %v49
  %1234 = vmatprep.subr.mxu0 0.0
  %1235 = vmatpush1.msra.mxu0 %v52
  %1236 = vmatprep.subr.mxu0 0.0
  %1237 = vmatpush1.msra.mxu0 %v55
  %1238 = vmatprep.subr.mxu0 0.0
  %1239 = vmatpush1.msra.mxu0 %v58
  %1240 = vmatprep.subr.mxu0 0.0
  %1241 = vmatpush1.msra.mxu0 %v61
  %1242 = vmatprep.subr.mxu0 0.0
  %1243 = vmatpush1.msra.mxu0 %v64
  %1244 = vmatprep.subr.mxu0 0.0
  %1245 = vmatpush1.msra.mxu0 %v67
  %1246 = vmatprep.subr.mxu0 0.0
  %1247 = vmatpush1.msra.mxu0 %v70
  %1248 = vmatprep.subr.mxu0 0.0
  %1249 = vmatpush1.msra.mxu0 0.0
  %1250 = vmatprep.subr.mxu0 0.0
  %1251 = vmatpush1.msra.mxu0 0.0
  %1252 = vmatprep.subr.mxu0 0.0
  %1253 = vmatpush1.msra.mxu0 0.0
  %1254 = vmatprep.subr.mxu0 0.0
  %1255 = vmatpush1.msra.mxu0 0.0
  %1256 = vmatprep.subr.mxu0 0.0
  %1257 = vmatpush1.msra.mxu0 0.0
  %1258 = vmatprep.subr.mxu0 0.0
  %1259 = vmatpush1.msra.mxu0 0.0
  %1260 = vmatprep.subr.mxu0 0.0
  %1261 = vmatpush1.msra.mxu0 0.0
  %1262 = vmatprep.subr.mxu0 0.0
  %1263 = vmatpush1.msra.mxu0 0.0
  %1264 = vmatprep.subr.mxu0 0.0
  %1265 = vmatpush1.msra.mxu0 0.0
  %1266 = vmatprep.subr.mxu0 0.0
  %1267 = vmatpush1.msra.mxu0 0.0
  %1268 = vmatprep.subr.mxu0 0.0
  %1269 = vmatpush1.msra.mxu0 0.0
  %1270 = vmatprep.subr.mxu0 0.0
  %1271 = vmatpush1.msra.mxu0 0.0
  %1272 = vmatprep.subr.mxu0 0.0
  %1273 = vmatpush1.msra.mxu0 0.0
  %1274 = vmatprep.subr.mxu0 0.0
  %1275 = vmatpush1.msra.mxu0 0.0
  %1276 = vmatprep.subr.mxu0 0.0
  %1277 = vmatpush1.msra.mxu0 0.0
  %1278 = vmatprep.subr.mxu0 0.0
  %1279 = vmatpush1.msra.mxu0 0.0
  %1280 = vmatprep.mubr.f32.mxu0 0.0
  %1281 = vmatmul.mubr.f32.gmra.mrb[0].mxu0 %v1139
  %v1282 = vpop.f32.mrb[0].mxu0
  %v1283 = vadd.f32 %v86, %v1282
  %v1284 = vpop.f32.mrb[0].mxu0
  %1285 = vdwg.mxu0
  %v1286 = vadd.f32 %v1144, %v1212
  %v1287 = vxor.u32 %v1286, 2147483648
  %v1288 = vmul.f32 %v1287, 1.442695
  %v1289 = vpow.pop %v1288
  %v1290 = vadd.f32 %v1289, 1.0
  %v1291 = vrcp.pop %v1290
  %v1292 = vmul.f32 1.0, %v1291
  %v1294 = vrot.slane %v1144, 2
  %v1296 = vadd.f32 %v1294, %v1214
  %v1297 = vxor.u32 %v1296, 2147483648
  %v1298 = vmul.f32 %v1297, 1.442695
  %v1299 = vpow.pop %v1298
  %v1300 = vadd.f32 %v1299, 1.0
  %v1301 = vrcp.pop %v1300
  %v1302 = vmul.f32 1.0, %v1301
  %v1303 = vmul.f32 %v1292, %v1283
  %v1304 = vrot.slane %v1144, 4
  %v1306 = vadd.f32 %v1304, %v1303
  %v1307 = vtanh.pop %v1306
  %v1308 = vsub.f32 1.0, %v1302
  %v1309 = vmul.f32 %v1308, %v1307
  %v1310 = vmul.f32 %v1302, %v1139
  %v1311 = vadd.f32 %v1309, %v1310
  %s1312 = sadd.s32 %s257, 6
  %v1313 = vstv %s1312
  %vm1314 = vcmp.gt.s32.totalorder %v22, %v1313
  %v1315 = vsel %vm1314, %v1311, %v1139
  %v1316 = vsel %vm1314, %v1311, 0.0
  %s1317 = scalar_lea.vmem %s4, 12
  %1318 = vst [vmem:[%s1317] sm:$0x3] %v1316
  %s1319 = scalar_lea.vmem %s0, 42
  %v1320 = vld [vmem:[%s1319] sm:$0x3f]
  %1321 = vmatprep.subr.mxu0 %v24
  %1322 = vmatpush1.msra.mxu0 %v23
  %1323 = vmatprep.subr.mxu0 %v27
  %1324 = vmatpush1.msra.mxu0 %v26
  %1325 = vmatprep.subr.mxu0 %v30
  %1326 = vmatpush1.msra.mxu0 %v29
  %1327 = vmatprep.subr.mxu0 %v33
  %1328 = vmatpush1.msra.mxu0 %v32
  %1329 = vmatprep.subr.mxu0 %v36
  %1330 = vmatpush1.msra.mxu0 %v35
  %1331 = vmatprep.subr.mxu0 %v39
  %1332 = vmatpush1.msra.mxu0 %v38
  %1333 = vmatprep.subr.mxu0 %v42
  %1334 = vmatpush1.msra.mxu0 %v41
  %1335 = vmatprep.subr.mxu0 %v45
  %1336 = vmatpush1.msra.mxu0 %v44
  %1337 = vmatprep.subr.mxu0 %v48
  %1338 = vmatpush1.msra.mxu0 %v47
  %1339 = vmatprep.subr.mxu0 %v51
  %1340 = vmatpush1.msra.mxu0 %v50
  %1341 = vmatprep.subr.mxu0 %v54
  %1342 = vmatpush1.msra.mxu0 %v53
  %1343 = vmatprep.subr.mxu0 %v57
  %1344 = vmatpush1.msra.mxu0 %v56
  %1345 = vmatprep.subr.mxu0 %v60
  %1346 = vmatpush1.msra.mxu0 %v59
  %1347 = vmatprep.subr.mxu0 %v63
  %1348 = vmatpush1.msra.mxu0 %v62
  %1349 = vmatprep.subr.mxu0 %v66
  %1350 = vmatpush1.msra.mxu0 %v65
  %1351 = vmatprep.subr.mxu0 %v69
  %1352 = vmatpush1.msra.mxu0 %v68
  %1353 = vmatprep.subr.mxu0 0.0
  %1354 = vmatpush1.msra.mxu0 0.0
  %1355 = vmatprep.subr.mxu0 0.0
  %1356 = vmatpush1.msra.mxu0 0.0
  %1357 = vmatprep.subr.mxu0 0.0
  %1358 = vmatpush1.msra.mxu0 0.0
  %1359 = vmatprep.subr.mxu0 0.0
  %1360 = vmatpush1.msra.mxu0 0.0
  %1361 = vmatprep.subr.mxu0 0.0
  %1362 = vmatpush1.msra.mxu0 0.0
  %1363 = vmatprep.subr.mxu0 0.0
  %1364 = vmatpush1.msra.mxu0 0.0
  %1365 = vmatprep.subr.mxu0 0.0
  %1366 = vmatpush1.msra.mxu0 0.0
  %1367 = vmatprep.subr.mxu0 0.0
  %1368 = vmatpush1.msra.mxu0 0.0
  %1369 = vmatprep.subr.mxu0 0.0
  %1370 = vmatpush1.msra.mxu0 0.0
  %1371 = vmatprep.subr.mxu0 0.0
  %1372 = vmatpush1.msra.mxu0 0.0
  %1373 = vmatprep.subr.mxu0 0.0
  %1374 = vmatpush1.msra.mxu0 0.0
  %1375 = vmatprep.subr.mxu0 0.0
  %1376 = vmatpush1.msra.mxu0 0.0
  %1377 = vmatprep.subr.mxu0 0.0
  %1378 = vmatpush1.msra.mxu0 0.0
  %1379 = vmatprep.subr.mxu0 0.0
  %1380 = vmatpush1.msra.mxu0 0.0
  %1381 = vmatprep.subr.mxu0 0.0
  %1382 = vmatpush1.msra.mxu0 0.0
  %1383 = vmatprep.subr.mxu0 0.0
  %1384 = vmatpush1.msra.mxu0 0.0
  %1385 = vmatprep.mubr.f32.mxu0 0.0
  %1386 = vmatmul.mubr.f32.gmra.mrb[0].mxu0 %v1315
  %v1387 = vpop.f32.mrb[0].mxu0
  %v1388 = vadd.f32 %v78, %v1387
  %v1389 = vpop.f32.mrb[0].mxu0
  %v1390 = vadd.f32 %v82, %v1389
  %1391 = vdwg.mxu0
  %1392 = vmatprep.subr.mxu0 0.0
  %1393 = vmatpush1.msra.mxu0 %v25
  %1394 = vmatprep.subr.mxu0 0.0
  %1395 = vmatpush1.msra.mxu0 %v28
  %1396 = vmatprep.subr.mxu0 0.0
  %1397 = vmatpush1.msra.mxu0 %v31
  %1398 = vmatprep.subr.mxu0 0.0
  %1399 = vmatpush1.msra.mxu0 %v34
  %1400 = vmatprep.subr.mxu0 0.0
  %1401 = vmatpush1.msra.mxu0 %v37
  %1402 = vmatprep.subr.mxu0 0.0
  %1403 = vmatpush1.msra.mxu0 %v40
  %1404 = vmatprep.subr.mxu0 0.0
  %1405 = vmatpush1.msra.mxu0 %v43
  %1406 = vmatprep.subr.mxu0 0.0
  %1407 = vmatpush1.msra.mxu0 %v46
  %1408 = vmatprep.subr.mxu0 0.0
  %1409 = vmatpush1.msra.mxu0 %v49
  %1410 = vmatprep.subr.mxu0 0.0
  %1411 = vmatpush1.msra.mxu0 %v52
  %1412 = vmatprep.subr.mxu0 0.0
  %1413 = vmatpush1.msra.mxu0 %v55
  %1414 = vmatprep.subr.mxu0 0.0
  %1415 = vmatpush1.msra.mxu0 %v58
  %1416 = vmatprep.subr.mxu0 0.0
  %1417 = vmatpush1.msra.mxu0 %v61
  %1418 = vmatprep.subr.mxu0 0.0
  %1419 = vmatpush1.msra.mxu0 %v64
  %1420 = vmatprep.subr.mxu0 0.0
  %1421 = vmatpush1.msra.mxu0 %v67
  %1422 = vmatprep.subr.mxu0 0.0
  %1423 = vmatpush1.msra.mxu0 %v70
  %1424 = vmatprep.subr.mxu0 0.0
  %1425 = vmatpush1.msra.mxu0 0.0
  %1426 = vmatprep.subr.mxu0 0.0
  %1427 = vmatpush1.msra.mxu0 0.0
  %1428 = vmatprep.subr.mxu0 0.0
  %1429 = vmatpush1.msra.mxu0 0.0
  %1430 = vmatprep.subr.mxu0 0.0
  %1431 = vmatpush1.msra.mxu0 0.0
  %1432 = vmatprep.subr.mxu0 0.0
  %1433 = vmatpush1.msra.mxu0 0.0
  %1434 = vmatprep.subr.mxu0 0.0
  %1435 = vmatpush1.msra.mxu0 0.0
  %1436 = vmatprep.subr.mxu0 0.0
  %1437 = vmatpush1.msra.mxu0 0.0
  %1438 = vmatprep.subr.mxu0 0.0
  %1439 = vmatpush1.msra.mxu0 0.0
  %1440 = vmatprep.subr.mxu0 0.0
  %1441 = vmatpush1.msra.mxu0 0.0
  %1442 = vmatprep.subr.mxu0 0.0
  %1443 = vmatpush1.msra.mxu0 0.0
  %1444 = vmatprep.subr.mxu0 0.0
  %1445 = vmatpush1.msra.mxu0 0.0
  %1446 = vmatprep.subr.mxu0 0.0
  %1447 = vmatpush1.msra.mxu0 0.0
  %1448 = vmatprep.subr.mxu0 0.0
  %1449 = vmatpush1.msra.mxu0 0.0
  %1450 = vmatprep.subr.mxu0 0.0
  %1451 = vmatpush1.msra.mxu0 0.0
  %1452 = vmatprep.subr.mxu0 0.0
  %1453 = vmatpush1.msra.mxu0 0.0
  %1454 = vmatprep.subr.mxu0 0.0
  %1455 = vmatpush1.msra.mxu0 0.0
  %1456 = vmatprep.mubr.f32.mxu0 0.0
  %1457 = vmatmul.mubr.f32.gmra.mrb[0].mxu0 %v1315
  %v1458 = vpop.f32.mrb[0].mxu0
  %v1459 = vadd.f32 %v86, %v1458
  %v1460 = vpop.f32.mrb[0].mxu0
  %1461 = vdwg.mxu0
  %v1462 = vadd.f32 %v1320, %v1388
  %v1463 = vxor.u32 %v1462, 2147483648
  %v1464 = vmul.f32 %v1463, 1.442695
  %v1465 = vpow.pop %v1464
  %v1466 = vadd.f32 %v1465, 1.0
  %v1467 = vrcp.pop %v1466
  %v1468 = vmul.f32 1.0, %v1467
  %v1470 = vrot.slane %v1320, 2
  %v1472 = vadd.f32 %v1470, %v1390
  %v1473 = vxor.u32 %v1472, 2147483648
  %v1474 = vmul.f32 %v1473, 1.442695
  %v1475 = vpow.pop %v1474
  %v1476 = vadd.f32 %v1475, 1.0
  %v1477 = vrcp.pop %v1476
  %v1478 = vmul.f32 1.0, %v1477
  %v1479 = vmul.f32 %v1468, %v1459
  %v1480 = vrot.slane %v1320, 4
  %v1482 = vadd.f32 %v1480, %v1479
  %v1483 = vtanh.pop %v1482
  %v1484 = vsub.f32 1.0, %v1478
  %v1485 = vmul.f32 %v1484, %v1483
  %v1486 = vmul.f32 %v1478, %v1315
  %v1487 = vadd.f32 %v1485, %v1486
  %s1488 = sadd.s32 %s257, 7
  %v1489 = vstv %s1488
  %vm1490 = vcmp.gt.s32.totalorder %v22, %v1489
  %v1491 = vsel %vm1490, %v1487, %v1315
  %v1492 = vsel %vm1490, %v1487, 0.0
  %s1493 = scalar_lea.vmem %s4, 14
  %1494 = vst [vmem:[%s1493] sm:$0x3] %v1492
  %1495 = vst [vmem:[#allocation2] sm:$0x3] %v1491
  // Predicated region
  $region22: #{aspect_capsule_forward.2} parent=0 // pred_check
    _
  $region23: #{aspect_capsule_forward.2} parent=0 // pred_check_branch
    %1497 = sbr.rel (0) target = $region25
  $region24: #{aspect_capsule_forward.2} parent=0 // pred_region
    _
  $region25: #{aspect_capsule_forward.2} parent=0 // pred_fallthru
    _
  // Predicated region
  $region26: #{aspect_capsule_forward.2} parent=0 // pred_check
    _
  $region27: #{aspect_capsule_forward.2} parent=0 // pred_check_branch
    %1499 = sbr.rel (0) target = $region29
  $region28: #{aspect_capsule_forward.2} parent=0 // pred_region
    _
  $region29: #{aspect_capsule_forward.2} parent=0 // pred_fallthru
    _

</llo_original>
